<compile_context>
chip_gen: v6e
topology: v6e:2x2x1
jax: 0.10.0
libtpu: 0.0.40
codegen_flags: <defaults>
</compile_context>

<pallas_src>
import functools

import jax
import jax.numpy as jnp
from jax.experimental import pallas as pl
from jax.experimental.pallas import tpu as pltpu

EPS = 1e-5              # InstanceNorm3d default eps
LRELU_SLOPE = 0.2       # LeakyReLU negative_slope


# ---------------------------------------------------------------------------
# VMEM budget / tiling helpers (generation-aware)
# ---------------------------------------------------------------------------
def _vmem_budget_bytes():
    """~75% of physical VMEM (96 MiB on v5e/v6e, 48 MiB on v7x); safe fallback."""
    try:
        info = pltpu.get_tpu_info()
        phys = int(getattr(info, "vmem_capacity_bytes"))
        if phys <= 0:
            raise ValueError("bad vmem size")
    except Exception:
        phys = 64 * 1024 * 1024            # v7x physical size -> safe everywhere
    return min((phys * 3) // 4, 96 * 1024 * 1024)


def _tile_n(n, lane_bytes, budget, max_tile=32768):
    """Largest lane tile: a multiple of 128 dividing n whose working set
    (double-buffered blocks + f32 temporaries, `lane_bytes` per lane) fits in
    roughly half of the VMEM budget.  Falls back to the full extent when n is
    not a multiple of 128 (always a legal BlockSpec)."""
    if n % 128 != 0:
        return n
    cap = min(n, max_tile, max(128, (budget // 2) // max(1, lane_bytes)))
    cap -= cap % 128
    best = 128
    t = 128
    while t <= cap:
        if n % t == 0:
            best = t
        t += 128
    return best


def _pick_th(h, cmid, cout, p2p, L, budget, max_th=8):
    """Output H-planes per conv3x3 grid step: largest divisor of h (<= max_th)
    whose estimated working set fits in about half of the VMEM budget."""
    per_plane = 4 * cmid * p2p + 8 * cout * L            # dbl-buf in + dbl-buf out + f32 acc
    fixed = 12 * cmid * p2p + 18 * cmid * L              # halo planes, norm temp, 9-tap stack
    best = 1
    for t in range(1, min(h, max_th) + 1):
        if h % t == 0 and fixed + t * per_plane <= budget // 2:
            best = t
    return best


def _cparams(semantics, vmem_budget):
    return pltpu.CompilerParams(dimension_semantics=semantics,
                                vmem_limit_bytes=int(vmem_budget))


# ---------------------------------------------------------------------------
# In-kernel helpers
# ---------------------------------------------------------------------------
def _norm_consts(s_parts, q_parts, n_voxels):
    """InstanceNorm(affine=False) mean / inv-std per channel from per-tile
    partial sums.  s_parts, q_parts: (NT, C, 1) f32.
    NOTE: var = E[x^2] - mean^2 in f32 (biased, clamped at 0) -- adequate for
    inference, see review for the catastrophic-cancellation caveat."""
    s = jnp.sum(s_parts, axis=0)                     # (C, 1)
    q = jnp.sum(q_parts, axis=0)
    inv_n = 1.0 / n_voxels
    mean = s * inv_n
    var = jnp.maximum(q * inv_n - mean * mean, 0.0)
    return mean, jax.lax.rsqrt(var + EPS)


def _lrelu(a):
    return jnp.where(a >= 0, a, LRELU_SLOPE * a)


def _store_with_stats(zf, z_ref, s_ref, q_ref):
    """Store bf16 pre-norm output and this tile's partial sum / sum-of-squares
    (computed from the bf16-rounded values the next stage will normalize)."""
    zb = zf.astype(z_ref.dtype)
    z_ref[0] = zb
    z32 = zb.astype(jnp.float32)
    s_ref[0, 0] = jnp.sum(z32, axis=1, keepdims=True)
    q_ref[0, 0] = jnp.sum(z32 * z32, axis=1, keepdims=True)


# ---------------------------------------------------------------------------
# Pallas kernels
# ---------------------------------------------------------------------------
def masked_conv1x1_kernel(x_ref, w_ref, b_ref, z_ref, s_ref, q_ref):
    """Stage e1: 1x1x1 conv, modality mask pre-folded into per-batch weights."""
    z = jnp.dot(w_ref[0], x_ref[0].astype(jnp.bfloat16),
                preferred_element_type=jnp.float32) + b_ref[...]
    _store_with_stats(z, z_ref, s_ref, q_ref)


def conv3x3_stage_kernel(x_ref, s_ref, q_ref, w_ref, b_ref,
                         z_ref, so_ref, qo_ref, *, n_voxels, W, Z, TH):
    """Stage e2: InstanceNorm+LeakyReLU of e1 fused with the 3x3x3 reflect conv.

    x_ref: (1, TH+2, Cmid, P2p) -- TH+2 reflect-padded H-planes, each flattened
    to (W+2)*(Z+2)+2 lanes.  Each input plane is normalized once, its 9 in-plane
    shifted slices are stacked along sublanes, and one deep-K matmul per H-tap
    accumulates into the TH output-plane accumulators.  The output plane is a
    lane-dense Z-padded slab (cout, W*(Z+2)); the pad columns are masked out of
    the statistics and stripped by cheap XLA glue afterwards.
    """
    SZ = Z + 2
    L = W * SZ
    cout = w_ref.shape[1]

    mean, scale = _norm_consts(s_ref[0], q_ref[0], n_voxels)

    # valid (non Z-pad) output columns
    lane = jax.lax.broadcasted_iota(jnp.int32, (1, L), 1)
    valid = ((lane % SZ) < Z).astype(jnp.float32)

    accs = [jnp.zeros((cout, L), jnp.float32) for _ in range(TH)]
    for ip in range(TH + 2):                         # input (padded) plane index
        a = _lrelu((x_ref[0, ip].astype(jnp.float32) - mean) * scale)
        a = a.astype(jnp.bfloat16)                   # (Cmid, P2p), normalized once
        # stack the 9 in-plane shifted slices along sublanes -> (9*Cmid, L)
        a9 = jnp.concatenate(
            [a[:, j * SZ + k: j * SZ + k + L] for j in range(3) for k in range(3)],
            axis=0)
        for i in range(3):                           # H-tap index
            p = ip - i                               # output plane in this block
            if 0 <= p < TH:
                accs[p] = accs[p] + jnp.dot(w_ref[i], a9,
                                            preferred_element_type=jnp.float32)

    s_part = jnp.zeros((cout, 1), jnp.float32)
    q_part = jnp.zeros((cout, 1), jnp.float32)
    for p in range(TH):
        zb = (accs[p] + b_ref[...]).astype(z_ref.dtype)
        z_ref[0, p] = zb                             # lane-dense Z-padded store
        z32 = zb.astype(jnp.float32)
        zm = z32 * valid                             # mask pad columns for stats
        s_part = s_part + jnp.sum(zm, axis=1, keepdims=True)
        q_part = q_part + jnp.sum(zm * z32, axis=1, keepdims=True)
    so_ref[0, 0] = s_part
    qo_ref[0, 0] = q_part


def norm_conv1x1_kernel(x_ref, s_ref, q_ref, w_ref, b_ref,
                        z_ref, so_ref, qo_ref, *, n_voxels):
    """Stage e3: norm+lrelu of the previous stage fused with a 1x1x1 conv."""
    mean, scale = _norm_consts(s_ref[0], q_ref[0], n_voxels)
    a = _lrelu((x_ref[0].astype(jnp.float32) - mean) * scale).astype(jnp.bfloat16)
    z = jnp.dot(w_ref[...], a, preferred_element_type=jnp.float32) + b_ref[...]
    _store_with_stats(z, z_ref, so_ref, qo_ref)


def norm_concat_conv1x1_kernel(x1_ref, x3_ref, s_ref, q_ref, wx_ref, we_ref,
                               b_ref, z_ref, so_ref, qo_ref, *, n_voxels):
    """Stage p1: conv over concat(x1, embedding) fused as two matmuls summed."""
    mean, scale = _norm_consts(s_ref[0], q_ref[0], n_voxels)
    a3 = _lrelu((x3_ref[0].astype(jnp.float32) - mean) * scale).astype(jnp.bfloat16)
    z = (jnp.dot(wx_ref[...], x1_ref[0].astype(jnp.bfloat16),
                 preferred_element_type=jnp.float32)
         + jnp.dot(we_ref[...], a3, preferred_element_type=jnp.float32)
         + b_ref[...])
    _store_with_stats(z, z_ref, so_ref, qo_ref)


def norm_conv1x1_softmax_kernel(x_ref, s_ref, q_ref, w_ref, b_ref, o_ref,
                                *, n_voxels):
    """Final: norm+lrelu of p1, 1x1x1 conv to num_cls, per-voxel softmax."""
    mean, scale = _norm_consts(s_ref[0], q_ref[0], n_voxels)
    a = _lrelu((x_ref[0].astype(jnp.float32) - mean) * scale).astype(jnp.bfloat16)
    logits = jnp.dot(w_ref[...], a, preferred_element_type=jnp.float32) + b_ref[...]
    m = jnp.max(logits, axis=0, keepdims=True)
    e = jnp.exp(logits - m)
    inv = 1.0 / jnp.sum(e, axis=0, keepdims=True)    # one reciprocal row, VPU muls
    o_ref[0] = (e * inv).astype(o_ref.dtype)


# ---------------------------------------------------------------------------
# pallas_call wrappers
# ---------------------------------------------------------------------------
def masked_conv1x1(y, w_eff, b, vmem_budget):
    B, KC, N = y.shape
    mid = w_eff.shape[1]
    lane_bytes = 2 * (4 * KC + 2 * mid) + 2 * KC + 8 * mid
    TN = _tile_n(N, lane_bytes, vmem_budget)
    NT = N // TN
    return pl.pallas_call(
        masked_conv1x1_kernel,
        out_shape=(jax.ShapeDtypeStruct((B, mid, N), jnp.bfloat16),
                   jax.ShapeDtypeStruct((B, NT, mid, 1), jnp.float32),
                   jax.ShapeDtypeStruct((B, NT, mid, 1), jnp.float32)),
        grid=(B, NT),
        in_specs=[
            pl.BlockSpec((1, KC, TN), lambda bi, ti: (bi, 0, ti)),
            pl.BlockSpec((1, mid, KC), lambda bi, ti: (bi, 0, 0)),
            pl.BlockSpec((mid, 1), lambda bi, ti: (0, 0)),
        ],
        out_specs=(
            pl.BlockSpec((1, mid, TN), lambda bi, ti: (bi, 0, ti)),
            pl.BlockSpec((1, 1, mid, 1), lambda bi, ti: (bi, ti, 0, 0)),
            pl.BlockSpec((1, 1, mid, 1), lambda bi, ti: (bi, ti, 0, 0)),
        ),
        compiler_params=_cparams(("parallel", "parallel"), vmem_budget),
    )(y, w_eff, b)


def conv3x3_stage(z1_win, s1, q1, w9, b, H, W, Z, TH, vmem_budget):
    """z1_win: (B*HB, TH+2, Cmid, P2p) bf16 windowed reflect-padded activation."""
    B = s1.shape[0]
    HB = z1_win.shape[0] // B
    _, THp2, cmid, P2p = z1_win.shape
    cout = w9.shape[1]
    SZ = Z + 2
    L = W * SZ
    NT1 = s1.shape[1]
    kernel = functools.partial(conv3x3_stage_kernel,
                               n_voxels=float(H * W * Z), W=W, Z=Z, TH=TH)
    return pl.pallas_call(
        kernel,
        out_shape=(jax.ShapeDtypeStruct((B, H, cout, L), jnp.bfloat16),
                   jax.ShapeDtypeStruct((B, HB, cout, 1), jnp.float32),
                   jax.ShapeDtypeStruct((B, HB, cout, 1), jnp.float32)),
        grid=(B, HB),
        in_specs=[
            pl.BlockSpec((1, THp2, cmid, P2p),
                         lambda bi, hb, HB=HB: (bi * HB + hb, 0, 0, 0)),
            pl.BlockSpec((1, NT1, cmid, 1), lambda bi, hb: (bi, 0, 0, 0)),
            pl.BlockSpec((1, NT1, cmid, 1), lambda bi, hb: (bi, 0, 0, 0)),
            pl.BlockSpec((3, cout, 9 * cmid), lambda bi, hb: (0, 0, 0)),
            pl.BlockSpec((cout, 1), lambda bi, hb: (0, 0)),
        ],
        out_specs=(
            pl.BlockSpec((1, TH, cout, L), lambda bi, hb: (bi, hb, 0, 0)),
            pl.BlockSpec((1, 1, cout, 1), lambda bi, hb: (bi, hb, 0, 0)),
            pl.BlockSpec((1, 1, cout, 1), lambda bi, hb: (bi, hb, 0, 0)),
        ),
        compiler_params=_cparams(("parallel", "parallel"), vmem_budget),
    )(z1_win, s1, q1, w9, b)


def norm_conv1x1(x, s, q, w, b, n_voxels, vmem_budget):
    B, cin, N = x.shape
    cout = w.shape[0]
    NTs = s.shape[1]
    lane_bytes = 2 * (2 * cin + 2 * cout) + 6 * cin + 8 * cout
    TN = _tile_n(N, lane_bytes, vmem_budget)
    NT = N // TN
    kernel = functools.partial(norm_conv1x1_kernel, n_voxels=float(n_voxels))
    return pl.pallas_call(
        kernel,
        out_shape=(jax.ShapeDtypeStruct((B, cout, N), jnp.bfloat16),
                   jax.ShapeDtypeStruct((B, NT, cout, 1), jnp.float32),
                   jax.ShapeDtypeStruct((B, NT, cout, 1), jnp.float32)),
        grid=(B, NT),
        in_specs=[
            pl.BlockSpec((1, cin, TN), lambda bi, ti: (bi, 0, ti)),
            pl.BlockSpec((1, NTs, cin, 1), lambda bi, ti: (bi, 0, 0, 0)),
            pl.BlockSpec((1, NTs, cin, 1), lambda bi, ti: (bi, 0, 0, 0)),
            pl.BlockSpec((cout, cin), lambda bi, ti: (0, 0)),
            pl.BlockSpec((cout, 1), lambda bi, ti: (0, 0)),
        ],
        out_specs=(
            pl.BlockSpec((1, cout, TN), lambda bi, ti: (bi, 0, ti)),
            pl.BlockSpec((1, 1, cout, 1), lambda bi, ti: (bi, ti, 0, 0)),
            pl.BlockSpec((1, 1, cout, 1), lambda bi, ti: (bi, ti, 0, 0)),
        ),
        compiler_params=_cparams(("parallel", "parallel"), vmem_budget),
    )(x, s, q, w, b)


def norm_concat_conv1x1(x1, x3, s, q, wx, we, b, n_voxels, vmem_budget):
    B, cin1, N = x1.shape
    cin3 = x3.shape[1]
    cout = wx.shape[0]
    NTs = s.shape[1]
    lane_bytes = 2 * (4 * cin1 + 2 * cin3 + 2 * cout) + 2 * cin1 + 6 * cin3 + 8 * cout
    TN = _tile_n(N, lane_bytes, vmem_budget)
    NT = N // TN
    kernel = functools.partial(norm_concat_conv1x1_kernel, n_voxels=float(n_voxels))
    return pl.pallas_call(
        kernel,
        out_shape=(jax.ShapeDtypeStruct((B, cout, N), jnp.bfloat16),
                   jax.ShapeDtypeStruct((B, NT, cout, 1), jnp.float32),
                   jax.ShapeDtypeStruct((B, NT, cout, 1), jnp.float32)),
        grid=(B, NT),
        in_specs=[
            pl.BlockSpec((1, cin1, TN), lambda bi, ti: (bi, 0, ti)),
            pl.BlockSpec((1, cin3, TN), lambda bi, ti: (bi, 0, ti)),
            pl.BlockSpec((1, NTs, cin3, 1), lambda bi, ti: (bi, 0, 0, 0)),
            pl.BlockSpec((1, NTs, cin3, 1), lambda bi, ti: (bi, 0, 0, 0)),
            pl.BlockSpec((cout, cin1), lambda bi, ti: (0, 0)),
            pl.BlockSpec((cout, cin3), lambda bi, ti: (0, 0)),
            pl.BlockSpec((cout, 1), lambda bi, ti: (0, 0)),
        ],
        out_specs=(
            pl.BlockSpec((1, cout, TN), lambda bi, ti: (bi, 0, ti)),
            pl.BlockSpec((1, 1, cout, 1), lambda bi, ti: (bi, ti, 0, 0)),
            pl.BlockSpec((1, 1, cout, 1), lambda bi, ti: (bi, ti, 0, 0)),
        ),
        compiler_params=_cparams(("parallel", "parallel"), vmem_budget),
    )(x1, x3, s, q, wx, we, b)


def norm_conv1x1_softmax(x, s, q, w, b, n_voxels, vmem_budget):
    B, cin, N = x.shape
    cout = w.shape[0]
    NTs = s.shape[1]
    lane_bytes = 2 * (2 * cin + 4 * cout) + 6 * cin + 12 * cout
    TN = _tile_n(N, lane_bytes, vmem_budget)
    kernel = functools.partial(norm_conv1x1_softmax_kernel, n_voxels=float(n_voxels))
    return pl.pallas_call(
        kernel,
        out_shape=jax.ShapeDtypeStruct((B, cout, N), jnp.float32),
        grid=(B, N // TN),
        in_specs=[
            pl.BlockSpec((1, cin, TN), lambda bi, ti: (bi, 0, ti)),
            pl.BlockSpec((1, NTs, cin, 1), lambda bi, ti: (bi, 0, 0, 0)),
            pl.BlockSpec((1, NTs, cin, 1), lambda bi, ti: (bi, 0, 0, 0)),
            pl.BlockSpec((cout, cin), lambda bi, ti: (0, 0)),
            pl.BlockSpec((cout, 1), lambda bi, ti: (0, 0)),
        ],
        out_specs=pl.BlockSpec((1, cout, TN), lambda bi, ti: (bi, 0, ti)),
        compiler_params=_cparams(("parallel", "parallel"), vmem_budget),
    )(x, s, q, w, b)


# ---------------------------------------------------------------------------
# Parameters (deterministic synthetic init; conv weights kept as (Cout, Cin))
# ---------------------------------------------------------------------------
def init_params(key, in_channel, num_cls):
    mid = in_channel // 4
    ks = jax.random.split(key, 10)

    def w_(k, cout, cin):
        return (jax.random.normal(k, (cout, cin), jnp.float32) * 0.1).astype(jnp.bfloat16)

    def b_(k, cout):
        return jax.random.normal(k, (cout, 1), jnp.float32) * 0.1

    p = {}
    p["e1_w"], p["e1_b"] = w_(ks[0], mid, 2 * in_channel), b_(ks[1], mid)
    # 3x3x3 Conv3d weight (O, C, i, j, k) -> (i, O, 9*C) with columns ordered (j, k, c)
    w2 = jax.random.normal(ks[2], (mid, mid, 3, 3, 3), jnp.float32) * 0.1
    p["e2_w"] = jnp.transpose(w2, (2, 0, 3, 4, 1)).reshape(3, mid, 9 * mid).astype(jnp.bfloat16)
    p["e2_b"] = b_(ks[3], mid)
    p["e3_w"], p["e3_b"] = w_(ks[4], in_channel, mid), b_(ks[5], in_channel)
    wp1 = jax.random.normal(ks[6], (16, 2 * in_channel), jnp.float32) * 0.1
    p["p1_wx"] = wp1[:, :in_channel].astype(jnp.bfloat16)   # multiplies x1
    p["p1_we"] = wp1[:, in_channel:].astype(jnp.bfloat16)   # multiplies embedding(y)
    p["p1_b"] = b_(ks[7], 16)
    p["p2_w"], p["p2_b"] = w_(ks[8], num_cls, 16), b_(ks[9], num_cls)
    return p


# ---------------------------------------------------------------------------
# Forward pass (mirrors prm_generator.forward)
# ---------------------------------------------------------------------------
def prm_generator_forward(params, x1, x2, mask):
    """x1: (B, Cin, H, W, Z); x2: (B, K, C, H, W, Z), K*C == 2*Cin; mask: (B, K) bool."""
    B, K, C, H, W, Z = x2.shape
    N = H * W * Z
    KC = K * C
    cin = x1.shape[1]
    vmem_budget = _vmem_budget_bytes()

    # y = zeros_like(x2); y[mask] = x2[mask]; y = y.view(B, K*C, H, W, Z)
    # -> fold the per-modality mask into the e1 conv weights (once, per batch).
    y = x2.reshape(B, KC, N)                                   # free reshape
    maskc = jnp.repeat(mask.astype(jnp.float32), C, axis=1)[:, None, :]   # (B,1,KC)
    w1_eff = (params["e1_w"].astype(jnp.float32)[None] * maskc).astype(jnp.bfloat16)
    x1f = x1.reshape(B, cin, N)                                # free reshape

    # ---- embedding_layer ----------------------------------------------------
    # e1: masked 1x1x1 conv, bf16 pre-norm output + per-tile partial stats
    z1, s1, q1 = masked_conv1x1(y, w1_eff, params["e1_b"], vmem_budget)
    mid = z1.shape[1]

    # Glue for the 3x3x3 stage (small, mid-channel data): reflect-pad and lay
    # the activation out as non-overlapping H-windows that already carry their
    # two halo planes, so the conv stage gets plain lane-dense blocks.
    # TODO(synk): replace this windowed copy with in-kernel halo DMAs
    # (memory_space=pl.ANY + make_async_copy) to remove the remaining XLA pass.
    SZ = Z + 2
    P2p = (W + 2) * SZ + 2
    L = W * SZ
    TH = _pick_th(H, mid, mid, P2p, L, vmem_budget)
    HB = H // TH
    z1_5 = jnp.transpose(z1.reshape(B, mid, H, W, Z), (0, 2, 1, 3, 4))
    z1_p = jnp.pad(z1_5, ((0, 0), (1, 1), (0, 0), (1, 1), (1, 1)), mode="reflect")
    z1_p = jnp.pad(z1_p.reshape(B, H + 2, mid, (W + 2) * SZ),
                   ((0, 0), (0, 0), (0, 0), (0, 2)))           # tail pad for tap slices
    z1_win = jnp.stack([z1_p[:, hb * TH: hb * TH + TH + 2] for hb in range(HB)],
                       axis=1).reshape(B * HB, TH + 2, mid, P2p)

    # e2: norm(e1)+lrelu fused with the 3x3x3 reflect conv (3 deep-K matmuls / plane)
    z2h, s2, q2 = conv3x3_stage(z1_win, s1, q1, params["e2_w"], params["e2_b"],
                                H, W, Z, TH, vmem_budget)
    # strip the Z-pad columns and return to the (B, C, N) layout (small tensor)
    z2 = jnp.transpose(z2h.reshape(B, H, mid, W, SZ)[..., :Z],
                       (0, 2, 1, 3, 4)).reshape(B, mid, N)

    # e3: norm(e2)+lrelu fused with a 1x1x1 conv
    z3, s3, q3 = norm_conv1x1(z2, s2, q2, params["e3_w"], params["e3_b"], N, vmem_budget)

    # ---- prm_layer -----------------------------------------------------------
    # p1: concat(x1, embedding) conv fused as two matmuls + norm(e3)+lrelu
    z4, s4, q4 = norm_concat_conv1x1(x1f, z3, s3, q3, params["p1_wx"],
                                     params["p1_we"], params["p1_b"], N, vmem_budget)
    # p2: norm(p1)+lrelu, 1x1x1 conv to num_cls, per-voxel channel softmax
    seg = norm_conv1x1_softmax(z4, s4, q4, params["p2_w"], params["p2_b"], N, vmem_budget)

    return seg.reshape(B, -1, H, W, Z)                         # free reshape


# ---------------------------------------------------------------------------
if __name__ == "__main__":
    key = jax.random.PRNGKey(0)
    B, K, Cm, H, W, Z = 2, 4, 8, 4, 4, 4
    in_channel = (K * Cm) // 2          # 16, so embedding input has 32 channels
    num_cls = 5

    kx1, kx2, kp = jax.random.split(key, 3)
    x1 = jax.random.normal(kx1, (B, in_channel, H, W, Z), jnp.float32)
    x2 = jax.random.normal(kx2, (B, K, Cm, H, W, Z), jnp.float32)
    mask = jnp.array([[True, False, True, True],
                      [False, True, True, False]])

    params = init_params(kp, in_channel, num_cls)

    fwd = jax.jit(prm_generator_forward)
    seg = jax.block_until_ready(fwd(params, x1, x2, mask))

    assert seg.shape == (B, num_cls, H, W, Z), seg.shape
    assert bool(jnp.all(jnp.isfinite(seg)))
    # softmax over the channel dim must sum to 1
    assert jnp.allclose(jnp.sum(seg, axis=1), 1.0, atol=1e-4)
    print("KERNEL_OK")
</pallas_src>

<mosaic_0001>
module attributes {stable_mosaic.version = 11 : i64} {
  func.func @masked_conv1x1_kernel(%arg0: i32, %arg1: i32, %arg2: memref<1x32x64xf32, #tpu.memory_space<vmem>>, %arg3: memref<1x4x32xbf16, #tpu.memory_space<vmem>>, %arg4: memref<4x1xf32, #tpu.memory_space<vmem>>, %arg5: memref<1x4x64xbf16, #tpu.memory_space<vmem>>, %arg6: memref<1x1x4x1xf32, #tpu.memory_space<vmem>>, %arg7: memref<1x1x4x1xf32, #tpu.memory_space<vmem>>) attributes {dimension_semantics = [#tpu.dimension_semantics<parallel>, #tpu.dimension_semantics<parallel>], iteration_bounds = array<i64: 2, 1>, scalar_prefetch = 0 : i64, scratch_operands = 0 : i64, tpu.core_type = #tpu.core_type<tc>, window_params = [{transform_indices = @transform_0, window_bounds = array<i64: 1, 32, 64>}, {transform_indices = @transform_1, window_bounds = array<i64: 1, 4, 32>}, {pipeline_mode = #tpu.pipeline_mode<synchronous>, transform_indices = @transform_2, window_bounds = array<i64: 4, 1>}, {transform_indices = @transform_3, window_bounds = array<i64: 1, 4, 64>}, {transform_indices = @transform_4, window_bounds = array<i64: 1, 1, 4, 1>}, {transform_indices = @transform_5, window_bounds = array<i64: 1, 1, 4, 1>}]} {
    %c0 = arith.constant 0 : index
    %c0_0 = arith.constant 0 : index
    %c0_1 = arith.constant 0 : index
    %0 = vector.load %arg3[%c0, %c0_0, %c0_1] : memref<1x4x32xbf16, #tpu.memory_space<vmem>>, vector<1x4x32xbf16>
    %1 = vector.shape_cast %0 : vector<1x4x32xbf16> to vector<4x32xbf16>
    %c0_2 = arith.constant 0 : index
    %c0_3 = arith.constant 0 : index
    %c0_4 = arith.constant 0 : index
    %2 = vector.load %arg2[%c0_2, %c0_3, %c0_4] : memref<1x32x64xf32, #tpu.memory_space<vmem>>, vector<1x32x64xf32>
    %3 = vector.shape_cast %2 : vector<1x32x64xf32> to vector<32x64xf32>
    %4 = arith.truncf %3 : vector<32x64xf32> to vector<32x64xbf16>
    %cst = arith.constant dense<0.000000e+00> : vector<4x64xf32>
    %5 = tpu.matmul %1, %4, %cst {dimension_numbers = #tpu.dot_dimension_numbers<[1], [0], [0], [1], [0, 0, 1, 1], [], []>} : vector<4x32xbf16>, vector<32x64xbf16>, vector<4x64xf32> -> vector<4x64xf32>
    %c0_5 = arith.constant 0 : index
    %c0_6 = arith.constant 0 : index
    %6 = vector.load %arg4[%c0_5, %c0_6] : memref<4x1xf32, #tpu.memory_space<vmem>>, vector<4x1xf32>
    %7 = vector.broadcast %6 : vector<4x1xf32> to vector<4x64xf32>
    %8 = arith.addf %5, %7 : vector<4x64xf32>
    %9 = arith.truncf %8 : vector<4x64xf32> to vector<4x64xbf16>
    %c0_7 = arith.constant 0 : index
    %c0_8 = arith.constant 0 : index
    %c0_9 = arith.constant 0 : index
    %10 = vector.load %arg5[%c0_7, %c0_8, %c0_9] : memref<1x4x64xbf16, #tpu.memory_space<vmem>>, vector<1x4x64xbf16>
    %11 = vector.shape_cast %10 : vector<1x4x64xbf16> to vector<4x64xbf16>
    %12 = vector.shape_cast %9 : vector<4x64xbf16> to vector<1x4x64xbf16>
    tpu.vector_store %arg5[%c0_7, %c0_8, %c0_9], %12 {strides = array<i32>} : memref<1x4x64xbf16, #tpu.memory_space<vmem>>, vector<1x4x64xbf16>,
    %13 = arith.extf %9 : vector<4x64xbf16> to vector<4x64xf32>
    %cst_10 = arith.constant dense<0.000000e+00> : vector<4xf32>
    %14 = vector.multi_reduction <add>, %13, %cst_10 [1] : vector<4x64xf32> to vector<4xf32>
    %15 = vector.shape_cast %14 : vector<4xf32> to vector<4x1xf32>
    %c0_11 = arith.constant 0 : index
    %c0_12 = arith.constant 0 : index
    %c0_13 = arith.constant 0 : index
    %c0_14 = arith.constant 0 : index
    %16 = vector.load %arg6[%c0_11, %c0_12, %c0_13, %c0_14] : memref<1x1x4x1xf32, #tpu.memory_space<vmem>>, vector<1x1x4x1xf32>
    %17 = vector.shape_cast %16 : vector<1x1x4x1xf32> to vector<4x1xf32>
    %18 = vector.shape_cast %15 : vector<4x1xf32> to vector<1x1x4x1xf32>
    tpu.vector_store %arg6[%c0_11, %c0_12, %c0_13, %c0_14], %18 {strides = array<i32>} : memref<1x1x4x1xf32, #tpu.memory_space<vmem>>, vector<1x1x4x1xf32>,
    %19 = arith.mulf %13, %13 : vector<4x64xf32>
    %cst_15 = arith.constant dense<0.000000e+00> : vector<4xf32>
    %20 = vector.multi_reduction <add>, %19, %cst_15 [1] : vector<4x64xf32> to vector<4xf32>
    %21 = vector.shape_cast %20 : vector<4xf32> to vector<4x1xf32>
    %c0_16 = arith.constant 0 : index
    %c0_17 = arith.constant 0 : index
    %c0_18 = arith.constant 0 : index
    %c0_19 = arith.constant 0 : index
    %22 = vector.load %arg7[%c0_16, %c0_17, %c0_18, %c0_19] : memref<1x1x4x1xf32, #tpu.memory_space<vmem>>, vector<1x1x4x1xf32>
    %23 = vector.shape_cast %22 : vector<1x1x4x1xf32> to vector<4x1xf32>
    %24 = vector.shape_cast %21 : vector<4x1xf32> to vector<1x1x4x1xf32>
    tpu.vector_store %arg7[%c0_16, %c0_17, %c0_18, %c0_19], %24 {strides = array<i32>} : memref<1x1x4x1xf32, #tpu.memory_space<vmem>>, vector<1x1x4x1xf32>,
    return
  }
  func.func @transform_0(%arg0: i32, %arg1: i32) -> (i32, i32, i32) {
    %c0_i32 = arith.constant 0 : i32
    %c0_i32_0 = arith.constant 0 : i32
    return %arg0, %c0_i32, %arg1 : i32, i32, i32
  }
  func.func @transform_1(%arg0: i32, %arg1: i32) -> (i32, i32, i32) {
    %c0_i32 = arith.constant 0 : i32
    %c0_i32_0 = arith.constant 0 : i32
    %c0_i32_1 = arith.constant 0 : i32
    return %arg0, %c0_i32, %c0_i32_0 : i32, i32, i32
  }
  func.func @transform_2(%arg0: i32, %arg1: i32) -> (i32, i32) {
    %c0_i32 = arith.constant 0 : i32
    %c0_i32_0 = arith.constant 0 : i32
    %c0_i32_1 = arith.constant 0 : i32
    return %c0_i32, %c0_i32_0 : i32, i32
  }
  func.func @transform_3(%arg0: i32, %arg1: i32) -> (i32, i32, i32) {
    %c0_i32 = arith.constant 0 : i32
    %c0_i32_0 = arith.constant 0 : i32
    return %arg0, %c0_i32, %arg1 : i32, i32, i32
  }
  func.func @transform_4(%arg0: i32, %arg1: i32) -> (i32, i32, i32, i32) {
    %c0_i32 = arith.constant 0 : i32
    %c0_i32_0 = arith.constant 0 : i32
    %c0_i32_1 = arith.constant 0 : i32
    return %arg0, %arg1, %c0_i32, %c0_i32_0 : i32, i32, i32, i32
  }
  func.func @transform_5(%arg0: i32, %arg1: i32) -> (i32, i32, i32, i32) {
    %c0_i32 = arith.constant 0 : i32
    %c0_i32_0 = arith.constant 0 : i32
    %c0_i32_1 = arith.constant 0 : i32
    return %arg0, %arg1, %c0_i32, %c0_i32_0 : i32, i32, i32, i32
  }
}

module attributes {stable_mosaic.version = 11 : i64} {
  func.func @conv3x3_stage_kernel(%arg0: i32, %arg1: i32, %arg2: memref<1x6x4x38xbf16, #tpu.memory_space<vmem>>, %arg3: memref<1x1x4x1xf32, #tpu.memory_space<vmem>>, %arg4: memref<1x1x4x1xf32, #tpu.memory_space<vmem>>, %arg5: memref<3x4x36xbf16, #tpu.memory_space<vmem>>, %arg6: memref<4x1xf32, #tpu.memory_space<vmem>>, %arg7: memref<1x4x4x24xbf16, #tpu.memory_space<vmem>>, %arg8: memref<1x1x4x1xf32, #tpu.memory_space<vmem>>, %arg9: memref<1x1x4x1xf32, #tpu.memory_space<vmem>>) attributes {dimension_semantics = [#tpu.dimension_semantics<parallel>, #tpu.dimension_semantics<parallel>], iteration_bounds = array<i64: 2, 1>, scalar_prefetch = 0 : i64, scratch_operands = 0 : i64, tpu.core_type = #tpu.core_type<tc>, window_params = [{transform_indices = @transform_0, window_bounds = array<i64: 1, 6, 4, 38>}, {transform_indices = @transform_1, window_bounds = array<i64: 1, 1, 4, 1>}, {transform_indices = @transform_2, window_bounds = array<i64: 1, 1, 4, 1>}, {pipeline_mode = #tpu.pipeline_mode<synchronous>, transform_indices = @transform_3, window_bounds = array<i64: 3, 4, 36>}, {pipeline_mode = #tpu.pipeline_mode<synchronous>, transform_indices = @transform_4, window_bounds = array<i64: 4, 1>}, {transform_indices = @transform_5, window_bounds = array<i64: 1, 4, 4, 24>}, {transform_indices = @transform_6, window_bounds = array<i64: 1, 1, 4, 1>}, {transform_indices = @transform_7, window_bounds = array<i64: 1, 1, 4, 1>}]} {
    %c0 = arith.constant 0 : index
    %c0_0 = arith.constant 0 : index
    %c0_1 = arith.constant 0 : index
    %c0_2 = arith.constant 0 : index
    %0 = vector.load %arg3[%c0, %c0_0, %c0_1, %c0_2] : memref<1x1x4x1xf32, #tpu.memory_space<vmem>>, vector<1x1x4x1xf32>
    %1 = vector.shape_cast %0 : vector<1x1x4x1xf32> to vector<1x4x1xf32>
    %c0_3 = arith.constant 0 : index
    %c0_4 = arith.constant 0 : index
    %c0_5 = arith.constant 0 : index
    %c0_6 = arith.constant 0 : index
    %2 = vector.load %arg4[%c0_3, %c0_4, %c0_5, %c0_6] : memref<1x1x4x1xf32, #tpu.memory_space<vmem>>, vector<1x1x4x1xf32>
    %3 = vector.shape_cast %2 : vector<1x1x4x1xf32> to vector<1x4x1xf32>
    %cst = arith.constant dense<0.000000e+00> : vector<4x1xf32>
    %4 = vector.multi_reduction <add>, %1, %cst [0] : vector<1x4x1xf32> to vector<4x1xf32>
    %cst_7 = arith.constant dense<0.000000e+00> : vector<4x1xf32>
    %5 = vector.multi_reduction <add>, %3, %cst_7 [0] : vector<1x4x1xf32> to vector<4x1xf32>
    %cst_8 = arith.constant 1.562500e-02 : f32
    %6 = vector.broadcast %cst_8 : f32 to vector<4x1xf32>
    %7 = arith.mulf %4, %6 : vector<4x1xf32>
    %cst_9 = arith.constant 1.562500e-02 : f32
    %8 = vector.broadcast %cst_9 : f32 to vector<4x1xf32>
    %9 = arith.mulf %5, %8 : vector<4x1xf32>
    %10 = arith.mulf %7, %7 : vector<4x1xf32>
    %11 = arith.subf %9, %10 : vector<4x1xf32>
    %cst_10 = arith.constant 0.000000e+00 : f32
    %12 = vector.broadcast %cst_10 : f32 to vector<4x1xf32>
    %13 = arith.maximumf %11, %12 : vector<4x1xf32>
    %cst_11 = arith.constant 9.99999974E-6 : f32
    %14 = vector.broadcast %cst_11 : f32 to vector<4x1xf32>
    %15 = arith.addf %13, %14 : vector<4x1xf32>
    %16 = math.rsqrt %15 : vector<4x1xf32>
    %17 = tpu.iota {dimensions = array<i32: 1>} : vector<1x24xi32>
    %c6_i32 = arith.constant 6 : i32
    %c0_i32 = arith.constant 0 : i32
    %18 = arith.cmpi eq, %c6_i32, %c0_i32 : i32
    %c1_i32 = arith.constant 1 : i32
    %19 = arith.select %18, %c1_i32, %c6_i32 : i32
    %20 = vector.broadcast %19 : i32 to vector<1x24xi32>
    %21 = arith.remsi %17, %20 : vector<1x24xi32>
    %c0_i32_12 = arith.constant 0 : i32
    %22 = vector.broadcast %c0_i32_12 : i32 to vector<1x24xi32>
    %23 = arith.cmpi ne, %21, %22 : vector<1x24xi32>
    %c0_i32_13 = arith.constant 0 : i32
    %24 = vector.broadcast %c0_i32_13 : i32 to vector<1x24xi32>
    %25 = arith.cmpi slt, %21, %24 : vector<1x24xi32>
    %c0_i32_14 = arith.constant 0 : i32
    %26 = arith.cmpi slt, %19, %c0_i32_14 : i32
    %27 = vector.broadcast %26 : i1 to vector<1x24xi1>
    %28 = vector.broadcast %27 : vector<1x24xi1> to vector<1x24xi1>
    %29 = arith.xori %25, %28 : vector<1x24xi1>
    %30 = arith.andi %29, %23 : vector<1x24xi1>
    %31 = vector.broadcast %19 : i32 to vector<1x24xi32>
    %32 = arith.addi %21, %31 : vector<1x24xi32>
    %33 = arith.select %30, %32, %21 : vector<1x24xi1>, vector<1x24xi32>
    %c4_i32 = arith.constant 4 : i32
    %34 = vector.broadcast %c4_i32 : i32 to vector<1x24xi32>
    %35 = arith.cmpi slt, %33, %34 : vector<1x24xi32>
    %36 = arith.extui %35 : vector<1x24xi1> to vector<1x24xi32>
    %37 = arith.sitofp %36 : vector<1x24xi32> to vector<1x24xf32>
    %cst_15 = arith.constant 0.000000e+00 : f32
    %38 = vector.broadcast %cst_15 : f32 to vector<4x24xf32>
    %cst_16 = arith.constant 0.000000e+00 : f32
    %39 = vector.broadcast %cst_16 : f32 to vector<4x24xf32>
    %cst_17 = arith.constant 0.000000e+00 : f32
    %40 = vector.broadcast %cst_17 : f32 to vector<4x24xf32>
    %cst_18 = arith.constant 0.000000e+00 : f32
    %41 = vector.broadcast %cst_18 : f32 to vector<4x24xf32>
    %c0_19 = arith.constant 0 : index
    %c0_20 = arith.constant 0 : index
    %c0_21 = arith.constant 0 : index
    %c0_22 = arith.constant 0 : index
    %42 = vector.load %arg2[%c0_19, %c0_20, %c0_21, %c0_22] : memref<1x6x4x38xbf16, #tpu.memory_space<vmem>>, vector<1x1x4x38xbf16>
    %43 = vector.shape_cast %42 : vector<1x1x4x38xbf16> to vector<4x38xbf16>
    %44 = arith.extf %43 : vector<4x38xbf16> to vector<4x38xf32>
    %45 = vector.broadcast %7 : vector<4x1xf32> to vector<4x38xf32>
    %46 = arith.subf %44, %45 : vector<4x38xf32>
    %47 = vector.broadcast %16 : vector<4x1xf32> to vector<4x38xf32>
    %48 = arith.mulf %46, %47 : vector<4x38xf32>
    %cst_23 = arith.constant 0.000000e+00 : f32
    %49 = vector.broadcast %cst_23 : f32 to vector<4x38xf32>
    %50 = arith.cmpf oge, %48, %49 : vector<4x38xf32>
    %cst_24 = arith.constant 2.000000e-01 : f32
    %51 = vector.broadcast %cst_24 : f32 to vector<4x38xf32>
    %52 = arith.mulf %51, %48 : vector<4x38xf32>
    %53 = arith.select %50, %48, %52 : vector<4x38xi1>, vector<4x38xf32>
    %54 = arith.truncf %53 : vector<4x38xf32> to vector<4x38xbf16>
    %55 = vector.extract_strided_slice %54 {offsets = [0, 0], sizes = [4, 24], strides = [1, 1]} : vector<4x38xbf16> to vector<4x24xbf16>
    %56 = vector.extract_strided_slice %54 {offsets = [0, 1], sizes = [4, 24], strides = [1, 1]} : vector<4x38xbf16> to vector<4x24xbf16>
    %57 = vector.extract_strided_slice %54 {offsets = [0, 2], sizes = [4, 24], strides = [1, 1]} : vector<4x38xbf16> to vector<4x24xbf16>
    %58 = vector.extract_strided_slice %54 {offsets = [0, 6], sizes = [4, 24], strides = [1, 1]} : vector<4x38xbf16> to vector<4x24xbf16>
    %59 = vector.extract_strided_slice %54 {offsets = [0, 7], sizes = [4, 24], strides = [1, 1]} : vector<4x38xbf16> to vector<4x24xbf16>
    %60 = vector.extract_strided_slice %54 {offsets = [0, 8], sizes = [4, 24], strides = [1, 1]} : vector<4x38xbf16> to vector<4x24xbf16>
    %61 = vector.extract_strided_slice %54 {offsets = [0, 12], sizes = [4, 24], strides = [1, 1]} : vector<4x38xbf16> to vector<4x24xbf16>
    %62 = vector.extract_strided_slice %54 {offsets = [0, 13], sizes = [4, 24], strides = [1, 1]} : vector<4x38xbf16> to vector<4x24xbf16>
    %63 = vector.extract_strided_slice %54 {offsets = [0, 14], sizes = [4, 24], strides = [1, 1]} : vector<4x38xbf16> to vector<4x24xbf16>
    %64 = tpu.concatenate %55, %56, %57, %58, %59, %60, %61, %62, %63 in 0 : vector<4x24xbf16>, vector<4x24xbf16>, vector<4x24xbf16>, vector<4x24xbf16>, vector<4x24xbf16>, vector<4x24xbf16>, vector<4x24xbf16>, vector<4x24xbf16>, vector<4x24xbf16> -> vector<36x24xbf16>
    %c0_25 = arith.constant 0 : index
    %c0_26 = arith.constant 0 : index
    %c0_27 = arith.constant 0 : index
    %65 = vector.load %arg5[%c0_25, %c0_26, %c0_27] : memref<3x4x36xbf16, #tpu.memory_space<vmem>>, vector<1x4x36xbf16>
    %66 = vector.shape_cast %65 : vector<1x4x36xbf16> to vector<4x36xbf16>
    %cst_28 = arith.constant dense<0.000000e+00> : vector<4x24xf32>
    %67 = tpu.matmul %66, %64, %cst_28 {dimension_numbers = #tpu.dot_dimension_numbers<[1], [0], [0], [1], [0, 0, 1, 1], [], []>} : vector<4x36xbf16>, vector<36x24xbf16>, vector<4x24xf32> -> vector<4x24xf32>
    %68 = arith.addf %38, %67 : vector<4x24xf32>
    %c0_29 = arith.constant 0 : index
    %c1 = arith.constant 1 : index
    %c0_30 = arith.constant 0 : index
    %c0_31 = arith.constant 0 : index
    %69 = vector.load %arg2[%c0_29, %c1, %c0_30, %c0_31] : memref<1x6x4x38xbf16, #tpu.memory_space<vmem>>, vector<1x1x4x38xbf16>
    %70 = vector.shape_cast %69 : vector<1x1x4x38xbf16> to vector<4x38xbf16>
    %71 = arith.extf %70 : vector<4x38xbf16> to vector<4x38xf32>
    %72 = vector.broadcast %7 : vector<4x1xf32> to vector<4x38xf32>
    %73 = arith.subf %71, %72 : vector<4x38xf32>
    %74 = vector.broadcast %16 : vector<4x1xf32> to vector<4x38xf32>
    %75 = arith.mulf %73, %74 : vector<4x38xf32>
    %cst_32 = arith.constant 0.000000e+00 : f32
    %76 = vector.broadcast %cst_32 : f32 to vector<4x38xf32>
    %77 = arith.cmpf oge, %75, %76 : vector<4x38xf32>
    %cst_33 = arith.constant 2.000000e-01 : f32
    %78 = vector.broadcast %cst_33 : f32 to vector<4x38xf32>
    %79 = arith.mulf %78, %75 : vector<4x38xf32>
    %80 = arith.select %77, %75, %79 : vector<4x38xi1>, vector<4x38xf32>
    %81 = arith.truncf %80 : vector<4x38xf32> to vector<4x38xbf16>
    %82 = vector.extract_strided_slice %81 {offsets = [0, 0], sizes = [4, 24], strides = [1, 1]} : vector<4x38xbf16> to vector<4x24xbf16>
    %83 = vector.extract_strided_slice %81 {offsets = [0, 1], sizes = [4, 24], strides = [1, 1]} : vector<4x38xbf16> to vector<4x24xbf16>
    %84 = vector.extract_strided_slice %81 {offsets = [0, 2], sizes = [4, 24], strides = [1, 1]} : vector<4x38xbf16> to vector<4x24xbf16>
    %85 = vector.extract_strided_slice %81 {offsets = [0, 6], sizes = [4, 24], strides = [1, 1]} : vector<4x38xbf16> to vector<4x24xbf16>
    %86 = vector.extract_strided_slice %81 {offsets = [0, 7], sizes = [4, 24], strides = [1, 1]} : vector<4x38xbf16> to vector<4x24xbf16>
    %87 = vector.extract_strided_slice %81 {offsets = [0, 8], sizes = [4, 24], strides = [1, 1]} : vector<4x38xbf16> to vector<4x24xbf16>
    %88 = vector.extract_strided_slice %81 {offsets = [0, 12], sizes = [4, 24], strides = [1, 1]} : vector<4x38xbf16> to vector<4x24xbf16>
    %89 = vector.extract_strided_slice %81 {offsets = [0, 13], sizes = [4, 24], strides = [1, 1]} : vector<4x38xbf16> to vector<4x24xbf16>
    %90 = vector.extract_strided_slice %81 {offsets = [0, 14], sizes = [4, 24], strides = [1, 1]} : vector<4x38xbf16> to vector<4x24xbf16>
    %91 = tpu.concatenate %82, %83, %84, %85, %86, %87, %88, %89, %90 in 0 : vector<4x24xbf16>, vector<4x24xbf16>, vector<4x24xbf16>, vector<4x24xbf16>, vector<4x24xbf16>, vector<4x24xbf16>, vector<4x24xbf16>, vector<4x24xbf16>, vector<4x24xbf16> -> vector<36x24xbf16>
    %c0_34 = arith.constant 0 : index
    %c0_35 = arith.constant 0 : index
    %c0_36 = arith.constant 0 : index
    %92 = vector.load %arg5[%c0_34, %c0_35, %c0_36] : memref<3x4x36xbf16, #tpu.memory_space<vmem>>, vector<1x4x36xbf16>
    %93 = vector.shape_cast %92 : vector<1x4x36xbf16> to vector<4x36xbf16>
    %cst_37 = arith.constant dense<0.000000e+00> : vector<4x24xf32>
    %94 = tpu.matmul %93, %91, %cst_37 {dimension_numbers = #tpu.dot_dimension_numbers<[1], [0], [0], [1], [0, 0, 1, 1], [], []>} : vector<4x36xbf16>, vector<36x24xbf16>, vector<4x24xf32> -> vector<4x24xf32>
    %95 = arith.addf %39, %94 : vector<4x24xf32>
    %c1_38 = arith.constant 1 : index
    %c0_39 = arith.constant 0 : index
    %c0_40 = arith.constant 0 : index
    %96 = vector.load %arg5[%c1_38, %c0_39, %c0_40] : memref<3x4x36xbf16, #tpu.memory_space<vmem>>, vector<1x4x36xbf16>
    %97 = vector.shape_cast %96 : vector<1x4x36xbf16> to vector<4x36xbf16>
    %cst_41 = arith.constant dense<0.000000e+00> : vector<4x24xf32>
    %98 = tpu.matmul %97, %91, %cst_41 {dimension_numbers = #tpu.dot_dimension_numbers<[1], [0], [0], [1], [0, 0, 1, 1], [], []>} : vector<4x36xbf16>, vector<36x24xbf16>, vector<4x24xf32> -> vector<4x24xf32>
    %99 = arith.addf %68, %98 : vector<4x24xf32>
    %c0_42 = arith.constant 0 : index
    %c2 = arith.constant 2 : index
    %c0_43 = arith.constant 0 : index
    %c0_44 = arith.constant 0 : index
    %100 = vector.load %arg2[%c0_42, %c2, %c0_43, %c0_44] : memref<1x6x4x38xbf16, #tpu.memory_space<vmem>>, vector<1x1x4x38xbf16>
    %101 = vector.shape_cast %100 : vector<1x1x4x38xbf16> to vector<4x38xbf16>
    %102 = arith.extf %101 : vector<4x38xbf16> to vector<4x38xf32>
    %103 = vector.broadcast %7 : vector<4x1xf32> to vector<4x38xf32>
    %104 = arith.subf %102, %103 : vector<4x38xf32>
    %105 = vector.broadcast %16 : vector<4x1xf32> to vector<4x38xf32>
    %106 = arith.mulf %104, %105 : vector<4x38xf32>
    %cst_45 = arith.constant 0.000000e+00 : f32
    %107 = vector.broadcast %cst_45 : f32 to vector<4x38xf32>
    %108 = arith.cmpf oge, %106, %107 : vector<4x38xf32>
    %cst_46 = arith.constant 2.000000e-01 : f32
    %109 = vector.broadcast %cst_46 : f32 to vector<4x38xf32>
    %110 = arith.mulf %109, %106 : vector<4x38xf32>
    %111 = arith.select %108, %106, %110 : vector<4x38xi1>, vector<4x38xf32>
    %112 = arith.truncf %111 : vector<4x38xf32> to vector<4x38xbf16>
    %113 = vector.extract_strided_slice %112 {offsets = [0, 0], sizes = [4, 24], strides = [1, 1]} : vector<4x38xbf16> to vector<4x24xbf16>
    %114 = vector.extract_strided_slice %112 {offsets = [0, 1], sizes = [4, 24], strides = [1, 1]} : vector<4x38xbf16> to vector<4x24xbf16>
    %115 = vector.extract_strided_slice %112 {offsets = [0, 2], sizes = [4, 24], strides = [1, 1]} : vector<4x38xbf16> to vector<4x24xbf16>
    %116 = vector.extract_strided_slice %112 {offsets = [0, 6], sizes = [4, 24], strides = [1, 1]} : vector<4x38xbf16> to vector<4x24xbf16>
    %117 = vector.extract_strided_slice %112 {offsets = [0, 7], sizes = [4, 24], strides = [1, 1]} : vector<4x38xbf16> to vector<4x24xbf16>
    %118 = vector.extract_strided_slice %112 {offsets = [0, 8], sizes = [4, 24], strides = [1, 1]} : vector<4x38xbf16> to vector<4x24xbf16>
    %119 = vector.extract_strided_slice %112 {offsets = [0, 12], sizes = [4, 24], strides = [1, 1]} : vector<4x38xbf16> to vector<4x24xbf16>
    %120 = vector.extract_strided_slice %112 {offsets = [0, 13], sizes = [4, 24], strides = [1, 1]} : vector<4x38xbf16> to vector<4x24xbf16>
    %121 = vector.extract_strided_slice %112 {offsets = [0, 14], sizes = [4, 24], strides = [1, 1]} : vector<4x38xbf16> to vector<4x24xbf16>
    %122 = tpu.concatenate %113, %114, %115, %116, %117, %118, %119, %120, %121 in 0 : vector<4x24xbf16>, vector<4x24xbf16>, vector<4x24xbf16>, vector<4x24xbf16>, vector<4x24xbf16>, vector<4x24xbf16>, vector<4x24xbf16>, vector<4x24xbf16>, vector<4x24xbf16> -> vector<36x24xbf16>
    %c0_47 = arith.constant 0 : index
    %c0_48 = arith.constant 0 : index
    %c0_49 = arith.constant 0 : index
    %123 = vector.load %arg5[%c0_47, %c0_48, %c0_49] : memref<3x4x36xbf16, #tpu.memory_space<vmem>>, vector<1x4x36xbf16>
    %124 = vector.shape_cast %123 : vector<1x4x36xbf16> to vector<4x36xbf16>
    %cst_50 = arith.constant dense<0.000000e+00> : vector<4x24xf32>
    %125 = tpu.matmul %124, %122, %cst_50 {dimension_numbers = #tpu.dot_dimension_numbers<[1], [0], [0], [1], [0, 0, 1, 1], [], []>} : vector<4x36xbf16>, vector<36x24xbf16>, vector<4x24xf32> -> vector<4x24xf32>
    %126 = arith.addf %40, %125 : vector<4x24xf32>
    %c1_51 = arith.constant 1 : index
    %c0_52 = arith.constant 0 : index
    %c0_53 = arith.constant 0 : index
    %127 = vector.load %arg5[%c1_51, %c0_52, %c0_53] : memref<3x4x36xbf16, #tpu.memory_space<vmem>>, vector<1x4x36xbf16>
    %128 = vector.shape_cast %127 : vector<1x4x36xbf16> to vector<4x36xbf16>
    %cst_54 = arith.constant dense<0.000000e+00> : vector<4x24xf32>
    %129 = tpu.matmul %128, %122, %cst_54 {dimension_numbers = #tpu.dot_dimension_numbers<[1], [0], [0], [1], [0, 0, 1, 1], [], []>} : vector<4x36xbf16>, vector<36x24xbf16>, vector<4x24xf32> -> vector<4x24xf32>
    %130 = arith.addf %95, %129 : vector<4x24xf32>
    %c2_55 = arith.constant 2 : index
    %c0_56 = arith.constant 0 : index
    %c0_57 = arith.constant 0 : index
    %131 = vector.load %arg5[%c2_55, %c0_56, %c0_57] : memref<3x4x36xbf16, #tpu.memory_space<vmem>>, vector<1x4x36xbf16>
    %132 = vector.shape_cast %131 : vector<1x4x36xbf16> to vector<4x36xbf16>
    %cst_58 = arith.constant dense<0.000000e+00> : vector<4x24xf32>
    %133 = tpu.matmul %132, %122, %cst_58 {dimension_numbers = #tpu.dot_dimension_numbers<[1], [0], [0], [1], [0, 0, 1, 1], [], []>} : vector<4x36xbf16>, vector<36x24xbf16>, vector<4x24xf32> -> vector<4x24xf32>
    %134 = arith.addf %99, %133 : vector<4x24xf32>
    %c0_59 = arith.constant 0 : index
    %c3 = arith.constant 3 : index
    %c0_60 = arith.constant 0 : index
    %c0_61 = arith.constant 0 : index
    %135 = vector.load %arg2[%c0_59, %c3, %c0_60, %c0_61] : memref<1x6x4x38xbf16, #tpu.memory_space<vmem>>, vector<1x1x4x38xbf16>
    %136 = vector.shape_cast %135 : vector<1x1x4x38xbf16> to vector<4x38xbf16>
    %137 = arith.extf %136 : vector<4x38xbf16> to vector<4x38xf32>
    %138 = vector.broadcast %7 : vector<4x1xf32> to vector<4x38xf32>
    %139 = arith.subf %137, %138 : vector<4x38xf32>
    %140 = vector.broadcast %16 : vector<4x1xf32> to vector<4x38xf32>
    %141 = arith.mulf %139, %140 : vector<4x38xf32>
    %cst_62 = arith.constant 0.000000e+00 : f32
    %142 = vector.broadcast %cst_62 : f32 to vector<4x38xf32>
    %143 = arith.cmpf oge, %141, %142 : vector<4x38xf32>
    %cst_63 = arith.constant 2.000000e-01 : f32
    %144 = vector.broadcast %cst_63 : f32 to vector<4x38xf32>
    %145 = arith.mulf %144, %141 : vector<4x38xf32>
    %146 = arith.select %143, %141, %145 : vector<4x38xi1>, vector<4x38xf32>
    %147 = arith.truncf %146 : vector<4x38xf32> to vector<4x38xbf16>
    %148 = vector.extract_strided_slice %147 {offsets = [0, 0], sizes = [4, 24], strides = [1, 1]} : vector<4x38xbf16> to vector<4x24xbf16>
    %149 = vector.extract_strided_slice %147 {offsets = [0, 1], sizes = [4, 24], strides = [1, 1]} : vector<4x38xbf16> to vector<4x24xbf16>
    %150 = vector.extract_strided_slice %147 {offsets = [0, 2], sizes = [4, 24], strides = [1, 1]} : vector<4x38xbf16> to vector<4x24xbf16>
    %151 = vector.extract_strided_slice %147 {offsets = [0, 6], sizes = [4, 24], strides = [1, 1]} : vector<4x38xbf16> to vector<4x24xbf16>
    %152 = vector.extract_strided_slice %147 {offsets = [0, 7], sizes = [4, 24], strides = [1, 1]} : vector<4x38xbf16> to vector<4x24xbf16>
    %153 = vector.extract_strided_slice %147 {offsets = [0, 8], sizes = [4, 24], strides = [1, 1]} : vector<4x38xbf16> to vector<4x24xbf16>
    %154 = vector.extract_strided_slice %147 {offsets = [0, 12], sizes = [4, 24], strides = [1, 1]} : vector<4x38xbf16> to vector<4x24xbf16>
    %155 = vector.extract_strided_slice %147 {offsets = [0, 13], sizes = [4, 24], strides = [1, 1]} : vector<4x38xbf16> to vector<4x24xbf16>
    %156 = vector.extract_strided_slice %147 {offsets = [0, 14], sizes = [4, 24], strides = [1, 1]} : vector<4x38xbf16> to vector<4x24xbf16>
    %157 = tpu.concatenate %148, %149, %150, %151, %152, %153, %154, %155, %156 in 0 : vector<4x24xbf16>, vector<4x24xbf16>, vector<4x24xbf16>, vector<4x24xbf16>, vector<4x24xbf16>, vector<4x24xbf16>, vector<4x24xbf16>, vector<4x24xbf16>, vector<4x24xbf16> -> vector<36x24xbf16>
    %c0_64 = arith.constant 0 : index
    %c0_65 = arith.constant 0 : index
    %c0_66 = arith.constant 0 : index
    %158 = vector.load %arg5[%c0_64, %c0_65, %c0_66] : memref<3x4x36xbf16, #tpu.memory_space<vmem>>, vector<1x4x36xbf16>
    %159 = vector.shape_cast %158 : vector<1x4x36xbf16> to vector<4x36xbf16>
    %cst_67 = arith.constant dense<0.000000e+00> : vector<4x24xf32>
    %160 = tpu.matmul %159, %157, %cst_67 {dimension_numbers = #tpu.dot_dimension_numbers<[1], [0], [0], [1], [0, 0, 1, 1], [], []>} : vector<4x36xbf16>, vector<36x24xbf16>, vector<4x24xf32> -> vector<4x24xf32>
    %161 = arith.addf %41, %160 : vector<4x24xf32>
    %c1_68 = arith.constant 1 : index
    %c0_69 = arith.constant 0 : index
    %c0_70 = arith.constant 0 : index
    %162 = vector.load %arg5[%c1_68, %c0_69, %c0_70] : memref<3x4x36xbf16, #tpu.memory_space<vmem>>, vector<1x4x36xbf16>
    %163 = vector.shape_cast %162 : vector<1x4x36xbf16> to vector<4x36xbf16>
    %cst_71 = arith.constant dense<0.000000e+00> : vector<4x24xf32>
    %164 = tpu.matmul %163, %157, %cst_71 {dimension_numbers = #tpu.dot_dimension_numbers<[1], [0], [0], [1], [0, 0, 1, 1], [], []>} : vector<4x36xbf16>, vector<36x24xbf16>, vector<4x24xf32> -> vector<4x24xf32>
    %165 = arith.addf %126, %164 : vector<4x24xf32>
    %c2_72 = arith.constant 2 : index
    %c0_73 = arith.constant 0 : index
    %c0_74 = arith.constant 0 : index
    %166 = vector.load %arg5[%c2_72, %c0_73, %c0_74] : memref<3x4x36xbf16, #tpu.memory_space<vmem>>, vector<1x4x36xbf16>
    %167 = vector.shape_cast %166 : vector<1x4x36xbf16> to vector<4x36xbf16>
    %cst_75 = arith.constant dense<0.000000e+00> : vector<4x24xf32>
    %168 = tpu.matmul %167, %157, %cst_75 {dimension_numbers = #tpu.dot_dimension_numbers<[1], [0], [0], [1], [0, 0, 1, 1], [], []>} : vector<4x36xbf16>, vector<36x24xbf16>, vector<4x24xf32> -> vector<4x24xf32>
    %169 = arith.addf %130, %168 : vector<4x24xf32>
    %c0_76 = arith.constant 0 : index
    %c4 = arith.constant 4 : index
    %c0_77 = arith.constant 0 : index
    %c0_78 = arith.constant 0 : index
    %170 = vector.load %arg2[%c0_76, %c4, %c0_77, %c0_78] : memref<1x6x4x38xbf16, #tpu.memory_space<vmem>>, vector<1x1x4x38xbf16>
    %171 = vector.shape_cast %170 : vector<1x1x4x38xbf16> to vector<4x38xbf16>
    %172 = arith.extf %171 : vector<4x38xbf16> to vector<4x38xf32>
    %173 = vector.broadcast %7 : vector<4x1xf32> to vector<4x38xf32>
    %174 = arith.subf %172, %173 : vector<4x38xf32>
    %175 = vector.broadcast %16 : vector<4x1xf32> to vector<4x38xf32>
    %176 = arith.mulf %174, %175 : vector<4x38xf32>
    %cst_79 = arith.constant 0.000000e+00 : f32
    %177 = vector.broadcast %cst_79 : f32 to vector<4x38xf32>
    %178 = arith.cmpf oge, %176, %177 : vector<4x38xf32>
    %cst_80 = arith.constant 2.000000e-01 : f32
    %179 = vector.broadcast %cst_80 : f32 to vector<4x38xf32>
    %180 = arith.mulf %179, %176 : vector<4x38xf32>
    %181 = arith.select %178, %176, %180 : vector<4x38xi1>, vector<4x38xf32>
    %182 = arith.truncf %181 : vector<4x38xf32> to vector<4x38xbf16>
    %183 = vector.extract_strided_slice %182 {offsets = [0, 0], sizes = [4, 24], strides = [1, 1]} : vector<4x38xbf16> to vector<4x24xbf16>
    %184 = vector.extract_strided_slice %182 {offsets = [0, 1], sizes = [4, 24], strides = [1, 1]} : vector<4x38xbf16> to vector<4x24xbf16>
    %185 = vector.extract_strided_slice %182 {offsets = [0, 2], sizes = [4, 24], strides = [1, 1]} : vector<4x38xbf16> to vector<4x24xbf16>
    %186 = vector.extract_strided_slice %182 {offsets = [0, 6], sizes = [4, 24], strides = [1, 1]} : vector<4x38xbf16> to vector<4x24xbf16>
    %187 = vector.extract_strided_slice %182 {offsets = [0, 7], sizes = [4, 24], strides = [1, 1]} : vector<4x38xbf16> to vector<4x24xbf16>
    %188 = vector.extract_strided_slice %182 {offsets = [0, 8], sizes = [4, 24], strides = [1, 1]} : vector<4x38xbf16> to vector<4x24xbf16>
    %189 = vector.extract_strided_slice %182 {offsets = [0, 12], sizes = [4, 24], strides = [1, 1]} : vector<4x38xbf16> to vector<4x24xbf16>
    %190 = vector.extract_strided_slice %182 {offsets = [0, 13], sizes = [4, 24], strides = [1, 1]} : vector<4x38xbf16> to vector<4x24xbf16>
    %191 = vector.extract_strided_slice %182 {offsets = [0, 14], sizes = [4, 24], strides = [1, 1]} : vector<4x38xbf16> to vector<4x24xbf16>
    %192 = tpu.concatenate %183, %184, %185, %186, %187, %188, %189, %190, %191 in 0 : vector<4x24xbf16>, vector<4x24xbf16>, vector<4x24xbf16>, vector<4x24xbf16>, vector<4x24xbf16>, vector<4x24xbf16>, vector<4x24xbf16>, vector<4x24xbf16>, vector<4x24xbf16> -> vector<36x24xbf16>
    %c1_81 = arith.constant 1 : index
    %c0_82 = arith.constant 0 : index
    %c0_83 = arith.constant 0 : index
    %193 = vector.load %arg5[%c1_81, %c0_82, %c0_83] : memref<3x4x36xbf16, #tpu.memory_space<vmem>>, vector<1x4x36xbf16>
    %194 = vector.shape_cast %193 : vector<1x4x36xbf16> to vector<4x36xbf16>
    %cst_84 = arith.constant dense<0.000000e+00> : vector<4x24xf32>
    %195 = tpu.matmul %194, %192, %cst_84 {dimension_numbers = #tpu.dot_dimension_numbers<[1], [0], [0], [1], [0, 0, 1, 1], [], []>} : vector<4x36xbf16>, vector<36x24xbf16>, vector<4x24xf32> -> vector<4x24xf32>
    %196 = arith.addf %161, %195 : vector<4x24xf32>
    %c2_85 = arith.constant 2 : index
    %c0_86 = arith.constant 0 : index
    %c0_87 = arith.constant 0 : index
    %197 = vector.load %arg5[%c2_85, %c0_86, %c0_87] : memref<3x4x36xbf16, #tpu.memory_space<vmem>>, vector<1x4x36xbf16>
    %198 = vector.shape_cast %197 : vector<1x4x36xbf16> to vector<4x36xbf16>
    %cst_88 = arith.constant dense<0.000000e+00> : vector<4x24xf32>
    %199 = tpu.matmul %198, %192, %cst_88 {dimension_numbers = #tpu.dot_dimension_numbers<[1], [0], [0], [1], [0, 0, 1, 1], [], []>} : vector<4x36xbf16>, vector<36x24xbf16>, vector<4x24xf32> -> vector<4x24xf32>
    %200 = arith.addf %165, %199 : vector<4x24xf32>
    %c0_89 = arith.constant 0 : index
    %c5 = arith.constant 5 : index
    %c0_90 = arith.constant 0 : index
    %c0_91 = arith.constant 0 : index
    %201 = vector.load %arg2[%c0_89, %c5, %c0_90, %c0_91] : memref<1x6x4x38xbf16, #tpu.memory_space<vmem>>, vector<1x1x4x38xbf16>
    %202 = vector.shape_cast %201 : vector<1x1x4x38xbf16> to vector<4x38xbf16>
    %203 = arith.extf %202 : vector<4x38xbf16> to vector<4x38xf32>
    %204 = vector.broadcast %7 : vector<4x1xf32> to vector<4x38xf32>
    %205 = arith.subf %203, %204 : vector<4x38xf32>
    %206 = vector.broadcast %16 : vector<4x1xf32> to vector<4x38xf32>
    %207 = arith.mulf %205, %206 : vector<4x38xf32>
    %cst_92 = arith.constant 0.000000e+00 : f32
    %208 = vector.broadcast %cst_92 : f32 to vector<4x38xf32>
    %209 = arith.cmpf oge, %207, %208 : vector<4x38xf32>
    %cst_93 = arith.constant 2.000000e-01 : f32
    %210 = vector.broadcast %cst_93 : f32 to vector<4x38xf32>
    %211 = arith.mulf %210, %207 : vector<4x38xf32>
    %212 = arith.select %209, %207, %211 : vector<4x38xi1>, vector<4x38xf32>
    %213 = arith.truncf %212 : vector<4x38xf32> to vector<4x38xbf16>
    %214 = vector.extract_strided_slice %213 {offsets = [0, 0], sizes = [4, 24], strides = [1, 1]} : vector<4x38xbf16> to vector<4x24xbf16>
    %215 = vector.extract_strided_slice %213 {offsets = [0, 1], sizes = [4, 24], strides = [1, 1]} : vector<4x38xbf16> to vector<4x24xbf16>
    %216 = vector.extract_strided_slice %213 {offsets = [0, 2], sizes = [4, 24], strides = [1, 1]} : vector<4x38xbf16> to vector<4x24xbf16>
    %217 = vector.extract_strided_slice %213 {offsets = [0, 6], sizes = [4, 24], strides = [1, 1]} : vector<4x38xbf16> to vector<4x24xbf16>
    %218 = vector.extract_strided_slice %213 {offsets = [0, 7], sizes = [4, 24], strides = [1, 1]} : vector<4x38xbf16> to vector<4x24xbf16>
    %219 = vector.extract_strided_slice %213 {offsets = [0, 8], sizes = [4, 24], strides = [1, 1]} : vector<4x38xbf16> to vector<4x24xbf16>
    %220 = vector.extract_strided_slice %213 {offsets = [0, 12], sizes = [4, 24], strides = [1, 1]} : vector<4x38xbf16> to vector<4x24xbf16>
    %221 = vector.extract_strided_slice %213 {offsets = [0, 13], sizes = [4, 24], strides = [1, 1]} : vector<4x38xbf16> to vector<4x24xbf16>
    %222 = vector.extract_strided_slice %213 {offsets = [0, 14], sizes = [4, 24], strides = [1, 1]} : vector<4x38xbf16> to vector<4x24xbf16>
    %223 = tpu.concatenate %214, %215, %216, %217, %218, %219, %220, %221, %222 in 0 : vector<4x24xbf16>, vector<4x24xbf16>, vector<4x24xbf16>, vector<4x24xbf16>, vector<4x24xbf16>, vector<4x24xbf16>, vector<4x24xbf16>, vector<4x24xbf16>, vector<4x24xbf16> -> vector<36x24xbf16>
    %c2_94 = arith.constant 2 : index
    %c0_95 = arith.constant 0 : index
    %c0_96 = arith.constant 0 : index
    %224 = vector.load %arg5[%c2_94, %c0_95, %c0_96] : memref<3x4x36xbf16, #tpu.memory_space<vmem>>, vector<1x4x36xbf16>
    %225 = vector.shape_cast %224 : vector<1x4x36xbf16> to vector<4x36xbf16>
    %cst_97 = arith.constant dense<0.000000e+00> : vector<4x24xf32>
    %226 = tpu.matmul %225, %223, %cst_97 {dimension_numbers = #tpu.dot_dimension_numbers<[1], [0], [0], [1], [0, 0, 1, 1], [], []>} : vector<4x36xbf16>, vector<36x24xbf16>, vector<4x24xf32> -> vector<4x24xf32>
    %227 = arith.addf %196, %226 : vector<4x24xf32>
    %cst_98 = arith.constant 0.000000e+00 : f32
    %228 = vector.broadcast %cst_98 : f32 to vector<4x1xf32>
    %cst_99 = arith.constant 0.000000e+00 : f32
    %229 = vector.broadcast %cst_99 : f32 to vector<4x1xf32>
    %c0_100 = arith.constant 0 : index
    %c0_101 = arith.constant 0 : index
    %230 = vector.load %arg6[%c0_100, %c0_101] : memref<4x1xf32, #tpu.memory_space<vmem>>, vector<4x1xf32>
    %231 = vector.broadcast %230 : vector<4x1xf32> to vector<4x24xf32>
    %232 = arith.addf %134, %231 : vector<4x24xf32>
    %233 = arith.truncf %232 : vector<4x24xf32> to vector<4x24xbf16>
    %c0_102 = arith.constant 0 : index
    %c0_103 = arith.constant 0 : index
    %c0_104 = arith.constant 0 : index
    %c0_105 = arith.constant 0 : index
    %234 = vector.load %arg7[%c0_102, %c0_103, %c0_104, %c0_105] : memref<1x4x4x24xbf16, #tpu.memory_space<vmem>>, vector<1x1x4x24xbf16>
    %235 = vector.shape_cast %234 : vector<1x1x4x24xbf16> to vector<4x24xbf16>
    %236 = vector.shape_cast %233 : vector<4x24xbf16> to vector<1x1x4x24xbf16>
    tpu.vector_store %arg7[%c0_102, %c0_103, %c0_104, %c0_105], %236 {strides = array<i32>} : memref<1x4x4x24xbf16, #tpu.memory_space<vmem>>, vector<1x1x4x24xbf16>,
    %237 = arith.extf %233 : vector<4x24xbf16> to vector<4x24xf32>
    %238 = vector.broadcast %37 : vector<1x24xf32> to vector<4x24xf32>
    %239 = arith.mulf %237, %238 : vector<4x24xf32>
    %cst_106 = arith.constant dense<0.000000e+00> : vector<4xf32>
    %240 = vector.multi_reduction <add>, %239, %cst_106 [1] : vector<4x24xf32> to vector<4xf32>
    %241 = vector.shape_cast %240 : vector<4xf32> to vector<4x1xf32>
    %242 = arith.addf %228, %241 : vector<4x1xf32>
    %243 = arith.mulf %239, %237 : vector<4x24xf32>
    %cst_107 = arith.constant dense<0.000000e+00> : vector<4xf32>
    %244 = vector.multi_reduction <add>, %243, %cst_107 [1] : vector<4x24xf32> to vector<4xf32>
    %245 = vector.shape_cast %244 : vector<4xf32> to vector<4x1xf32>
    %246 = arith.addf %229, %245 : vector<4x1xf32>
    %c0_108 = arith.constant 0 : index
    %c0_109 = arith.constant 0 : index
    %247 = vector.load %arg6[%c0_108, %c0_109] : memref<4x1xf32, #tpu.memory_space<vmem>>, vector<4x1xf32>
    %248 = vector.broadcast %247 : vector<4x1xf32> to vector<4x24xf32>
    %249 = arith.addf %169, %248 : vector<4x24xf32>
    %250 = arith.truncf %249 : vector<4x24xf32> to vector<4x24xbf16>
    %c0_110 = arith.constant 0 : index
    %c1_111 = arith.constant 1 : index
    %c0_112 = arith.constant 0 : index
    %c0_113 = arith.constant 0 : index
    %251 = vector.load %arg7[%c0_110, %c1_111, %c0_112, %c0_113] : memref<1x4x4x24xbf16, #tpu.memory_space<vmem>>, vector<1x1x4x24xbf16>
    %252 = vector.shape_cast %251 : vector<1x1x4x24xbf16> to vector<4x24xbf16>
    %253 = vector.shape_cast %250 : vector<4x24xbf16> to vector<1x1x4x24xbf16>
    tpu.vector_store %arg7[%c0_110, %c1_111, %c0_112, %c0_113], %253 {strides = array<i32>} : memref<1x4x4x24xbf16, #tpu.memory_space<vmem>>, vector<1x1x4x24xbf16>,
    %254 = arith.extf %250 : vector<4x24xbf16> to vector<4x24xf32>
    %255 = vector.broadcast %37 : vector<1x24xf32> to vector<4x24xf32>
    %256 = arith.mulf %254, %255 : vector<4x24xf32>
    %cst_114 = arith.constant dense<0.000000e+00> : vector<4xf32>
    %257 = vector.multi_reduction <add>, %256, %cst_114 [1] : vector<4x24xf32> to vector<4xf32>
    %258 = vector.shape_cast %257 : vector<4xf32> to vector<4x1xf32>
    %259 = arith.addf %242, %258 : vector<4x1xf32>
    %260 = arith.mulf %256, %254 : vector<4x24xf32>
    %cst_115 = arith.constant dense<0.000000e+00> : vector<4xf32>
    %261 = vector.multi_reduction <add>, %260, %cst_115 [1] : vector<4x24xf32> to vector<4xf32>
    %262 = vector.shape_cast %261 : vector<4xf32> to vector<4x1xf32>
    %263 = arith.addf %246, %262 : vector<4x1xf32>
    %c0_116 = arith.constant 0 : index
    %c0_117 = arith.constant 0 : index
    %264 = vector.load %arg6[%c0_116, %c0_117] : memref<4x1xf32, #tpu.memory_space<vmem>>, vector<4x1xf32>
    %265 = vector.broadcast %264 : vector<4x1xf32> to vector<4x24xf32>
    %266 = arith.addf %200, %265 : vector<4x24xf32>
    %267 = arith.truncf %266 : vector<4x24xf32> to vector<4x24xbf16>
    %c0_118 = arith.constant 0 : index
    %c2_119 = arith.constant 2 : index
    %c0_120 = arith.constant 0 : index
    %c0_121 = arith.constant 0 : index
    %268 = vector.load %arg7[%c0_118, %c2_119, %c0_120, %c0_121] : memref<1x4x4x24xbf16, #tpu.memory_space<vmem>>, vector<1x1x4x24xbf16>
    %269 = vector.shape_cast %268 : vector<1x1x4x24xbf16> to vector<4x24xbf16>
    %270 = vector.shape_cast %267 : vector<4x24xbf16> to vector<1x1x4x24xbf16>
    tpu.vector_store %arg7[%c0_118, %c2_119, %c0_120, %c0_121], %270 {strides = array<i32>} : memref<1x4x4x24xbf16, #tpu.memory_space<vmem>>, vector<1x1x4x24xbf16>,
    %271 = arith.extf %267 : vector<4x24xbf16> to vector<4x24xf32>
    %272 = vector.broadcast %37 : vector<1x24xf32> to vector<4x24xf32>
    %273 = arith.mulf %271, %272 : vector<4x24xf32>
    %cst_122 = arith.constant dense<0.000000e+00> : vector<4xf32>
    %274 = vector.multi_reduction <add>, %273, %cst_122 [1] : vector<4x24xf32> to vector<4xf32>
    %275 = vector.shape_cast %274 : vector<4xf32> to vector<4x1xf32>
    %276 = arith.addf %259, %275 : vector<4x1xf32>
    %277 = arith.mulf %273, %271 : vector<4x24xf32>
    %cst_123 = arith.constant dense<0.000000e+00> : vector<4xf32>
    %278 = vector.multi_reduction <add>, %277, %cst_123 [1] : vector<4x24xf32> to vector<4xf32>
    %279 = vector.shape_cast %278 : vector<4xf32> to vector<4x1xf32>
    %280 = arith.addf %263, %279 : vector<4x1xf32>
    %c0_124 = arith.constant 0 : index
    %c0_125 = arith.constant 0 : index
    %281 = vector.load %arg6[%c0_124, %c0_125] : memref<4x1xf32, #tpu.memory_space<vmem>>, vector<4x1xf32>
    %282 = vector.broadcast %281 : vector<4x1xf32> to vector<4x24xf32>
    %283 = arith.addf %227, %282 : vector<4x24xf32>
    %284 = arith.truncf %283 : vector<4x24xf32> to vector<4x24xbf16>
    %c0_126 = arith.constant 0 : index
    %c3_127 = arith.constant 3 : index
    %c0_128 = arith.constant 0 : index
    %c0_129 = arith.constant 0 : index
    %285 = vector.load %arg7[%c0_126, %c3_127, %c0_128, %c0_129] : memref<1x4x4x24xbf16, #tpu.memory_space<vmem>>, vector<1x1x4x24xbf16>
    %286 = vector.shape_cast %285 : vector<1x1x4x24xbf16> to vector<4x24xbf16>
    %287 = vector.shape_cast %284 : vector<4x24xbf16> to vector<1x1x4x24xbf16>
    tpu.vector_store %arg7[%c0_126, %c3_127, %c0_128, %c0_129], %287 {strides = array<i32>} : memref<1x4x4x24xbf16, #tpu.memory_space<vmem>>, vector<1x1x4x24xbf16>,
    %288 = arith.extf %284 : vector<4x24xbf16> to vector<4x24xf32>
    %289 = vector.broadcast %37 : vector<1x24xf32> to vector<4x24xf32>
    %290 = arith.mulf %288, %289 : vector<4x24xf32>
    %cst_130 = arith.constant dense<0.000000e+00> : vector<4xf32>
    %291 = vector.multi_reduction <add>, %290, %cst_130 [1] : vector<4x24xf32> to vector<4xf32>
    %292 = vector.shape_cast %291 : vector<4xf32> to vector<4x1xf32>
    %293 = arith.addf %276, %292 : vector<4x1xf32>
    %294 = arith.mulf %290, %288 : vector<4x24xf32>
    %cst_131 = arith.constant dense<0.000000e+00> : vector<4xf32>
    %295 = vector.multi_reduction <add>, %294, %cst_131 [1] : vector<4x24xf32> to vector<4xf32>
    %296 = vector.shape_cast %295 : vector<4xf32> to vector<4x1xf32>
    %297 = arith.addf %280, %296 : vector<4x1xf32>
    %c0_132 = arith.constant 0 : index
    %c0_133 = arith.constant 0 : index
    %c0_134 = arith.constant 0 : index
    %c0_135 = arith.constant 0 : index
    %298 = vector.load %arg8[%c0_132, %c0_133, %c0_134, %c0_135] : memref<1x1x4x1xf32, #tpu.memory_space<vmem>>, vector<1x1x4x1xf32>
    %299 = vector.shape_cast %298 : vector<1x1x4x1xf32> to vector<4x1xf32>
    %300 = vector.shape_cast %293 : vector<4x1xf32> to vector<1x1x4x1xf32>
    tpu.vector_store %arg8[%c0_132, %c0_133, %c0_134, %c0_135], %300 {strides = array<i32>} : memref<1x1x4x1xf32, #tpu.memory_space<vmem>>, vector<1x1x4x1xf32>,
    %c0_136 = arith.constant 0 : index
    %c0_137 = arith.constant 0 : index
    %c0_138 = arith.constant 0 : index
    %c0_139 = arith.constant 0 : index
    %301 = vector.load %arg9[%c0_136, %c0_137, %c0_138, %c0_139] : memref<1x1x4x1xf32, #tpu.memory_space<vmem>>, vector<1x1x4x1xf32>
    %302 = vector.shape_cast %301 : vector<1x1x4x1xf32> to vector<4x1xf32>
    %303 = vector.shape_cast %297 : vector<4x1xf32> to vector<1x1x4x1xf32>
    tpu.vector_store %arg9[%c0_136, %c0_137, %c0_138, %c0_139], %303 {strides = array<i32>} : memref<1x1x4x1xf32, #tpu.memory_space<vmem>>, vector<1x1x4x1xf32>,
    return
  }
  func.func @transform_0(%arg0: i32, %arg1: i32) -> (i32, i32, i32, i32) {
    %c1_i32 = arith.constant 1 : i32
    %0 = arith.muli %arg0, %c1_i32 : i32
    %1 = arith.addi %0, %arg1 : i32
    %c0_i32 = arith.constant 0 : i32
    %c0_i32_0 = arith.constant 0 : i32
    %c0_i32_1 = arith.constant 0 : i32
    %c0_i32_2 = arith.constant 0 : i32
    return %1, %c0_i32, %c0_i32_0, %c0_i32_1 : i32, i32, i32, i32
  }
  func.func @transform_1(%arg0: i32, %arg1: i32) -> (i32, i32, i32, i32) {
    %c0_i32 = arith.constant 0 : i32
    %c0_i32_0 = arith.constant 0 : i32
    %c0_i32_1 = arith.constant 0 : i32
    %c0_i32_2 = arith.constant 0 : i32
    return %arg0, %c0_i32, %c0_i32_0, %c0_i32_1 : i32, i32, i32, i32
  }
  func.func @transform_2(%arg0: i32, %arg1: i32) -> (i32, i32, i32, i32) {
    %c0_i32 = arith.constant 0 : i32
    %c0_i32_0 = arith.constant 0 : i32
    %c0_i32_1 = arith.constant 0 : i32
    %c0_i32_2 = arith.constant 0 : i32
    return %arg0, %c0_i32, %c0_i32_0, %c0_i32_1 : i32, i32, i32, i32
  }
  func.func @transform_3(%arg0: i32, %arg1: i32) -> (i32, i32, i32) {
    %c0_i32 = arith.constant 0 : i32
    %c0_i32_0 = arith.constant 0 : i32
    %c0_i32_1 = arith.constant 0 : i32
    %c0_i32_2 = arith.constant 0 : i32
    return %c0_i32, %c0_i32_0, %c0_i32_1 : i32, i32, i32
  }
  func.func @transform_4(%arg0: i32, %arg1: i32) -> (i32, i32) {
    %c0_i32 = arith.constant 0 : i32
    %c0_i32_0 = arith.constant 0 : i32
    %c0_i32_1 = arith.constant 0 : i32
    return %c0_i32, %c0_i32_0 : i32, i32
  }
  func.func @transform_5(%arg0: i32, %arg1: i32) -> (i32, i32, i32, i32) {
    %c0_i32 = arith.constant 0 : i32
    %c0_i32_0 = arith.constant 0 : i32
    %c0_i32_1 = arith.constant 0 : i32
    return %arg0, %arg1, %c0_i32, %c0_i32_0 : i32, i32, i32, i32
  }
  func.func @transform_6(%arg0: i32, %arg1: i32) -> (i32, i32, i32, i32) {
    %c0_i32 = arith.constant 0 : i32
    %c0_i32_0 = arith.constant 0 : i32
    %c0_i32_1 = arith.constant 0 : i32
    return %arg0, %arg1, %c0_i32, %c0_i32_0 : i32, i32, i32, i32
  }
  func.func @transform_7(%arg0: i32, %arg1: i32) -> (i32, i32, i32, i32) {
    %c0_i32 = arith.constant 0 : i32
    %c0_i32_0 = arith.constant 0 : i32
    %c0_i32_1 = arith.constant 0 : i32
    return %arg0, %arg1, %c0_i32, %c0_i32_0 : i32, i32, i32, i32
  }
}

module attributes {stable_mosaic.version = 11 : i64} {
  func.func @norm_conv1x1_kernel(%arg0: i32, %arg1: i32, %arg2: memref<1x4x64xbf16, #tpu.memory_space<vmem>>, %arg3: memref<1x1x4x1xf32, #tpu.memory_space<vmem>>, %arg4: memref<1x1x4x1xf32, #tpu.memory_space<vmem>>, %arg5: memref<16x4xbf16, #tpu.memory_space<vmem>>, %arg6: memref<16x1xf32, #tpu.memory_space<vmem>>, %arg7: memref<1x16x64xbf16, #tpu.memory_space<vmem>>, %arg8: memref<1x1x16x1xf32, #tpu.memory_space<vmem>>, %arg9: memref<1x1x16x1xf32, #tpu.memory_space<vmem>>) attributes {dimension_semantics = [#tpu.dimension_semantics<parallel>, #tpu.dimension_semantics<parallel>], iteration_bounds = array<i64: 2, 1>, scalar_prefetch = 0 : i64, scratch_operands = 0 : i64, tpu.core_type = #tpu.core_type<tc>, window_params = [{transform_indices = @transform_0, window_bounds = array<i64: 1, 4, 64>}, {transform_indices = @transform_1, window_bounds = array<i64: 1, 1, 4, 1>}, {transform_indices = @transform_2, window_bounds = array<i64: 1, 1, 4, 1>}, {pipeline_mode = #tpu.pipeline_mode<synchronous>, transform_indices = @transform_3, window_bounds = array<i64: 16, 4>}, {pipeline_mode = #tpu.pipeline_mode<synchronous>, transform_indices = @transform_4, window_bounds = array<i64: 16, 1>}, {transform_indices = @transform_5, window_bounds = array<i64: 1, 16, 64>}, {transform_indices = @transform_6, window_bounds = array<i64: 1, 1, 16, 1>}, {transform_indices = @transform_7, window_bounds = array<i64: 1, 1, 16, 1>}]} {
    %c0 = arith.constant 0 : index
    %c0_0 = arith.constant 0 : index
    %c0_1 = arith.constant 0 : index
    %c0_2 = arith.constant 0 : index
    %0 = vector.load %arg3[%c0, %c0_0, %c0_1, %c0_2] : memref<1x1x4x1xf32, #tpu.memory_space<vmem>>, vector<1x1x4x1xf32>
    %1 = vector.shape_cast %0 : vector<1x1x4x1xf32> to vector<1x4x1xf32>
    %c0_3 = arith.constant 0 : index
    %c0_4 = arith.constant 0 : index
    %c0_5 = arith.constant 0 : index
    %c0_6 = arith.constant 0 : index
    %2 = vector.load %arg4[%c0_3, %c0_4, %c0_5, %c0_6] : memref<1x1x4x1xf32, #tpu.memory_space<vmem>>, vector<1x1x4x1xf32>
    %3 = vector.shape_cast %2 : vector<1x1x4x1xf32> to vector<1x4x1xf32>
    %cst = arith.constant dense<0.000000e+00> : vector<4x1xf32>
    %4 = vector.multi_reduction <add>, %1, %cst [0] : vector<1x4x1xf32> to vector<4x1xf32>
    %cst_7 = arith.constant dense<0.000000e+00> : vector<4x1xf32>
    %5 = vector.multi_reduction <add>, %3, %cst_7 [0] : vector<1x4x1xf32> to vector<4x1xf32>
    %cst_8 = arith.constant 1.562500e-02 : f32
    %6 = vector.broadcast %cst_8 : f32 to vector<4x1xf32>
    %7 = arith.mulf %4, %6 : vector<4x1xf32>
    %cst_9 = arith.constant 1.562500e-02 : f32
    %8 = vector.broadcast %cst_9 : f32 to vector<4x1xf32>
    %9 = arith.mulf %5, %8 : vector<4x1xf32>
    %10 = arith.mulf %7, %7 : vector<4x1xf32>
    %11 = arith.subf %9, %10 : vector<4x1xf32>
    %cst_10 = arith.constant 0.000000e+00 : f32
    %12 = vector.broadcast %cst_10 : f32 to vector<4x1xf32>
    %13 = arith.maximumf %11, %12 : vector<4x1xf32>
    %cst_11 = arith.constant 9.99999974E-6 : f32
    %14 = vector.broadcast %cst_11 : f32 to vector<4x1xf32>
    %15 = arith.addf %13, %14 : vector<4x1xf32>
    %16 = math.rsqrt %15 : vector<4x1xf32>
    %c0_12 = arith.constant 0 : index
    %c0_13 = arith.constant 0 : index
    %c0_14 = arith.constant 0 : index
    %17 = vector.load %arg2[%c0_12, %c0_13, %c0_14] : memref<1x4x64xbf16, #tpu.memory_space<vmem>>, vector<1x4x64xbf16>
    %18 = vector.shape_cast %17 : vector<1x4x64xbf16> to vector<4x64xbf16>
    %19 = arith.extf %18 : vector<4x64xbf16> to vector<4x64xf32>
    %20 = vector.broadcast %7 : vector<4x1xf32> to vector<4x64xf32>
    %21 = arith.subf %19, %20 : vector<4x64xf32>
    %22 = vector.broadcast %16 : vector<4x1xf32> to vector<4x64xf32>
    %23 = arith.mulf %21, %22 : vector<4x64xf32>
    %cst_15 = arith.constant 0.000000e+00 : f32
    %24 = vector.broadcast %cst_15 : f32 to vector<4x64xf32>
    %25 = arith.cmpf oge, %23, %24 : vector<4x64xf32>
    %cst_16 = arith.constant 2.000000e-01 : f32
    %26 = vector.broadcast %cst_16 : f32 to vector<4x64xf32>
    %27 = arith.mulf %26, %23 : vector<4x64xf32>
    %28 = arith.select %25, %23, %27 : vector<4x64xi1>, vector<4x64xf32>
    %29 = arith.truncf %28 : vector<4x64xf32> to vector<4x64xbf16>
    %c0_17 = arith.constant 0 : index
    %c0_18 = arith.constant 0 : index
    %30 = vector.load %arg5[%c0_17, %c0_18] : memref<16x4xbf16, #tpu.memory_space<vmem>>, vector<16x4xbf16>
    %cst_19 = arith.constant dense<0.000000e+00> : vector<16x64xf32>
    %31 = tpu.matmul %30, %29, %cst_19 {dimension_numbers = #tpu.dot_dimension_numbers<[1], [0], [0], [1], [0, 0, 1, 1], [], []>} : vector<16x4xbf16>, vector<4x64xbf16>, vector<16x64xf32> -> vector<16x64xf32>
    %c0_20 = arith.constant 0 : index
    %c0_21 = arith.constant 0 : index
    %32 = vector.load %arg6[%c0_20, %c0_21] : memref<16x1xf32, #tpu.memory_space<vmem>>, vector<16x1xf32>
    %33 = vector.broadcast %32 : vector<16x1xf32> to vector<16x64xf32>
    %34 = arith.addf %31, %33 : vector<16x64xf32>
    %35 = arith.truncf %34 : vector<16x64xf32> to vector<16x64xbf16>
    %c0_22 = arith.constant 0 : index
    %c0_23 = arith.constant 0 : index
    %c0_24 = arith.constant 0 : index
    %36 = vector.load %arg7[%c0_22, %c0_23, %c0_24] : memref<1x16x64xbf16, #tpu.memory_space<vmem>>, vector<1x16x64xbf16>
    %37 = vector.shape_cast %36 : vector<1x16x64xbf16> to vector<16x64xbf16>
    %38 = vector.shape_cast %35 : vector<16x64xbf16> to vector<1x16x64xbf16>
    tpu.vector_store %arg7[%c0_22, %c0_23, %c0_24], %38 {strides = array<i32>} : memref<1x16x64xbf16, #tpu.memory_space<vmem>>, vector<1x16x64xbf16>,
    %39 = arith.extf %35 : vector<16x64xbf16> to vector<16x64xf32>
    %cst_25 = arith.constant dense<0.000000e+00> : vector<16xf32>
    %40 = vector.multi_reduction <add>, %39, %cst_25 [1] : vector<16x64xf32> to vector<16xf32>
    %41 = vector.shape_cast %40 : vector<16xf32> to vector<16x1xf32>
    %c0_26 = arith.constant 0 : index
    %c0_27 = arith.constant 0 : index
    %c0_28 = arith.constant 0 : index
    %c0_29 = arith.constant 0 : index
    %42 = vector.load %arg8[%c0_26, %c0_27, %c0_28, %c0_29] : memref<1x1x16x1xf32, #tpu.memory_space<vmem>>, vector<1x1x16x1xf32>
    %43 = vector.shape_cast %42 : vector<1x1x16x1xf32> to vector<16x1xf32>
    %44 = vector.shape_cast %41 : vector<16x1xf32> to vector<1x1x16x1xf32>
    tpu.vector_store %arg8[%c0_26, %c0_27, %c0_28, %c0_29], %44 {strides = array<i32>} : memref<1x1x16x1xf32, #tpu.memory_space<vmem>>, vector<1x1x16x1xf32>,
    %45 = arith.mulf %39, %39 : vector<16x64xf32>
    %cst_30 = arith.constant dense<0.000000e+00> : vector<16xf32>
    %46 = vector.multi_reduction <add>, %45, %cst_30 [1] : vector<16x64xf32> to vector<16xf32>
    %47 = vector.shape_cast %46 : vector<16xf32> to vector<16x1xf32>
    %c0_31 = arith.constant 0 : index
    %c0_32 = arith.constant 0 : index
    %c0_33 = arith.constant 0 : index
    %c0_34 = arith.constant 0 : index
    %48 = vector.load %arg9[%c0_31, %c0_32, %c0_33, %c0_34] : memref<1x1x16x1xf32, #tpu.memory_space<vmem>>, vector<1x1x16x1xf32>
    %49 = vector.shape_cast %48 : vector<1x1x16x1xf32> to vector<16x1xf32>
    %50 = vector.shape_cast %47 : vector<16x1xf32> to vector<1x1x16x1xf32>
    tpu.vector_store %arg9[%c0_31, %c0_32, %c0_33, %c0_34], %50 {strides = array<i32>} : memref<1x1x16x1xf32, #tpu.memory_space<vmem>>, vector<1x1x16x1xf32>,
    return
  }
  func.func @transform_0(%arg0: i32, %arg1: i32) -> (i32, i32, i32) {
    %c0_i32 = arith.constant 0 : i32
    %c0_i32_0 = arith.constant 0 : i32
    return %arg0, %c0_i32, %arg1 : i32, i32, i32
  }
  func.func @transform_1(%arg0: i32, %arg1: i32) -> (i32, i32, i32, i32) {
    %c0_i32 = arith.constant 0 : i32
    %c0_i32_0 = arith.constant 0 : i32
    %c0_i32_1 = arith.constant 0 : i32
    %c0_i32_2 = arith.constant 0 : i32
    return %arg0, %c0_i32, %c0_i32_0, %c0_i32_1 : i32, i32, i32, i32
  }
  func.func @transform_2(%arg0: i32, %arg1: i32) -> (i32, i32, i32, i32) {
    %c0_i32 = arith.constant 0 : i32
    %c0_i32_0 = arith.constant 0 : i32
    %c0_i32_1 = arith.constant 0 : i32
    %c0_i32_2 = arith.constant 0 : i32
    return %arg0, %c0_i32, %c0_i32_0, %c0_i32_1 : i32, i32, i32, i32
  }
  func.func @transform_3(%arg0: i32, %arg1: i32) -> (i32, i32) {
    %c0_i32 = arith.constant 0 : i32
    %c0_i32_0 = arith.constant 0 : i32
    %c0_i32_1 = arith.constant 0 : i32
    return %c0_i32, %c0_i32_0 : i32, i32
  }
  func.func @transform_4(%arg0: i32, %arg1: i32) -> (i32, i32) {
    %c0_i32 = arith.constant 0 : i32
    %c0_i32_0 = arith.constant 0 : i32
    %c0_i32_1 = arith.constant 0 : i32
    return %c0_i32, %c0_i32_0 : i32, i32
  }
  func.func @transform_5(%arg0: i32, %arg1: i32) -> (i32, i32, i32) {
    %c0_i32 = arith.constant 0 : i32
    %c0_i32_0 = arith.constant 0 : i32
    return %arg0, %c0_i32, %arg1 : i32, i32, i32
  }
  func.func @transform_6(%arg0: i32, %arg1: i32) -> (i32, i32, i32, i32) {
    %c0_i32 = arith.constant 0 : i32
    %c0_i32_0 = arith.constant 0 : i32
    %c0_i32_1 = arith.constant 0 : i32
    return %arg0, %arg1, %c0_i32, %c0_i32_0 : i32, i32, i32, i32
  }
  func.func @transform_7(%arg0: i32, %arg1: i32) -> (i32, i32, i32, i32) {
    %c0_i32 = arith.constant 0 : i32
    %c0_i32_0 = arith.constant 0 : i32
    %c0_i32_1 = arith.constant 0 : i32
    return %arg0, %arg1, %c0_i32, %c0_i32_0 : i32, i32, i32, i32
  }
}

module attributes {stable_mosaic.version = 11 : i64} {
  func.func @norm_concat_conv1x1_kernel(%arg0: i32, %arg1: i32, %arg2: memref<1x16x64xf32, #tpu.memory_space<vmem>>, %arg3: memref<1x16x64xbf16, #tpu.memory_space<vmem>>, %arg4: memref<1x1x16x1xf32, #tpu.memory_space<vmem>>, %arg5: memref<1x1x16x1xf32, #tpu.memory_space<vmem>>, %arg6: memref<16x16xbf16, #tpu.memory_space<vmem>>, %arg7: memref<16x16xbf16, #tpu.memory_space<vmem>>, %arg8: memref<16x1xf32, #tpu.memory_space<vmem>>, %arg9: memref<1x16x64xbf16, #tpu.memory_space<vmem>>, %arg10: memref<1x1x16x1xf32, #tpu.memory_space<vmem>>, %arg11: memref<1x1x16x1xf32, #tpu.memory_space<vmem>>) attributes {dimension_semantics = [#tpu.dimension_semantics<parallel>, #tpu.dimension_semantics<parallel>], iteration_bounds = array<i64: 2, 1>, scalar_prefetch = 0 : i64, scratch_operands = 0 : i64, tpu.core_type = #tpu.core_type<tc>, window_params = [{transform_indices = @transform_0, window_bounds = array<i64: 1, 16, 64>}, {transform_indices = @transform_1, window_bounds = array<i64: 1, 16, 64>}, {transform_indices = @transform_2, window_bounds = array<i64: 1, 1, 16, 1>}, {transform_indices = @transform_3, window_bounds = array<i64: 1, 1, 16, 1>}, {pipeline_mode = #tpu.pipeline_mode<synchronous>, transform_indices = @transform_4, window_bounds = array<i64: 16, 16>}, {pipeline_mode = #tpu.pipeline_mode<synchronous>, transform_indices = @transform_5, window_bounds = array<i64: 16, 16>}, {pipeline_mode = #tpu.pipeline_mode<synchronous>, transform_indices = @transform_6, window_bounds = array<i64: 16, 1>}, {transform_indices = @transform_7, window_bounds = array<i64: 1, 16, 64>}, {transform_indices = @transform_8, window_bounds = array<i64: 1, 1, 16, 1>}, {transform_indices = @transform_9, window_bounds = array<i64: 1, 1, 16, 1>}]} {
    %c0 = arith.constant 0 : index
    %c0_0 = arith.constant 0 : index
    %c0_1 = arith.constant 0 : index
    %c0_2 = arith.constant 0 : index
    %0 = vector.load %arg4[%c0, %c0_0, %c0_1, %c0_2] : memref<1x1x16x1xf32, #tpu.memory_space<vmem>>, vector<1x1x16x1xf32>
    %1 = vector.shape_cast %0 : vector<1x1x16x1xf32> to vector<1x16x1xf32>
    %c0_3 = arith.constant 0 : index
    %c0_4 = arith.constant 0 : index
    %c0_5 = arith.constant 0 : index
    %c0_6 = arith.constant 0 : index
    %2 = vector.load %arg5[%c0_3, %c0_4, %c0_5, %c0_6] : memref<1x1x16x1xf32, #tpu.memory_space<vmem>>, vector<1x1x16x1xf32>
    %3 = vector.shape_cast %2 : vector<1x1x16x1xf32> to vector<1x16x1xf32>
    %cst = arith.constant dense<0.000000e+00> : vector<16x1xf32>
    %4 = vector.multi_reduction <add>, %1, %cst [0] : vector<1x16x1xf32> to vector<16x1xf32>
    %cst_7 = arith.constant dense<0.000000e+00> : vector<16x1xf32>
    %5 = vector.multi_reduction <add>, %3, %cst_7 [0] : vector<1x16x1xf32> to vector<16x1xf32>
    %cst_8 = arith.constant 1.562500e-02 : f32
    %6 = vector.broadcast %cst_8 : f32 to vector<16x1xf32>
    %7 = arith.mulf %4, %6 : vector<16x1xf32>
    %cst_9 = arith.constant 1.562500e-02 : f32
    %8 = vector.broadcast %cst_9 : f32 to vector<16x1xf32>
    %9 = arith.mulf %5, %8 : vector<16x1xf32>
    %10 = arith.mulf %7, %7 : vector<16x1xf32>
    %11 = arith.subf %9, %10 : vector<16x1xf32>
    %cst_10 = arith.constant 0.000000e+00 : f32
    %12 = vector.broadcast %cst_10 : f32 to vector<16x1xf32>
    %13 = arith.maximumf %11, %12 : vector<16x1xf32>
    %cst_11 = arith.constant 9.99999974E-6 : f32
    %14 = vector.broadcast %cst_11 : f32 to vector<16x1xf32>
    %15 = arith.addf %13, %14 : vector<16x1xf32>
    %16 = math.rsqrt %15 : vector<16x1xf32>
    %c0_12 = arith.constant 0 : index
    %c0_13 = arith.constant 0 : index
    %c0_14 = arith.constant 0 : index
    %17 = vector.load %arg3[%c0_12, %c0_13, %c0_14] : memref<1x16x64xbf16, #tpu.memory_space<vmem>>, vector<1x16x64xbf16>
    %18 = vector.shape_cast %17 : vector<1x16x64xbf16> to vector<16x64xbf16>
    %19 = arith.extf %18 : vector<16x64xbf16> to vector<16x64xf32>
    %20 = vector.broadcast %7 : vector<16x1xf32> to vector<16x64xf32>
    %21 = arith.subf %19, %20 : vector<16x64xf32>
    %22 = vector.broadcast %16 : vector<16x1xf32> to vector<16x64xf32>
    %23 = arith.mulf %21, %22 : vector<16x64xf32>
    %cst_15 = arith.constant 0.000000e+00 : f32
    %24 = vector.broadcast %cst_15 : f32 to vector<16x64xf32>
    %25 = arith.cmpf oge, %23, %24 : vector<16x64xf32>
    %cst_16 = arith.constant 2.000000e-01 : f32
    %26 = vector.broadcast %cst_16 : f32 to vector<16x64xf32>
    %27 = arith.mulf %26, %23 : vector<16x64xf32>
    %28 = arith.select %25, %23, %27 : vector<16x64xi1>, vector<16x64xf32>
    %29 = arith.truncf %28 : vector<16x64xf32> to vector<16x64xbf16>
    %c0_17 = arith.constant 0 : index
    %c0_18 = arith.constant 0 : index
    %30 = vector.load %arg6[%c0_17, %c0_18] : memref<16x16xbf16, #tpu.memory_space<vmem>>, vector<16x16xbf16>
    %c0_19 = arith.constant 0 : index
    %c0_20 = arith.constant 0 : index
    %c0_21 = arith.constant 0 : index
    %31 = vector.load %arg2[%c0_19, %c0_20, %c0_21] : memref<1x16x64xf32, #tpu.memory_space<vmem>>, vector<1x16x64xf32>
    %32 = vector.shape_cast %31 : vector<1x16x64xf32> to vector<16x64xf32>
    %33 = arith.truncf %32 : vector<16x64xf32> to vector<16x64xbf16>
    %cst_22 = arith.constant dense<0.000000e+00> : vector<16x64xf32>
    %34 = tpu.matmul %30, %33, %cst_22 {dimension_numbers = #tpu.dot_dimension_numbers<[1], [0], [0], [1], [0, 0, 1, 1], [], []>} : vector<16x16xbf16>, vector<16x64xbf16>, vector<16x64xf32> -> vector<16x64xf32>
    %c0_23 = arith.constant 0 : index
    %c0_24 = arith.constant 0 : index
    %35 = vector.load %arg7[%c0_23, %c0_24] : memref<16x16xbf16, #tpu.memory_space<vmem>>, vector<16x16xbf16>
    %cst_25 = arith.constant dense<0.000000e+00> : vector<16x64xf32>
    %36 = tpu.matmul %35, %29, %cst_25 {dimension_numbers = #tpu.dot_dimension_numbers<[1], [0], [0], [1], [0, 0, 1, 1], [], []>} : vector<16x16xbf16>, vector<16x64xbf16>, vector<16x64xf32> -> vector<16x64xf32>
    %37 = arith.addf %34, %36 : vector<16x64xf32>
    %c0_26 = arith.constant 0 : index
    %c0_27 = arith.constant 0 : index
    %38 = vector.load %arg8[%c0_26, %c0_27] : memref<16x1xf32, #tpu.memory_space<vmem>>, vector<16x1xf32>
    %39 = vector.broadcast %38 : vector<16x1xf32> to vector<16x64xf32>
    %40 = arith.addf %37, %39 : vector<16x64xf32>
    %41 = arith.truncf %40 : vector<16x64xf32> to vector<16x64xbf16>
    %c0_28 = arith.constant 0 : index
    %c0_29 = arith.constant 0 : index
    %c0_30 = arith.constant 0 : index
    %42 = vector.load %arg9[%c0_28, %c0_29, %c0_30] : memref<1x16x64xbf16, #tpu.memory_space<vmem>>, vector<1x16x64xbf16>
    %43 = vector.shape_cast %42 : vector<1x16x64xbf16> to vector<16x64xbf16>
    %44 = vector.shape_cast %41 : vector<16x64xbf16> to vector<1x16x64xbf16>
    tpu.vector_store %arg9[%c0_28, %c0_29, %c0_30], %44 {strides = array<i32>} : memref<1x16x64xbf16, #tpu.memory_space<vmem>>, vector<1x16x64xbf16>,
    %45 = arith.extf %41 : vector<16x64xbf16> to vector<16x64xf32>
    %cst_31 = arith.constant dense<0.000000e+00> : vector<16xf32>
    %46 = vector.multi_reduction <add>, %45, %cst_31 [1] : vector<16x64xf32> to vector<16xf32>
    %47 = vector.shape_cast %46 : vector<16xf32> to vector<16x1xf32>
    %c0_32 = arith.constant 0 : index
    %c0_33 = arith.constant 0 : index
    %c0_34 = arith.constant 0 : index
    %c0_35 = arith.constant 0 : index
    %48 = vector.load %arg10[%c0_32, %c0_33, %c0_34, %c0_35] : memref<1x1x16x1xf32, #tpu.memory_space<vmem>>, vector<1x1x16x1xf32>
    %49 = vector.shape_cast %48 : vector<1x1x16x1xf32> to vector<16x1xf32>
    %50 = vector.shape_cast %47 : vector<16x1xf32> to vector<1x1x16x1xf32>
    tpu.vector_store %arg10[%c0_32, %c0_33, %c0_34, %c0_35], %50 {strides = array<i32>} : memref<1x1x16x1xf32, #tpu.memory_space<vmem>>, vector<1x1x16x1xf32>,
    %51 = arith.mulf %45, %45 : vector<16x64xf32>
    %cst_36 = arith.constant dense<0.000000e+00> : vector<16xf32>
    %52 = vector.multi_reduction <add>, %51, %cst_36 [1] : vector<16x64xf32> to vector<16xf32>
    %53 = vector.shape_cast %52 : vector<16xf32> to vector<16x1xf32>
    %c0_37 = arith.constant 0 : index
    %c0_38 = arith.constant 0 : index
    %c0_39 = arith.constant 0 : index
    %c0_40 = arith.constant 0 : index
    %54 = vector.load %arg11[%c0_37, %c0_38, %c0_39, %c0_40] : memref<1x1x16x1xf32, #tpu.memory_space<vmem>>, vector<1x1x16x1xf32>
    %55 = vector.shape_cast %54 : vector<1x1x16x1xf32> to vector<16x1xf32>
    %56 = vector.shape_cast %53 : vector<16x1xf32> to vector<1x1x16x1xf32>
    tpu.vector_store %arg11[%c0_37, %c0_38, %c0_39, %c0_40], %56 {strides = array<i32>} : memref<1x1x16x1xf32, #tpu.memory_space<vmem>>, vector<1x1x16x1xf32>,
    return
  }
  func.func @transform_0(%arg0: i32, %arg1: i32) -> (i32, i32, i32) {
    %c0_i32 = arith.constant 0 : i32
    %c0_i32_0 = arith.constant 0 : i32
    return %arg0, %c0_i32, %arg1 : i32, i32, i32
  }
  func.func @transform_1(%arg0: i32, %arg1: i32) -> (i32, i32, i32) {
    %c0_i32 = arith.constant 0 : i32
    %c0_i32_0 = arith.constant 0 : i32
    return %arg0, %c0_i32, %arg1 : i32, i32, i32
  }
  func.func @transform_2(%arg0: i32, %arg1: i32) -> (i32, i32, i32, i32) {
    %c0_i32 = arith.constant 0 : i32
    %c0_i32_0 = arith.constant 0 : i32
    %c0_i32_1 = arith.constant 0 : i32
    %c0_i32_2 = arith.constant 0 : i32
    return %arg0, %c0_i32, %c0_i32_0, %c0_i32_1 : i32, i32, i32, i32
  }
  func.func @transform_3(%arg0: i32, %arg1: i32) -> (i32, i32, i32, i32) {
    %c0_i32 = arith.constant 0 : i32
    %c0_i32_0 = arith.constant 0 : i32
    %c0_i32_1 = arith.constant 0 : i32
    %c0_i32_2 = arith.constant 0 : i32
    return %arg0, %c0_i32, %c0_i32_0, %c0_i32_1 : i32, i32, i32, i32
  }
  func.func @transform_4(%arg0: i32, %arg1: i32) -> (i32, i32) {
    %c0_i32 = arith.constant 0 : i32
    %c0_i32_0 = arith.constant 0 : i32
    %c0_i32_1 = arith.constant 0 : i32
    return %c0_i32, %c0_i32_0 : i32, i32
  }
  func.func @transform_5(%arg0: i32, %arg1: i32) -> (i32, i32) {
    %c0_i32 = arith.constant 0 : i32
    %c0_i32_0 = arith.constant 0 : i32
    %c0_i32_1 = arith.constant 0 : i32
    return %c0_i32, %c0_i32_0 : i32, i32
  }
  func.func @transform_6(%arg0: i32, %arg1: i32) -> (i32, i32) {
    %c0_i32 = arith.constant 0 : i32
    %c0_i32_0 = arith.constant 0 : i32
    %c0_i32_1 = arith.constant 0 : i32
    return %c0_i32, %c0_i32_0 : i32, i32
  }
  func.func @transform_7(%arg0: i32, %arg1: i32) -> (i32, i32, i32) {
    %c0_i32 = arith.constant 0 : i32
    %c0_i32_0 = arith.constant 0 : i32
    return %arg0, %c0_i32, %arg1 : i32, i32, i32
  }
  func.func @transform_8(%arg0: i32, %arg1: i32) -> (i32, i32, i32, i32) {
    %c0_i32 = arith.constant 0 : i32
    %c0_i32_0 = arith.constant 0 : i32
    %c0_i32_1 = arith.constant 0 : i32
    return %arg0, %arg1, %c0_i32, %c0_i32_0 : i32, i32, i32, i32
  }
  func.func @transform_9(%arg0: i32, %arg1: i32) -> (i32, i32, i32, i32) {
    %c0_i32 = arith.constant 0 : i32
    %c0_i32_0 = arith.constant 0 : i32
    %c0_i32_1 = arith.constant 0 : i32
    return %arg0, %arg1, %c0_i32, %c0_i32_0 : i32, i32, i32, i32
  }
}

module attributes {stable_mosaic.version = 11 : i64} {
  func.func @norm_conv1x1_softmax_kernel(%arg0: i32, %arg1: i32, %arg2: memref<1x16x64xbf16, #tpu.memory_space<vmem>>, %arg3: memref<1x1x16x1xf32, #tpu.memory_space<vmem>>, %arg4: memref<1x1x16x1xf32, #tpu.memory_space<vmem>>, %arg5: memref<5x16xbf16, #tpu.memory_space<vmem>>, %arg6: memref<5x1xf32, #tpu.memory_space<vmem>>, %arg7: memref<1x5x64xf32, #tpu.memory_space<vmem>>) attributes {dimension_semantics = [#tpu.dimension_semantics<parallel>, #tpu.dimension_semantics<parallel>], iteration_bounds = array<i64: 2, 1>, scalar_prefetch = 0 : i64, scratch_operands = 0 : i64, tpu.core_type = #tpu.core_type<tc>, window_params = [{transform_indices = @transform_0, window_bounds = array<i64: 1, 16, 64>}, {transform_indices = @transform_1, window_bounds = array<i64: 1, 1, 16, 1>}, {transform_indices = @transform_2, window_bounds = array<i64: 1, 1, 16, 1>}, {pipeline_mode = #tpu.pipeline_mode<synchronous>, transform_indices = @transform_3, window_bounds = array<i64: 5, 16>}, {pipeline_mode = #tpu.pipeline_mode<synchronous>, transform_indices = @transform_4, window_bounds = array<i64: 5, 1>}, {transform_indices = @transform_5, window_bounds = array<i64: 1, 5, 64>}]} {
    %c0 = arith.constant 0 : index
    %c0_0 = arith.constant 0 : index
    %c0_1 = arith.constant 0 : index
    %c0_2 = arith.constant 0 : index
    %0 = vector.load %arg3[%c0, %c0_0, %c0_1, %c0_2] : memref<1x1x16x1xf32, #tpu.memory_space<vmem>>, vector<1x1x16x1xf32>
    %1 = vector.shape_cast %0 : vector<1x1x16x1xf32> to vector<1x16x1xf32>
    %c0_3 = arith.constant 0 : index
    %c0_4 = arith.constant 0 : index
    %c0_5 = arith.constant 0 : index
    %c0_6 = arith.constant 0 : index
    %2 = vector.load %arg4[%c0_3, %c0_4, %c0_5, %c0_6] : memref<1x1x16x1xf32, #tpu.memory_space<vmem>>, vector<1x1x16x1xf32>
    %3 = vector.shape_cast %2 : vector<1x1x16x1xf32> to vector<1x16x1xf32>
    %cst = arith.constant dense<0.000000e+00> : vector<16x1xf32>
    %4 = vector.multi_reduction <add>, %1, %cst [0] : vector<1x16x1xf32> to vector<16x1xf32>
    %cst_7 = arith.constant dense<0.000000e+00> : vector<16x1xf32>
    %5 = vector.multi_reduction <add>, %3, %cst_7 [0] : vector<1x16x1xf32> to vector<16x1xf32>
    %cst_8 = arith.constant 1.562500e-02 : f32
    %6 = vector.broadcast %cst_8 : f32 to vector<16x1xf32>
    %7 = arith.mulf %4, %6 : vector<16x1xf32>
    %cst_9 = arith.constant 1.562500e-02 : f32
    %8 = vector.broadcast %cst_9 : f32 to vector<16x1xf32>
    %9 = arith.mulf %5, %8 : vector<16x1xf32>
    %10 = arith.mulf %7, %7 : vector<16x1xf32>
    %11 = arith.subf %9, %10 : vector<16x1xf32>
    %cst_10 = arith.constant 0.000000e+00 : f32
    %12 = vector.broadcast %cst_10 : f32 to vector<16x1xf32>
    %13 = arith.maximumf %11, %12 : vector<16x1xf32>
    %cst_11 = arith.constant 9.99999974E-6 : f32
    %14 = vector.broadcast %cst_11 : f32 to vector<16x1xf32>
    %15 = arith.addf %13, %14 : vector<16x1xf32>
    %16 = math.rsqrt %15 : vector<16x1xf32>
    %c0_12 = arith.constant 0 : index
    %c0_13 = arith.constant 0 : index
    %c0_14 = arith.constant 0 : index
    %17 = vector.load %arg2[%c0_12, %c0_13, %c0_14] : memref<1x16x64xbf16, #tpu.memory_space<vmem>>, vector<1x16x64xbf16>
    %18 = vector.shape_cast %17 : vector<1x16x64xbf16> to vector<16x64xbf16>
    %19 = arith.extf %18 : vector<16x64xbf16> to vector<16x64xf32>
    %20 = vector.broadcast %7 : vector<16x1xf32> to vector<16x64xf32>
    %21 = arith.subf %19, %20 : vector<16x64xf32>
    %22 = vector.broadcast %16 : vector<16x1xf32> to vector<16x64xf32>
    %23 = arith.mulf %21, %22 : vector<16x64xf32>
    %cst_15 = arith.constant 0.000000e+00 : f32
    %24 = vector.broadcast %cst_15 : f32 to vector<16x64xf32>
    %25 = arith.cmpf oge, %23, %24 : vector<16x64xf32>
    %cst_16 = arith.constant 2.000000e-01 : f32
    %26 = vector.broadcast %cst_16 : f32 to vector<16x64xf32>
    %27 = arith.mulf %26, %23 : vector<16x64xf32>
    %28 = arith.select %25, %23, %27 : vector<16x64xi1>, vector<16x64xf32>
    %29 = arith.truncf %28 : vector<16x64xf32> to vector<16x64xbf16>
    %c0_17 = arith.constant 0 : index
    %c0_18 = arith.constant 0 : index
    %30 = vector.load %arg5[%c0_17, %c0_18] : memref<5x16xbf16, #tpu.memory_space<vmem>>, vector<5x16xbf16>
    %cst_19 = arith.constant dense<0.000000e+00> : vector<5x64xf32>
    %31 = tpu.matmul %30, %29, %cst_19 {dimension_numbers = #tpu.dot_dimension_numbers<[1], [0], [0], [1], [0, 0, 1, 1], [], []>} : vector<5x16xbf16>, vector<16x64xbf16>, vector<5x64xf32> -> vector<5x64xf32>
    %c0_20 = arith.constant 0 : index
    %c0_21 = arith.constant 0 : index
    %32 = vector.load %arg6[%c0_20, %c0_21] : memref<5x1xf32, #tpu.memory_space<vmem>>, vector<5x1xf32>
    %33 = vector.broadcast %32 : vector<5x1xf32> to vector<5x64xf32>
    %34 = arith.addf %31, %33 : vector<5x64xf32>
    %cst_22 = arith.constant dense<0xFF800000> : vector<64xf32>
    %35 = vector.multi_reduction <maximumf>, %34, %cst_22 [0] : vector<5x64xf32> to vector<64xf32>
    %36 = vector.shape_cast %35 : vector<64xf32> to vector<1x64xf32>
    %37 = vector.broadcast %36 : vector<1x64xf32> to vector<5x64xf32>
    %38 = arith.subf %34, %37 : vector<5x64xf32>
    %39 = math.exp %38 : vector<5x64xf32>
    %cst_23 = arith.constant dense<0.000000e+00> : vector<64xf32>
    %40 = vector.multi_reduction <add>, %39, %cst_23 [0] : vector<5x64xf32> to vector<64xf32>
    %41 = vector.shape_cast %40 : vector<64xf32> to vector<1x64xf32>
    %cst_24 = arith.constant 1.000000e+00 : f32
    %42 = vector.broadcast %cst_24 : f32 to vector<1x64xf32>
    %43 = arith.divf %42, %41 : vector<1x64xf32>
    %44 = vector.broadcast %43 : vector<1x64xf32> to vector<5x64xf32>
    %45 = arith.mulf %39, %44 : vector<5x64xf32>
    %c0_25 = arith.constant 0 : index
    %c0_26 = arith.constant 0 : index
    %c0_27 = arith.constant 0 : index
    %46 = vector.load %arg7[%c0_25, %c0_26, %c0_27] : memref<1x5x64xf32, #tpu.memory_space<vmem>>, vector<1x5x64xf32>
    %47 = vector.shape_cast %46 : vector<1x5x64xf32> to vector<5x64xf32>
    %48 = vector.shape_cast %45 : vector<5x64xf32> to vector<1x5x64xf32>
    tpu.vector_store %arg7[%c0_25, %c0_26, %c0_27], %48 {strides = array<i32>} : memref<1x5x64xf32, #tpu.memory_space<vmem>>, vector<1x5x64xf32>,
    return
  }
  func.func @transform_0(%arg0: i32, %arg1: i32) -> (i32, i32, i32) {
    %c0_i32 = arith.constant 0 : i32
    %c0_i32_0 = arith.constant 0 : i32
    return %arg0, %c0_i32, %arg1 : i32, i32, i32
  }
  func.func @transform_1(%arg0: i32, %arg1: i32) -> (i32, i32, i32, i32) {
    %c0_i32 = arith.constant 0 : i32
    %c0_i32_0 = arith.constant 0 : i32
    %c0_i32_1 = arith.constant 0 : i32
    %c0_i32_2 = arith.constant 0 : i32
    return %arg0, %c0_i32, %c0_i32_0, %c0_i32_1 : i32, i32, i32, i32
  }
  func.func @transform_2(%arg0: i32, %arg1: i32) -> (i32, i32, i32, i32) {
    %c0_i32 = arith.constant 0 : i32
    %c0_i32_0 = arith.constant 0 : i32
    %c0_i32_1 = arith.constant 0 : i32
    %c0_i32_2 = arith.constant 0 : i32
    return %arg0, %c0_i32, %c0_i32_0, %c0_i32_1 : i32, i32, i32, i32
  }
  func.func @transform_3(%arg0: i32, %arg1: i32) -> (i32, i32) {
    %c0_i32 = arith.constant 0 : i32
    %c0_i32_0 = arith.constant 0 : i32
    %c0_i32_1 = arith.constant 0 : i32
    return %c0_i32, %c0_i32_0 : i32, i32
  }
  func.func @transform_4(%arg0: i32, %arg1: i32) -> (i32, i32) {
    %c0_i32 = arith.constant 0 : i32
    %c0_i32_0 = arith.constant 0 : i32
    %c0_i32_1 = arith.constant 0 : i32
    return %c0_i32, %c0_i32_0 : i32, i32
  }
  func.func @transform_5(%arg0: i32, %arg1: i32) -> (i32, i32, i32) {
    %c0_i32 = arith.constant 0 : i32
    %c0_i32_0 = arith.constant 0 : i32
    return %arg0, %c0_i32, %arg1 : i32, i32, i32
  }
}

</mosaic_0001>

<llo_original>
// kernel: mul.11
$region0: #{mul.11}
  %s0 = inlined_call_operand.vmem [shape: f32[2,4,8], index: 0, kind: input, shape index: {}]
  %s1 = inlined_call_operand.vmem [shape: f32[2,32], index: 1, kind: output, shape index: {}]
  $region1: #{mul.11} parent=0
    #allocation0 [shape = 'u8[4096]{0}', space=vmem, size = 0x1000, scoped, tag = 'scoped mem for output reshape']
    #allocation1 [shape = 'u8[8192]{0}', space=vmem, size = 0x2000, scoped, tag = 'scoped mem for input reshape']
    %s3 = sshll.u32 1, 4
    %s4 = ssub.s32 %s3, 1
    %s5 = scalar_lea.vmem %s0, 4
    %v6 = vld [vmem:[%s5] sm:%s4]
    %s7 = scalar_lea.vmem [#allocation1], 8
    %8 = vst [vmem:[%s7] sm:%s4] %v6
    %v9 = vld [vmem:[%s0] sm:%s4]
    %10 = vst [vmem:[#allocation1] sm:%s4] %v9
    %s11 = smov 3
    %v12 = vld [vmem:[#allocation1] ss:$8 sm:%s11]
    %vm13 = vcmask 64512
    %14 = vst.msk [vmem:[#allocation0] sm:$0x3] %vm13, %v12
    %s15 = scalar_lea.vmem [#allocation1], 3
    %s16 = smov 3
    %v17 = vld [vmem:[%s15] ss:$8 sm:%s16]
    %18 = vrot.lane.b32.xlu0 %v17, 24
    %v19 = vpop.permute.xlu0 %18
    %vm20 = vcmask 261312
    %21 = vst.msk [vmem:[#allocation0] sm:$0x3] %vm20, %v19
    %s22 = scalar_lea.vmem [#allocation1], 2
    %s23 = smov 3
    %v24 = vld [vmem:[%s22] ss:$8 sm:%s23]
    %25 = vrot.lane.b32.xlu0 %v24, 16
    %v26 = vpop.permute.xlu0 %25
    %vm27 = vcmask 195712
    %28 = vst.msk [vmem:[#allocation0] sm:$0x3] %vm27, %v26
    %s29 = scalar_lea.vmem [#allocation1], 1
    %s30 = smov 3
    %v31 = vld [vmem:[%s29] ss:$8 sm:%s30]
    %32 = vrot.lane.b32.xlu0 %v31, 8
    %v33 = vpop.permute.xlu0 %32
    %vm34 = vcmask 130112
    %35 = vst.msk [vmem:[#allocation0] sm:$0x3] %vm34, %v33
    %s37 = sshll.u32 1, 2
    %s38 = ssub.s32 %s37, 1
    %v40 = vld [vmem:[#allocation0] sm:%s38]
    %s41 = sshll.u32 1, 2
    %s42 = ssub.s32 %s41, 1
    %43 = vst [vmem:[%s1] sm:%s42] %v40

// kernel: prm_generator_forward.5
$region0: #{prm_generator_forward.5}
  #allocation0 [shape = 'u32[]', space=smem, size = 0x4, offset = 0x4, fixed_abs, tag = 'smem constant byte address 0x4 - core index']
  #allocation1 [shape = 'u32[144,128]{1,0:T(1,128)}', space=vmem, size = 0x12000, scoped, tag = 'internal scratch']
  %s0 = inlined_call_operand.vmem [shape: f32[2,32,64], index: 0, kind: input, shape index: {}]
  %s1 = inlined_call_operand.vmem [shape: bf16[2,4,32], index: 1, kind: input, shape index: {}]
  %s2 = inlined_call_operand.vmem [shape: f32[4,1], index: 2, kind: input, shape index: {}]
  %s3 = inlined_call_operand.vmem [shape: bf16[2,4,64], index: 3, kind: output, shape index: {0}]
  %s4 = inlined_call_operand.vmem [shape: f32[2,1,4,1], index: 4, kind: output, shape index: {1}]
  %s5 = inlined_call_operand.vmem [shape: f32[2,1,4,1], index: 5, kind: output, shape index: {2}]
  %6 = xla_tuple %s3, %s4, %s5
  %s7 = sld [smem:[#allocation0]]
  $region61: #{prm_generator_forward.5} parent=0
    _
  %s9 = ssub.s32 1, %s7
  %s10 = scalar_select 0, %s9, %s7
  loop: start=0, step=1, limit=4
  $region2: #{prm_generator_forward.5} parent=0 // loop_pre_header
    _
  $region3: #{prm_generator_forward.5} parent=0 // loop_header
    %s12 = sphi 0, %s16
    %p13 = scmp.ge.s32.totalorder %s12, 4
    %s19 = sphi 0, %s31
    %s20 = sphi 0, %s27
    %s21 = sphi 0, %s19
    %s22 = sphi 0, %s20
    %s23 = sphi 0, %s21
    %s24 = sphi 0, %s22
    %s36 = sphi 0, %s38
    %s39 = sphi 0, %s36
    %s40 = sphi 0, %s39
    %s56 = sphi 0, %s40
    %s62 = sphi 0, %s64
    %s65 = sphi 0, %s62
    %s66 = sphi 0, %s65
    %s82 = sphi 0, %s66
    %s86 = sphi 0, %s86
    %s88 = sphi 0, %s86
    %s89 = sphi 0, %s88
    %s103 = sphi 0, %s89
    %s111 = sphi 0, %s113
    %s114 = sphi 0, %s111
    %s115 = sphi 0, %s114
    %s131 = sphi 0, %s115
    %s139 = sphi 0, %s141
    %s142 = sphi 0, %s139
    %s143 = sphi 0, %s142
    %s159 = sphi 0, %s143
    %s167 = sphi 0, %s169
    %s170 = sphi 0, %s167
    %s171 = sphi 0, %s170
    %s187 = sphi 0, %s171
  $region4: #{prm_generator_forward.5} parent=0 // loop_header_branch
    %15 = sbr.rel (%p13) target = $region8
  $region5: #{prm_generator_forward.5} parent=0 // loop_body
    %s17 = ssub.s32 %s12, 1
    %s18 = ssub.s32 %s12, 2
    %s25 = sadd.s32 1, %s20
    %p26 = scmp.ge.s32.totalorder %s25, 1
    %s27 = scalar_select %p26, 0, %s25
    %s28 = sadd.s32 1, %s19
    %s29 = scalar_select %p26, %s28, %s19
    %p30 = scmp.ge.s32.totalorder %s29, 2
    %s31 = scalar_select %p30, 0, %s29
    %s32 = ssub.s32 %s19, %s31
    %s33 = ssub.s32 %s20, %s27
    %s34 = sor.u32 %s32, %s33
    %p35 = scmp.eq.s32.totalorder %s34, 0
    %s37 = sadd.s32 %s36, 1
    %s38 = scalar_select %p35, %s36, %s37
    %p41 = pneg %p35
    %p42 = scmp.eq.s32.totalorder %s12, 1
    %p43 = por %p41, %p42
    %p44 = scmp.ne.s32.totalorder %s36, %s39
    %p45 = scmp.eq.s32.totalorder %s12, 0
    %p46 = por %p44, %p45
    %p47 = scmp.ne.s32.totalorder %s36, %s39
    %p48 = scmp.eq.s32.totalorder %s17, 1
    %p49 = por %p47, %p48
    %p50 = scmp.ne.s32.totalorder %s39, %s40
    %p51 = scmp.eq.s32.totalorder %s17, 0
    %p52 = por %p50, %p51
    %p53 = scmp.ne.s32.totalorder %s39, %s40
    %p54 = scmp.eq.s32.totalorder %s18, 1
    %p55 = por %p53, %p54
    %p57 = scmp.ne.s32.totalorder %s40, %s56
    %p58 = scmp.eq.s32.totalorder %s18, 0
    %p59 = por %p57, %p58
    %s60 = ssub.s32 %s19, %s31
    %p61 = scmp.eq.s32.totalorder %s60, 0
    %s63 = sadd.s32 %s62, 1
    %s64 = scalar_select %p61, %s62, %s63
    %p67 = pneg %p61
    %p68 = scmp.eq.s32.totalorder %s12, 1
    %p69 = por %p67, %p68
    %p70 = scmp.ne.s32.totalorder %s62, %s65
    %p71 = scmp.eq.s32.totalorder %s12, 0
    %p72 = por %p70, %p71
    %p73 = scmp.ne.s32.totalorder %s62, %s65
    %p74 = scmp.eq.s32.totalorder %s17, 1
    %p75 = por %p73, %p74
    %p76 = scmp.ne.s32.totalorder %s65, %s66
    %p77 = scmp.eq.s32.totalorder %s17, 0
    %p78 = por %p76, %p77
    %p79 = scmp.ne.s32.totalorder %s65, %s66
    %p80 = scmp.eq.s32.totalorder %s18, 1
    %p81 = por %p79, %p80
    %p83 = scmp.ne.s32.totalorder %s66, %s82
    %p84 = scmp.eq.s32.totalorder %s18, 0
    %p85 = por %p83, %p84
    %s87 = sadd.s32 %s86, 1
    %p90 = scmp.eq.s32.totalorder %s12, 1
    %p91 = scmp.ne.s32.totalorder %s86, %s88
    %p92 = scmp.eq.s32.totalorder %s12, 0
    %p93 = por %p91, %p92
    %p94 = scmp.ne.s32.totalorder %s86, %s88
    %p95 = scmp.eq.s32.totalorder %s17, 1
    %p96 = por %p94, %p95
    %p97 = scmp.ne.s32.totalorder %s88, %s89
    %p98 = scmp.eq.s32.totalorder %s17, 0
    %p99 = por %p97, %p98
    %p100 = scmp.ne.s32.totalorder %s88, %s89
    %p101 = scmp.eq.s32.totalorder %s18, 1
    %p102 = por %p100, %p101
    %p104 = scmp.ne.s32.totalorder %s89, %s103
    %p105 = scmp.eq.s32.totalorder %s18, 0
    %p106 = por %p104, %p105
    %s107 = ssub.s32 %s19, %s31
    %s108 = ssub.s32 %s20, %s27
    %s109 = sor.u32 %s107, %s108
    %p110 = scmp.eq.s32.totalorder %s109, 0
    %s112 = sadd.s32 %s111, 1
    %s113 = scalar_select %p110, %s111, %s112
    %p116 = pneg %p110
    %p117 = scmp.eq.s32.totalorder %s12, 1
    %p118 = por %p116, %p117
    %p119 = scmp.ne.s32.totalorder %s111, %s114
    %p120 = scmp.eq.s32.totalorder %s12, 0
    %p121 = por %p119, %p120
    %p122 = scmp.ne.s32.totalorder %s111, %s114
    %p123 = scmp.eq.s32.totalorder %s17, 1
    %p124 = por %p122, %p123
    %p125 = scmp.ne.s32.totalorder %s114, %s115
    %p126 = scmp.eq.s32.totalorder %s17, 0
    %p127 = por %p125, %p126
    %p128 = scmp.ne.s32.totalorder %s114, %s115
    %p129 = scmp.eq.s32.totalorder %s18, 1
    %p130 = por %p128, %p129
    %p132 = scmp.ne.s32.totalorder %s115, %s131
    %p133 = scmp.eq.s32.totalorder %s18, 0
    %p134 = por %p132, %p133
    %s135 = ssub.s32 %s19, %s31
    %s136 = ssub.s32 %s20, %s27
    %s137 = sor.u32 %s135, %s136
    %p138 = scmp.eq.s32.totalorder %s137, 0
    %s140 = sadd.s32 %s139, 1
    %s141 = scalar_select %p138, %s139, %s140
    %p144 = pneg %p138
    %p145 = scmp.eq.s32.totalorder %s12, 1
    %p146 = por %p144, %p145
    %p147 = scmp.ne.s32.totalorder %s139, %s142
    %p148 = scmp.eq.s32.totalorder %s12, 0
    %p149 = por %p147, %p148
    %p150 = scmp.ne.s32.totalorder %s139, %s142
    %p151 = scmp.eq.s32.totalorder %s17, 1
    %p152 = por %p150, %p151
    %p153 = scmp.ne.s32.totalorder %s142, %s143
    %p154 = scmp.eq.s32.totalorder %s17, 0
    %p155 = por %p153, %p154
    %p156 = scmp.ne.s32.totalorder %s142, %s143
    %p157 = scmp.eq.s32.totalorder %s18, 1
    %p158 = por %p156, %p157
    %p160 = scmp.ne.s32.totalorder %s143, %s159
    %p161 = scmp.eq.s32.totalorder %s18, 0
    %p162 = por %p160, %p161
    %s163 = ssub.s32 %s19, %s31
    %s164 = ssub.s32 %s20, %s27
    %s165 = sor.u32 %s163, %s164
    %p166 = scmp.eq.s32.totalorder %s165, 0
    %s168 = sadd.s32 %s167, 1
    %s169 = scalar_select %p166, %s167, %s168
    %p172 = pneg %p166
    %p173 = scmp.eq.s32.totalorder %s12, 1
    %p174 = por %p172, %p173
    %p175 = scmp.ne.s32.totalorder %s167, %s170
    %p176 = scmp.eq.s32.totalorder %s12, 0
    %p177 = por %p175, %p176
    %p178 = scmp.ne.s32.totalorder %s167, %s170
    %p179 = scmp.eq.s32.totalorder %s17, 1
    %p180 = por %p178, %p179
    %p181 = scmp.ne.s32.totalorder %s170, %s171
    %p182 = scmp.eq.s32.totalorder %s17, 0
    %p183 = por %p181, %p182
    %p184 = scmp.ne.s32.totalorder %s170, %s171
    %p185 = scmp.eq.s32.totalorder %s18, 1
    %p186 = por %p184, %p185
    %p188 = scmp.ne.s32.totalorder %s171, %s187
    %p189 = scmp.eq.s32.totalorder %s18, 0
    %p190 = por %p188, %p189
    %p191 = scmp.le.s32.totalorder 1, %s12
    %p192 = scmp.lt.s32.totalorder %s12, 3
    %p193 = pnand %p191, %p192
    %p194 = pneg %p193
    // Predicated region
    $region9: #{prm_generator_forward.5} parent=5 // pred_check
      _
    $region10: #{prm_generator_forward.5} parent=5 // pred_check_branch
      %196 = sbr.rel (%p193) target = $region12
    $region11: #{prm_generator_forward.5} parent=5 // pred_region
      %s197 = ssub.s32 %s12, 1
      // Predicated region
      $region13: #{prm_generator_forward.5} parent=11 // pred_check
        %p198 = pneg %p99
      $region14: #{prm_generator_forward.5} parent=11 // pred_check_branch
        %200 = sbr.rel (%p198) target = $region16
      $region15: #{prm_generator_forward.5} parent=11 // pred_region
        _
      $region16: #{prm_generator_forward.5} parent=11 // pred_fallthru
        _
    $region12: #{prm_generator_forward.5} parent=5 // pred_fallthru
      _
    %p201 = scmp.lt.s32.totalorder %s12, 2
    // Predicated region
    $region17: #{prm_generator_forward.5} parent=5 // pred_check
      %p202 = pneg %p201
    $region18: #{prm_generator_forward.5} parent=5 // pred_check_branch
      %204 = sbr.rel (%p202) target = $region20
    $region19: #{prm_generator_forward.5} parent=5 // pred_region
      // Predicated region
      $region21: #{prm_generator_forward.5} parent=19 // pred_check
        %p205 = pneg %p46
      $region22: #{prm_generator_forward.5} parent=19 // pred_check_branch
        %207 = sbr.rel (%p205) target = $region24
      $region23: #{prm_generator_forward.5} parent=19 // pred_region
        %p208 = scmp.lt.s32.totalorder %s19, 1
        %s209 = scalar_select %p208, %s19, 1
        %p210 = scmp.lt.s32.totalorder %s20, 0
        %s211 = scalar_select %p210, %s20, 0
        %s212 = smul.addr %s209, 4
        %s213 = sadd.s32 %s211, %s212
        %s214 = smul.addr %s213, 8
        %s215 = scalar_lea.vmem %s0, %s214
      $region24: #{prm_generator_forward.5} parent=19 // pred_fallthru
        _
      // Predicated region
      $region25: #{prm_generator_forward.5} parent=19 // pred_check
        %p216 = pneg %p72
      $region26: #{prm_generator_forward.5} parent=19 // pred_check_branch
        %218 = sbr.rel (%p216) target = $region28
      $region27: #{prm_generator_forward.5} parent=19 // pred_region
        %p219 = scmp.lt.s32.totalorder %s19, 1
        %s220 = scalar_select %p219, %s19, 1
        %s221 = smul.addr %s220, 2
        %s222 = scalar_lea.vmem %s1, %s221
      $region28: #{prm_generator_forward.5} parent=19 // pred_fallthru
        _
    $region20: #{prm_generator_forward.5} parent=5 // pred_fallthru
      _
    %p223 = scmp.le.s32.totalorder 1, %s12
    %p224 = scmp.lt.s32.totalorder %s12, 3
    %p225 = pnand %p223, %p224
    %p226 = pneg %p225
    // Predicated region
    $region29: #{prm_generator_forward.5} parent=5 // pred_check
      _
    $region30: #{prm_generator_forward.5} parent=5 // pred_check_branch
      %228 = sbr.rel (%p225) target = $region32
    $region31: #{prm_generator_forward.5} parent=5 // pred_region
      %s229 = ssub.s32 %s12, 1
      %p230 = scmp.lt.s32.totalorder %s21, 1
      %s231 = scalar_select %p230, %s21, 1
      %p232 = scmp.lt.s32.totalorder %s22, 0
      %s233 = scalar_select %p232, %s22, 0
      %s234 = smul.addr %s231, 4
      %s235 = sadd.s32 %s233, %s234
      %s236 = smul.addr %s235, 8
      %s237 = scalar_lea.vmem %s0, %s236
      %p238 = pneg %p52
      %p239 = pneg %p49
      %p240 = scmp.lt.s32.totalorder %s21, 1
      %s241 = scalar_select %p240, %s21, 1
      %s242 = smul.addr %s241, 2
      %s243 = scalar_lea.vmem %s1, %s242
      %p244 = pneg %p78
      %p245 = pneg %p75
      %p246 = pneg %p99
      %p247 = pneg %p96
      %p248 = pneg %p127
      %p249 = pneg %p124
      %p250 = scmp.lt.s32.totalorder %s21, 1
      %s251 = scalar_select %p250, %s21, 1
      %p252 = scmp.lt.s32.totalorder %s22, 0
      %s253 = scalar_select %p252, %s22, 0
      %s254 = sadd.s32 %s253, %s251
      %s255 = smul.addr %s254, 2
      %s256 = scalar_lea.vmem %s3, %s255
      %p257 = pneg %p155
      %p258 = pneg %p152
      %p259 = scmp.lt.s32.totalorder %s21, 1
      %s260 = scalar_select %p259, %s21, 1
      %p261 = scmp.lt.s32.totalorder %s22, 0
      %s262 = scalar_select %p261, %s22, 0
      %s263 = sadd.s32 %s262, %s260
      %s264 = smul.addr %s263, 4
      %s265 = scalar_lea.vmem %s4, %s264
      %p266 = pneg %p183
      %p267 = pneg %p180
      %p268 = scmp.lt.s32.totalorder %s21, 1
      %s269 = scalar_select %p268, %s21, 1
      %p270 = scmp.lt.s32.totalorder %s22, 0
      %s271 = scalar_select %p270, %s22, 0
      %s272 = sadd.s32 %s271, %s269
      %s273 = smul.addr %s272, 4
      %s274 = scalar_lea.vmem %s5, %s273
      %p275 = scmp.lt.s32.totalorder %s21, 1
      %s276 = scalar_select %p275, %s21, 1
      %p277 = scmp.lt.s32.totalorder %s22, 0
      %s278 = scalar_select %p277, %s22, 0
      %s279 = smul.addr %s276, 4
      %s280 = sadd.s32 %s278, %s279
      %s281 = smul.addr %s280, 8
      %s282 = scalar_lea.vmem %s0, %s281
      %p283 = scmp.lt.s32.totalorder %s21, 1
      %s284 = scalar_select %p283, %s21, 1
      %s285 = smul.addr %s284, 2
      %s286 = scalar_lea.vmem %s1, %s285
      %p287 = scmp.lt.s32.totalorder %s21, 1
      %s288 = scalar_select %p287, %s21, 1
      %p289 = scmp.lt.s32.totalorder %s22, 0
      %s290 = scalar_select %p289, %s22, 0
      %s291 = sadd.s32 %s290, %s288
      %s292 = smul.addr %s291, 2
      %s293 = scalar_lea.vmem %s3, %s292
      %p294 = scmp.lt.s32.totalorder %s21, 1
      %s295 = scalar_select %p294, %s21, 1
      %p296 = scmp.lt.s32.totalorder %s22, 0
      %s297 = scalar_select %p296, %s22, 0
      %s298 = sadd.s32 %s297, %s295
      %s299 = smul.addr %s298, 4
      %s300 = scalar_lea.vmem %s4, %s299
      %p301 = scmp.lt.s32.totalorder %s21, 1
      %s302 = scalar_select %p301, %s21, 1
      %p303 = scmp.lt.s32.totalorder %s22, 0
      %s304 = scalar_select %p303, %s22, 0
      %s305 = sadd.s32 %s304, %s302
      %s306 = smul.addr %s305, 4
      %s307 = scalar_lea.vmem %s5, %s306
      %v309 = vld [vmem:[%s286] sm:$0x3]
      %v310 = vld [vmem:[%s282] sm:$0xff]
      %v311 = vld [vmem:[%s282 + $0x8] sm:$0xff]
      %v312 = vld [vmem:[%s282 + $0x10] sm:$0xff]
      %v313 = vld [vmem:[%s282 + $0x18] sm:$0xff]
      %v314 = vpack.c.bf16 %v311, %v310
      %v315 = vpack.c.bf16 %v313, %v312
      %v316 = vld [vmem:[%s2] sm:$0xf]
      %318 = vset.pattern.permute.xlu0 0
      %319 = vperm.xlu0 %318, %v316
      %v320 = vpop.permute.xlu0 %319
      %vm322 = vcmask 261120
      %v324 = vsel %vm322, %v309, 0
      %326 = vmatprep.subr.bf16.mxu0 0
      %327 = vmatpush1.bf16.msra.mxu0 0
      %328 = vmatprep.subr.bf16.mxu0 0
      %329 = vmatpush1.bf16.msra.mxu0 0
      %330 = vmatprep.subr.bf16.mxu0 0
      %331 = vmatpush1.bf16.msra.mxu0 0
      %332 = vmatprep.subr.bf16.mxu0 0
      %333 = vmatpush1.bf16.msra.mxu0 0
      %334 = vmatprep.subr.bf16.mxu0 0
      %335 = vmatpush1.bf16.msra.mxu0 0
      %336 = vmatprep.subr.bf16.mxu0 0
      %337 = vmatpush1.bf16.msra.mxu0 0
      %338 = vmatprep.subr.bf16.mxu0 0
      %339 = vmatpush1.bf16.msra.mxu0 %v315
      %340 = vmatprep.subr.bf16.mxu0 0
      %341 = vmatpush1.bf16.msra.mxu0 %v314
      %342 = vmatprep.subr.bf16.mxu0 0
      %343 = vmatpush2.bf16.msra.mxu0 0
      %344 = vmatprep.subr.bf16.mxu0 0
      %345 = vmatpush2.bf16.msra.mxu0 0
      %346 = vmatprep.subr.bf16.mxu0 0
      %347 = vmatpush2.bf16.msra.mxu0 0
      %348 = vmatprep.subr.bf16.mxu0 0
      %349 = vmatpush2.bf16.msra.mxu0 0
      %350 = vmatprep.subr.bf16.mxu0 0
      %351 = vmatpush2.bf16.msra.mxu0 0
      %352 = vmatprep.subr.bf16.mxu0 0
      %353 = vmatpush2.bf16.msra.mxu0 0
      %354 = vmatprep.subr.bf16.mxu0 0
      %355 = vmatpush2.bf16.msra.mxu0 0
      %356 = vmatprep.subr.bf16.mxu0 0
      %357 = vmatpush2.bf16.msra.mxu0 0
      %358 = vmatprep.mubr.bf16.mxu0 0
      %359 = vmatmul.mubr.bf16.gmra.mxu0 %v324
      %v360 = vpop.f32.mrf.mxu0
      %v361 = vadd.f32 %v320, %v360
      %v362 = vpop.f32.mrf.mxu0
      %v363 = vpop.f32.mrf.mxu0
      %v364 = vpop.f32.mrf.mxu0
      %365 = vdwg.mxu0
      %v366 = vpack.c.bf16 %v361, %v361
      %vm367 = vcmask 517120
      %368 = vst.msk [vmem:[%s293] sm:$0x3] %vm367, %v366
      %v369 = vunpack.c.l.bf16 %v366
      %vm370 = vcmask 519168
      %v371 = vsel %vm370, %v369, 0.0
      %372 = vadd.xlane.f32.xlu0 %v371
      %v373 = vpop.xlane.xlu0 %372
      %vm374 = vcmask 3072
      %375 = vst.msk [vmem:[%s300] sm:$0xf] %vm374, %v373
      %v376 = vmul.f32 %v369, %v369
      %v377 = vsel %vm370, %v376, 0.0
      %378 = vadd.xlane.f32.xlu0 %v377
      %v379 = vpop.xlane.xlu0 %378
      %380 = vst.msk [vmem:[%s307] sm:$0xf] %vm374, %v379
      %p381 = scmp.lt.s32.totalorder %s21, 1
      %s382 = scalar_select %p381, %s21, 1
      %p383 = scmp.lt.s32.totalorder %s22, 0
      %s384 = scalar_select %p383, %s22, 0
      %s385 = sadd.s32 %s384, %s382
      %s386 = smul.addr %s385, 2
      %s387 = scalar_lea.vmem %s3, %s386
      %p388 = scmp.lt.s32.totalorder %s21, 1
      %s389 = scalar_select %p388, %s21, 1
      %p390 = scmp.lt.s32.totalorder %s22, 0
      %s391 = scalar_select %p390, %s22, 0
      %s392 = sadd.s32 %s391, %s389
      %s393 = smul.addr %s392, 4
      %s394 = scalar_lea.vmem %s4, %s393
      %p395 = scmp.lt.s32.totalorder %s21, 1
      %s396 = scalar_select %p395, %s21, 1
      %p397 = scmp.lt.s32.totalorder %s22, 0
      %s398 = scalar_select %p397, %s22, 0
      %s399 = sadd.s32 %s398, %s396
      %s400 = smul.addr %s399, 4
      %s401 = scalar_lea.vmem %s5, %s400
      // Predicated region
      $region33: #{prm_generator_forward.5} parent=31 // pred_check
        %p402 = pneg %p124
      $region34: #{prm_generator_forward.5} parent=31 // pred_check_branch
        %404 = sbr.rel (%p402) target = $region36
      $region35: #{prm_generator_forward.5} parent=31 // pred_region
        _
      $region36: #{prm_generator_forward.5} parent=31 // pred_fallthru
        _
      // Predicated region
      $region37: #{prm_generator_forward.5} parent=31 // pred_check
        %p405 = pneg %p152
      $region38: #{prm_generator_forward.5} parent=31 // pred_check_branch
        %407 = sbr.rel (%p405) target = $region40
      $region39: #{prm_generator_forward.5} parent=31 // pred_region
        _
      $region40: #{prm_generator_forward.5} parent=31 // pred_fallthru
        _
      // Predicated region
      $region41: #{prm_generator_forward.5} parent=31 // pred_check
        %p408 = pneg %p180
      $region42: #{prm_generator_forward.5} parent=31 // pred_check_branch
        %410 = sbr.rel (%p408) target = $region44
      $region43: #{prm_generator_forward.5} parent=31 // pred_region
        _
      $region44: #{prm_generator_forward.5} parent=31 // pred_fallthru
        _
    $region32: #{prm_generator_forward.5} parent=5 // pred_fallthru
      _
    %p411 = scmp.le.s32.totalorder 2, %s12
    // Predicated region
    $region45: #{prm_generator_forward.5} parent=5 // pred_check
      %p412 = pneg %p411
    $region46: #{prm_generator_forward.5} parent=5 // pred_check_branch
      %414 = sbr.rel (%p412) target = $region48
    $region47: #{prm_generator_forward.5} parent=5 // pred_region
      %s415 = ssub.s32 %s12, 2
      // Predicated region
      $region49: #{prm_generator_forward.5} parent=47 // pred_check
        %p416 = pneg %p130
      $region50: #{prm_generator_forward.5} parent=47 // pred_check_branch
        %418 = sbr.rel (%p416) target = $region52
      $region51: #{prm_generator_forward.5} parent=47 // pred_region
        %p419 = scmp.lt.s32.totalorder %s23, 1
        %s420 = scalar_select %p419, %s23, 1
        %p421 = scmp.lt.s32.totalorder %s24, 0
        %s422 = scalar_select %p421, %s24, 0
        %s423 = sadd.s32 %s422, %s420
        %s424 = smul.addr %s423, 2
        %s425 = scalar_lea.vmem %s3, %s424
      $region52: #{prm_generator_forward.5} parent=47 // pred_fallthru
        _
      // Predicated region
      $region53: #{prm_generator_forward.5} parent=47 // pred_check
        %p426 = pneg %p158
      $region54: #{prm_generator_forward.5} parent=47 // pred_check_branch
        %428 = sbr.rel (%p426) target = $region56
      $region55: #{prm_generator_forward.5} parent=47 // pred_region
        %p429 = scmp.lt.s32.totalorder %s23, 1
        %s430 = scalar_select %p429, %s23, 1
        %p431 = scmp.lt.s32.totalorder %s24, 0
        %s432 = scalar_select %p431, %s24, 0
        %s433 = sadd.s32 %s432, %s430
        %s434 = smul.addr %s433, 4
        %s435 = scalar_lea.vmem %s4, %s434
      $region56: #{prm_generator_forward.5} parent=47 // pred_fallthru
        _
      // Predicated region
      $region57: #{prm_generator_forward.5} parent=47 // pred_check
        %p436 = pneg %p186
      $region58: #{prm_generator_forward.5} parent=47 // pred_check_branch
        %438 = sbr.rel (%p436) target = $region60
      $region59: #{prm_generator_forward.5} parent=47 // pred_region
        %p439 = scmp.lt.s32.totalorder %s23, 1
        %s440 = scalar_select %p439, %s23, 1
        %p441 = scmp.lt.s32.totalorder %s24, 0
        %s442 = scalar_select %p441, %s24, 0
        %s443 = sadd.s32 %s442, %s440
        %s444 = smul.addr %s443, 4
        %s445 = scalar_lea.vmem %s5, %s444
      $region60: #{prm_generator_forward.5} parent=47 // pred_fallthru
        _
    $region48: #{prm_generator_forward.5} parent=5 // pred_fallthru
      _
  $region6: #{prm_generator_forward.5} parent=0 // loop_footer
    %s16 = sadd.s32 1, %s12
  $region7: #{prm_generator_forward.5} parent=0 // loop_footer_branch
    %11 = sbr.rel target = $region3
  $region8: #{prm_generator_forward.5} parent=0 // loop_exit
    _

// kernel: prm_generator_forward.6
$region0: #{prm_generator_forward.6}
  #allocation0 [shape = 'u32[]', space=smem, size = 0x4, offset = 0x4, fixed_abs, tag = 'smem constant byte address 0x4 - core index']
  #allocation1 [shape = 'u32[144,128]{1,0:T(1,128)}', space=vmem, size = 0x12000, scoped, tag = 'internal scratch']
  %s0 = inlined_call_operand.vmem [shape: bf16[2,6,4,38], index: 0, kind: input, shape index: {}]
  %s1 = inlined_call_operand.vmem [shape: f32[2,1,4,1], index: 1, kind: input, shape index: {}]
  %s2 = inlined_call_operand.vmem [shape: f32[2,1,4,1], index: 2, kind: input, shape index: {}]
  %s3 = inlined_call_operand.vmem [shape: bf16[3,4,36], index: 3, kind: input, shape index: {}]
  %s4 = inlined_call_operand.vmem [shape: f32[4,1], index: 4, kind: input, shape index: {}]
  %s5 = inlined_call_operand.vmem [shape: bf16[2,4,4,24], index: 5, kind: output, shape index: {0}]
  %s6 = inlined_call_operand.vmem [shape: f32[2,1,4,1], index: 6, kind: output, shape index: {1}]
  %s7 = inlined_call_operand.vmem [shape: f32[2,1,4,1], index: 7, kind: output, shape index: {2}]
  %8 = xla_tuple %s5, %s6, %s7
  %s9 = sld [smem:[#allocation0]]
  $region69: #{prm_generator_forward.6} parent=0
    _
  %s11 = ssub.s32 1, %s9
  %s12 = scalar_select 0, %s11, %s9
  loop: start=0, step=1, limit=4
  $region2: #{prm_generator_forward.6} parent=0 // loop_pre_header
    _
  $region3: #{prm_generator_forward.6} parent=0 // loop_header
    %s14 = sphi 0, %s18
    %p15 = scmp.ge.s32.totalorder %s14, 4
    %s21 = sphi 0, %s33
    %s22 = sphi 0, %s29
    %s23 = sphi 0, %s21
    %s24 = sphi 0, %s22
    %s25 = sphi 0, %s23
    %s26 = sphi 0, %s24
    %s38 = sphi 0, %s40
    %s41 = sphi 0, %s38
    %s42 = sphi 0, %s41
    %s58 = sphi 0, %s42
    %s64 = sphi 0, %s66
    %s67 = sphi 0, %s64
    %s68 = sphi 0, %s67
    %s84 = sphi 0, %s68
    %s90 = sphi 0, %s92
    %s93 = sphi 0, %s90
    %s94 = sphi 0, %s93
    %s110 = sphi 0, %s94
    %s114 = sphi 0, %s114
    %s116 = sphi 0, %s114
    %s117 = sphi 0, %s116
    %s131 = sphi 0, %s117
    %s135 = sphi 0, %s135
    %s137 = sphi 0, %s135
    %s138 = sphi 0, %s137
    %s152 = sphi 0, %s138
    %s160 = sphi 0, %s162
    %s163 = sphi 0, %s160
    %s164 = sphi 0, %s163
    %s180 = sphi 0, %s164
    %s188 = sphi 0, %s190
    %s191 = sphi 0, %s188
    %s192 = sphi 0, %s191
    %s208 = sphi 0, %s192
    %s216 = sphi 0, %s218
    %s219 = sphi 0, %s216
    %s220 = sphi 0, %s219
    %s236 = sphi 0, %s220
  $region4: #{prm_generator_forward.6} parent=0 // loop_header_branch
    %17 = sbr.rel (%p15) target = $region8
  $region5: #{prm_generator_forward.6} parent=0 // loop_body
    %s19 = ssub.s32 %s14, 1
    %s20 = ssub.s32 %s14, 2
    %s27 = sadd.s32 1, %s22
    %p28 = scmp.ge.s32.totalorder %s27, 1
    %s29 = scalar_select %p28, 0, %s27
    %s30 = sadd.s32 1, %s21
    %s31 = scalar_select %p28, %s30, %s21
    %p32 = scmp.ge.s32.totalorder %s31, 2
    %s33 = scalar_select %p32, 0, %s31
    %s34 = sadd.s32 %s21, %s22
    %s35 = sadd.s32 %s33, %s29
    %s36 = ssub.s32 %s34, %s35
    %p37 = scmp.eq.s32.totalorder %s36, 0
    %s39 = sadd.s32 %s38, 1
    %s40 = scalar_select %p37, %s38, %s39
    %p43 = pneg %p37
    %p44 = scmp.eq.s32.totalorder %s14, 1
    %p45 = por %p43, %p44
    %p46 = scmp.ne.s32.totalorder %s38, %s41
    %p47 = scmp.eq.s32.totalorder %s14, 0
    %p48 = por %p46, %p47
    %p49 = scmp.ne.s32.totalorder %s38, %s41
    %p50 = scmp.eq.s32.totalorder %s19, 1
    %p51 = por %p49, %p50
    %p52 = scmp.ne.s32.totalorder %s41, %s42
    %p53 = scmp.eq.s32.totalorder %s19, 0
    %p54 = por %p52, %p53
    %p55 = scmp.ne.s32.totalorder %s41, %s42
    %p56 = scmp.eq.s32.totalorder %s20, 1
    %p57 = por %p55, %p56
    %p59 = scmp.ne.s32.totalorder %s42, %s58
    %p60 = scmp.eq.s32.totalorder %s20, 0
    %p61 = por %p59, %p60
    %s62 = ssub.s32 %s21, %s33
    %p63 = scmp.eq.s32.totalorder %s62, 0
    %s65 = sadd.s32 %s64, 1
    %s66 = scalar_select %p63, %s64, %s65
    %p69 = pneg %p63
    %p70 = scmp.eq.s32.totalorder %s14, 1
    %p71 = por %p69, %p70
    %p72 = scmp.ne.s32.totalorder %s64, %s67
    %p73 = scmp.eq.s32.totalorder %s14, 0
    %p74 = por %p72, %p73
    %p75 = scmp.ne.s32.totalorder %s64, %s67
    %p76 = scmp.eq.s32.totalorder %s19, 1
    %p77 = por %p75, %p76
    %p78 = scmp.ne.s32.totalorder %s67, %s68
    %p79 = scmp.eq.s32.totalorder %s19, 0
    %p80 = por %p78, %p79
    %p81 = scmp.ne.s32.totalorder %s67, %s68
    %p82 = scmp.eq.s32.totalorder %s20, 1
    %p83 = por %p81, %p82
    %p85 = scmp.ne.s32.totalorder %s68, %s84
    %p86 = scmp.eq.s32.totalorder %s20, 0
    %p87 = por %p85, %p86
    %s88 = ssub.s32 %s21, %s33
    %p89 = scmp.eq.s32.totalorder %s88, 0
    %s91 = sadd.s32 %s90, 1
    %s92 = scalar_select %p89, %s90, %s91
    %p95 = pneg %p89
    %p96 = scmp.eq.s32.totalorder %s14, 1
    %p97 = por %p95, %p96
    %p98 = scmp.ne.s32.totalorder %s90, %s93
    %p99 = scmp.eq.s32.totalorder %s14, 0
    %p100 = por %p98, %p99
    %p101 = scmp.ne.s32.totalorder %s90, %s93
    %p102 = scmp.eq.s32.totalorder %s19, 1
    %p103 = por %p101, %p102
    %p104 = scmp.ne.s32.totalorder %s93, %s94
    %p105 = scmp.eq.s32.totalorder %s19, 0
    %p106 = por %p104, %p105
    %p107 = scmp.ne.s32.totalorder %s93, %s94
    %p108 = scmp.eq.s32.totalorder %s20, 1
    %p109 = por %p107, %p108
    %p111 = scmp.ne.s32.totalorder %s94, %s110
    %p112 = scmp.eq.s32.totalorder %s20, 0
    %p113 = por %p111, %p112
    %s115 = sadd.s32 %s114, 1
    %p118 = scmp.eq.s32.totalorder %s14, 1
    %p119 = scmp.ne.s32.totalorder %s114, %s116
    %p120 = scmp.eq.s32.totalorder %s14, 0
    %p121 = por %p119, %p120
    %p122 = scmp.ne.s32.totalorder %s114, %s116
    %p123 = scmp.eq.s32.totalorder %s19, 1
    %p124 = por %p122, %p123
    %p125 = scmp.ne.s32.totalorder %s116, %s117
    %p126 = scmp.eq.s32.totalorder %s19, 0
    %p127 = por %p125, %p126
    %p128 = scmp.ne.s32.totalorder %s116, %s117
    %p129 = scmp.eq.s32.totalorder %s20, 1
    %p130 = por %p128, %p129
    %p132 = scmp.ne.s32.totalorder %s117, %s131
    %p133 = scmp.eq.s32.totalorder %s20, 0
    %p134 = por %p132, %p133
    %s136 = sadd.s32 %s135, 1
    %p139 = scmp.eq.s32.totalorder %s14, 1
    %p140 = scmp.ne.s32.totalorder %s135, %s137
    %p141 = scmp.eq.s32.totalorder %s14, 0
    %p142 = por %p140, %p141
    %p143 = scmp.ne.s32.totalorder %s135, %s137
    %p144 = scmp.eq.s32.totalorder %s19, 1
    %p145 = por %p143, %p144
    %p146 = scmp.ne.s32.totalorder %s137, %s138
    %p147 = scmp.eq.s32.totalorder %s19, 0
    %p148 = por %p146, %p147
    %p149 = scmp.ne.s32.totalorder %s137, %s138
    %p150 = scmp.eq.s32.totalorder %s20, 1
    %p151 = por %p149, %p150
    %p153 = scmp.ne.s32.totalorder %s138, %s152
    %p154 = scmp.eq.s32.totalorder %s20, 0
    %p155 = por %p153, %p154
    %s156 = ssub.s32 %s21, %s33
    %s157 = ssub.s32 %s22, %s29
    %s158 = sor.u32 %s156, %s157
    %p159 = scmp.eq.s32.totalorder %s158, 0
    %s161 = sadd.s32 %s160, 1
    %s162 = scalar_select %p159, %s160, %s161
    %p165 = pneg %p159
    %p166 = scmp.eq.s32.totalorder %s14, 1
    %p167 = por %p165, %p166
    %p168 = scmp.ne.s32.totalorder %s160, %s163
    %p169 = scmp.eq.s32.totalorder %s14, 0
    %p170 = por %p168, %p169
    %p171 = scmp.ne.s32.totalorder %s160, %s163
    %p172 = scmp.eq.s32.totalorder %s19, 1
    %p173 = por %p171, %p172
    %p174 = scmp.ne.s32.totalorder %s163, %s164
    %p175 = scmp.eq.s32.totalorder %s19, 0
    %p176 = por %p174, %p175
    %p177 = scmp.ne.s32.totalorder %s163, %s164
    %p178 = scmp.eq.s32.totalorder %s20, 1
    %p179 = por %p177, %p178
    %p181 = scmp.ne.s32.totalorder %s164, %s180
    %p182 = scmp.eq.s32.totalorder %s20, 0
    %p183 = por %p181, %p182
    %s184 = ssub.s32 %s21, %s33
    %s185 = ssub.s32 %s22, %s29
    %s186 = sor.u32 %s184, %s185
    %p187 = scmp.eq.s32.totalorder %s186, 0
    %s189 = sadd.s32 %s188, 1
    %s190 = scalar_select %p187, %s188, %s189
    %p193 = pneg %p187
    %p194 = scmp.eq.s32.totalorder %s14, 1
    %p195 = por %p193, %p194
    %p196 = scmp.ne.s32.totalorder %s188, %s191
    %p197 = scmp.eq.s32.totalorder %s14, 0
    %p198 = por %p196, %p197
    %p199 = scmp.ne.s32.totalorder %s188, %s191
    %p200 = scmp.eq.s32.totalorder %s19, 1
    %p201 = por %p199, %p200
    %p202 = scmp.ne.s32.totalorder %s191, %s192
    %p203 = scmp.eq.s32.totalorder %s19, 0
    %p204 = por %p202, %p203
    %p205 = scmp.ne.s32.totalorder %s191, %s192
    %p206 = scmp.eq.s32.totalorder %s20, 1
    %p207 = por %p205, %p206
    %p209 = scmp.ne.s32.totalorder %s192, %s208
    %p210 = scmp.eq.s32.totalorder %s20, 0
    %p211 = por %p209, %p210
    %s212 = ssub.s32 %s21, %s33
    %s213 = ssub.s32 %s22, %s29
    %s214 = sor.u32 %s212, %s213
    %p215 = scmp.eq.s32.totalorder %s214, 0
    %s217 = sadd.s32 %s216, 1
    %s218 = scalar_select %p215, %s216, %s217
    %p221 = pneg %p215
    %p222 = scmp.eq.s32.totalorder %s14, 1
    %p223 = por %p221, %p222
    %p224 = scmp.ne.s32.totalorder %s216, %s219
    %p225 = scmp.eq.s32.totalorder %s14, 0
    %p226 = por %p224, %p225
    %p227 = scmp.ne.s32.totalorder %s216, %s219
    %p228 = scmp.eq.s32.totalorder %s19, 1
    %p229 = por %p227, %p228
    %p230 = scmp.ne.s32.totalorder %s219, %s220
    %p231 = scmp.eq.s32.totalorder %s19, 0
    %p232 = por %p230, %p231
    %p233 = scmp.ne.s32.totalorder %s219, %s220
    %p234 = scmp.eq.s32.totalorder %s20, 1
    %p235 = por %p233, %p234
    %p237 = scmp.ne.s32.totalorder %s220, %s236
    %p238 = scmp.eq.s32.totalorder %s20, 0
    %p239 = por %p237, %p238
    %p240 = scmp.le.s32.totalorder 1, %s14
    %p241 = scmp.lt.s32.totalorder %s14, 3
    %p242 = pnand %p240, %p241
    %p243 = pneg %p242
    // Predicated region
    $region9: #{prm_generator_forward.6} parent=5 // pred_check
      _
    $region10: #{prm_generator_forward.6} parent=5 // pred_check_branch
      %245 = sbr.rel (%p242) target = $region12
    $region11: #{prm_generator_forward.6} parent=5 // pred_region
      %s246 = ssub.s32 %s14, 1
      // Predicated region
      $region13: #{prm_generator_forward.6} parent=11 // pred_check
        %p247 = pneg %p127
      $region14: #{prm_generator_forward.6} parent=11 // pred_check_branch
        %249 = sbr.rel (%p247) target = $region16
      $region15: #{prm_generator_forward.6} parent=11 // pred_region
        _
      $region16: #{prm_generator_forward.6} parent=11 // pred_fallthru
        _
      // Predicated region
      $region17: #{prm_generator_forward.6} parent=11 // pred_check
        %p250 = pneg %p148
      $region18: #{prm_generator_forward.6} parent=11 // pred_check_branch
        %252 = sbr.rel (%p250) target = $region20
      $region19: #{prm_generator_forward.6} parent=11 // pred_region
        _
      $region20: #{prm_generator_forward.6} parent=11 // pred_fallthru
        _
    $region12: #{prm_generator_forward.6} parent=5 // pred_fallthru
      _
    %p253 = scmp.lt.s32.totalorder %s14, 2
    // Predicated region
    $region21: #{prm_generator_forward.6} parent=5 // pred_check
      %p254 = pneg %p253
    $region22: #{prm_generator_forward.6} parent=5 // pred_check_branch
      %256 = sbr.rel (%p254) target = $region24
    $region23: #{prm_generator_forward.6} parent=5 // pred_region
      // Predicated region
      $region25: #{prm_generator_forward.6} parent=23 // pred_check
        %p257 = pneg %p48
      $region26: #{prm_generator_forward.6} parent=23 // pred_check_branch
        %259 = sbr.rel (%p257) target = $region28
      $region27: #{prm_generator_forward.6} parent=23 // pred_region
        %s260 = sadd.s32 %s21, %s22
        %p261 = scmp.lt.s32.totalorder %s260, 1
        %s262 = scalar_select %p261, %s260, 1
        %s263 = smul.addr %s262, 6
        %s264 = smul.addr %s263, 2
        %s265 = scalar_lea.vmem %s0, %s264
        %s266 = sadd.s32 %s21, %s22
      $region28: #{prm_generator_forward.6} parent=23 // pred_fallthru
        _
      // Predicated region
      $region29: #{prm_generator_forward.6} parent=23 // pred_check
        %p267 = pneg %p74
      $region30: #{prm_generator_forward.6} parent=23 // pred_check_branch
        %269 = sbr.rel (%p267) target = $region32
      $region31: #{prm_generator_forward.6} parent=23 // pred_region
        %p270 = scmp.lt.s32.totalorder %s21, 1
        %s271 = scalar_select %p270, %s21, 1
        %s272 = smul.addr %s271, 4
        %s273 = scalar_lea.vmem %s1, %s272
      $region32: #{prm_generator_forward.6} parent=23 // pred_fallthru
        _
      // Predicated region
      $region33: #{prm_generator_forward.6} parent=23 // pred_check
        %p274 = pneg %p100
      $region34: #{prm_generator_forward.6} parent=23 // pred_check_branch
        %276 = sbr.rel (%p274) target = $region36
      $region35: #{prm_generator_forward.6} parent=23 // pred_region
        %p277 = scmp.lt.s32.totalorder %s21, 1
        %s278 = scalar_select %p277, %s21, 1
        %s279 = smul.addr %s278, 4
        %s280 = scalar_lea.vmem %s2, %s279
      $region36: #{prm_generator_forward.6} parent=23 // pred_fallthru
        _
    $region24: #{prm_generator_forward.6} parent=5 // pred_fallthru
      _
    %p281 = scmp.le.s32.totalorder 1, %s14
    %p282 = scmp.lt.s32.totalorder %s14, 3
    %p283 = pnand %p281, %p282
    %p284 = pneg %p283
    // Predicated region
    $region37: #{prm_generator_forward.6} parent=5 // pred_check
      _
    $region38: #{prm_generator_forward.6} parent=5 // pred_check_branch
      %286 = sbr.rel (%p283) target = $region40
    $region39: #{prm_generator_forward.6} parent=5 // pred_region
      %s287 = ssub.s32 %s14, 1
      %s288 = sadd.s32 %s23, %s24
      %p289 = scmp.lt.s32.totalorder %s288, 1
      %s290 = scalar_select %p289, %s288, 1
      %s291 = smul.addr %s290, 6
      %s292 = smul.addr %s291, 2
      %s293 = scalar_lea.vmem %s0, %s292
      %p294 = pneg %p54
      %p295 = pneg %p51
      %p296 = scmp.lt.s32.totalorder %s23, 1
      %s297 = scalar_select %p296, %s23, 1
      %s298 = smul.addr %s297, 4
      %s299 = scalar_lea.vmem %s1, %s298
      %p300 = pneg %p80
      %p301 = pneg %p77
      %p302 = scmp.lt.s32.totalorder %s23, 1
      %s303 = scalar_select %p302, %s23, 1
      %s304 = smul.addr %s303, 4
      %s305 = scalar_lea.vmem %s2, %s304
      %p306 = pneg %p106
      %p307 = pneg %p103
      %p308 = pneg %p127
      %p309 = pneg %p124
      %p310 = pneg %p148
      %p311 = pneg %p145
      %p312 = pneg %p176
      %p313 = pneg %p173
      %s314 = smul.u32 4, %s24
      %p315 = scmp.lt.s32.totalorder %s23, 1
      %s316 = scalar_select %p315, %s23, 1
      %p317 = scmp.lt.s32.totalorder %s314, 3
      %s318 = scalar_select %p317, %s314, 3
      %s319 = smul.addr %s316, 4
      %s320 = sadd.s32 %s318, %s319
      %s321 = smul.addr %s320, 2
      %s322 = scalar_lea.vmem %s5, %s321
      %p323 = pneg %p204
      %p324 = pneg %p201
      %p325 = scmp.lt.s32.totalorder %s23, 1
      %s326 = scalar_select %p325, %s23, 1
      %p327 = scmp.lt.s32.totalorder %s24, 0
      %s328 = scalar_select %p327, %s24, 0
      %s329 = sadd.s32 %s328, %s326
      %s330 = smul.addr %s329, 4
      %s331 = scalar_lea.vmem %s6, %s330
      %p332 = pneg %p232
      %p333 = pneg %p229
      %p334 = scmp.lt.s32.totalorder %s23, 1
      %s335 = scalar_select %p334, %s23, 1
      %p336 = scmp.lt.s32.totalorder %s24, 0
      %s337 = scalar_select %p336, %s24, 0
      %s338 = sadd.s32 %s337, %s335
      %s339 = smul.addr %s338, 4
      %s340 = scalar_lea.vmem %s7, %s339
      %s341 = sadd.s32 %s23, %s24
      %p342 = scmp.lt.s32.totalorder %s341, 1
      %s343 = scalar_select %p342, %s341, 1
      %s344 = smul.addr %s343, 6
      %s345 = smul.addr %s344, 2
      %s346 = scalar_lea.vmem %s0, %s345
      %s347 = sadd.s32 %s23, %s24
      %p348 = scmp.lt.s32.totalorder %s23, 1
      %s349 = scalar_select %p348, %s23, 1
      %s350 = smul.addr %s349, 4
      %s351 = scalar_lea.vmem %s1, %s350
      %p352 = scmp.lt.s32.totalorder %s23, 1
      %s353 = scalar_select %p352, %s23, 1
      %s354 = smul.addr %s353, 4
      %s355 = scalar_lea.vmem %s2, %s354
      %s356 = smul.u32 4, %s24
      %p357 = scmp.lt.s32.totalorder %s23, 1
      %s358 = scalar_select %p357, %s23, 1
      %p359 = scmp.lt.s32.totalorder %s356, 3
      %s360 = scalar_select %p359, %s356, 3
      %s361 = smul.addr %s358, 4
      %s362 = sadd.s32 %s360, %s361
      %s363 = smul.addr %s362, 2
      %s364 = scalar_lea.vmem %s5, %s363
      %s365 = smul.u32 4, %s24
      %p366 = scmp.lt.s32.totalorder %s23, 1
      %s367 = scalar_select %p366, %s23, 1
      %p368 = scmp.lt.s32.totalorder %s24, 0
      %s369 = scalar_select %p368, %s24, 0
      %s370 = sadd.s32 %s369, %s367
      %s371 = smul.addr %s370, 4
      %s372 = scalar_lea.vmem %s6, %s371
      %p373 = scmp.lt.s32.totalorder %s23, 1
      %s374 = scalar_select %p373, %s23, 1
      %p375 = scmp.lt.s32.totalorder %s24, 0
      %s376 = scalar_select %p375, %s24, 0
      %s377 = sadd.s32 %s376, %s374
      %s378 = smul.addr %s377, 4
      %s379 = scalar_lea.vmem %s7, %s378
      %v381 = vld [vmem:[%s351] sm:$0xf]
      %v382 = vld [vmem:[%s355] sm:$0xf]
      %v383 = vadd.f32 %v381, 0.0
      %v384 = vadd.f32 %v382, 0.0
      %v385 = vmul.f32 %v383, 0.015625
      %v386 = vmul.f32 %v384, 0.015625
      %v387 = vmul.f32 %v385, %v385
      %v388 = vsub.f32 %v386, %v387
      %v389 = vmax.f32 %v388, 0.0
      %v390 = vadd.f32 %v389, 1e-05
      %v391 = vrsqrt.pop %v390
      %v392 = vlaneseq
      %v393 = vand.u32 %v392, 127
      %vm394 = vcmp.lt.s32.totalorder %v393, 0
      %v395 = vsub.s32 0, %v393
      %v396 = vsel %vm394, %v395, %v393
      %v397 = vmul.u32.u64.compose %v396, 2863311531
      %v398 = vextract.low.u32 %v397
      %v399 = vextract.high.u32 %v397
      %v400 = vshrl.u32 %v399, 2
      %v401 = vmul.u32 %v400, 6
      %v402 = vsub.s32 %v396, %v401
      %v403 = vsub.s32 0, %v402
      %v404 = vsel %vm394, %v403, %v402
      %vm405 = vcmp.ne.s32.totalorder %v404, 0
      %vm406 = vcmp.lt.s32.totalorder %v404, 0
      %vm407 = vmand %vm406, %vm405
      %v408 = vadd.s32 %v404, 6
      %v409 = vsel %vm407, %v408, %v404
      %vm410 = vcmp.lt.s32.totalorder %v409, 4
      %v411 = vsel %vm410, 1, 0
      %v412 = vcvt.s32.f32 %v411
      %v413 = vld [vmem:[%s346] sm:$0x3]
      %v414 = vunpack.c.l.bf16 %v413
      %416 = vset.pattern.permute.xlu0 0
      %417 = vperm.xlu0 %416, %v385
      %v418 = vpop.permute.xlu0 %417
      %v420 = vsub.f32 %v414, %v418
      %422 = vset.pattern.permute.xlu0 0
      %423 = vperm.xlu0 %422, %v391
      %v424 = vpop.permute.xlu0 %423
      %v426 = vmul.f32 %v420, %v424
      %vm427 = vcmp.ge.f32.partialorder %v426, 0.0
      %v428 = vmul.f32 %v426, 0.2
      %v429 = vsel %vm427, %v426, %v428
      %v430 = vpack.c.bf16 %v429, %v429
      %v432 = vrot.slane %v430, 6
      %433 = vrot.lane.b32.xlu0 %v432, 127
      %v434 = vpop.permute.xlu0 %433
      %v435 = vrot.slane %v430, 4
      %436 = vrot.lane.b32.xlu0 %v435, 126
      %v437 = vpop.permute.xlu0 %436
      %v438 = vrot.slane %v430, 2
      %439 = vrot.lane.b32.xlu0 %v438, 122
      %v440 = vpop.permute.xlu0 %439
      %441 = vrot.lane.b32.xlu0 %v430, 121
      %v442 = vpop.permute.xlu0 %441
      %443 = vrot.lane.b32.xlu0 %v432, 120
      %v444 = vpop.permute.xlu0 %443
      %445 = vrot.lane.b32.xlu0 %v435, 116
      %v446 = vpop.permute.xlu0 %445
      %447 = vrot.lane.b32.xlu0 %v438, 115
      %v448 = vpop.permute.xlu0 %447
      %449 = vrot.lane.b32.xlu0 %v430, 114
      %v450 = vpop.permute.xlu0 %449
      %vm451 = vcmask 1041408
      %v454 = vsel %vm451, %v430, %v434
      %vm455 = vcmask 1043456
      %v457 = vsel %vm455, %v454, %v437
      %vm458 = vcmask 1045504
      %v460 = vsel %vm458, %v457, %v440
      %v464 = vsel %vm451, %v442, %v444
      %v466 = vsel %vm455, %v464, %v446
      %v468 = vsel %vm458, %v466, %v448
      %v470 = vld [vmem:[%s3] sm:$0x3]
      %s471 = scalar_lea.vmem %s346, 2
      %v472 = vld [vmem:[%s471] sm:$0x3]
      %v473 = vunpack.c.l.bf16 %v472
      %v474 = vsub.f32 %v473, %v418
      %v475 = vmul.f32 %v474, %v424
      %vm476 = vcmp.ge.f32.partialorder %v475, 0.0
      %v477 = vmul.f32 %v475, 0.2
      %v478 = vsel %vm476, %v475, %v477
      %v479 = vpack.c.bf16 %v478, %v478
      %v481 = vrot.slane %v479, 6
      %482 = vrot.lane.b32.xlu0 %v481, 127
      %v483 = vpop.permute.xlu0 %482
      %v484 = vrot.slane %v479, 4
      %485 = vrot.lane.b32.xlu0 %v484, 126
      %v486 = vpop.permute.xlu0 %485
      %v487 = vrot.slane %v479, 2
      %488 = vrot.lane.b32.xlu0 %v487, 122
      %v489 = vpop.permute.xlu0 %488
      %490 = vrot.lane.b32.xlu0 %v479, 121
      %v491 = vpop.permute.xlu0 %490
      %492 = vrot.lane.b32.xlu0 %v481, 120
      %v493 = vpop.permute.xlu0 %492
      %494 = vrot.lane.b32.xlu0 %v484, 116
      %v495 = vpop.permute.xlu0 %494
      %496 = vrot.lane.b32.xlu0 %v487, 115
      %v497 = vpop.permute.xlu0 %496
      %498 = vrot.lane.b32.xlu0 %v479, 114
      %v499 = vpop.permute.xlu0 %498
      %v502 = vsel %vm451, %v479, %v483
      %v504 = vsel %vm455, %v502, %v486
      %v506 = vsel %vm458, %v504, %v489
      %v510 = vsel %vm451, %v491, %v493
      %v512 = vsel %vm455, %v510, %v495
      %v514 = vsel %vm458, %v512, %v497
      %s516 = scalar_lea.vmem %s3, 2
      %v517 = vld [vmem:[%s516] sm:$0x3]
      %vm518 = vcmask 293888
      %v520 = vsel %vm518, %v517, 0
      %v523 = vsel %vm451, %v499, 0
      %525 = vmatprep.subr.bf16.mxu0 0
      %526 = vmatpush1.bf16.msra.mxu0 0
      %527 = vmatprep.subr.bf16.mxu0 0
      %528 = vmatpush1.bf16.msra.mxu0 0
      %529 = vmatprep.subr.bf16.mxu0 0
      %530 = vmatpush1.bf16.msra.mxu0 0
      %531 = vmatprep.subr.bf16.mxu0 0
      %532 = vmatpush1.bf16.msra.mxu0 0
      %533 = vmatprep.subr.bf16.mxu0 0
      %534 = vmatpush1.bf16.msra.mxu0 0
      %535 = vmatprep.subr.bf16.mxu0 0
      %536 = vmatpush1.bf16.msra.mxu0 %v523
      %537 = vmatprep.subr.bf16.mxu0 0
      %538 = vmatpush1.bf16.msra.mxu0 %v514
      %539 = vmatprep.subr.bf16.mxu0 0
      %540 = vmatpush1.bf16.msra.mxu0 %v506
      %541 = vmatprep.subr.bf16.mxu0 0
      %542 = vmatpush2.bf16.msra.mxu0 0
      %543 = vmatprep.subr.bf16.mxu0 0
      %544 = vmatpush2.bf16.msra.mxu0 0
      %545 = vmatprep.subr.bf16.mxu0 0
      %546 = vmatpush2.bf16.msra.mxu0 0
      %547 = vmatprep.subr.bf16.mxu0 0
      %548 = vmatpush2.bf16.msra.mxu0 0
      %549 = vmatprep.subr.bf16.mxu0 0
      %550 = vmatpush2.bf16.msra.mxu0 0
      %551 = vmatprep.subr.bf16.mxu0 0
      %552 = vmatpush2.bf16.msra.mxu0 0
      %553 = vmatprep.subr.bf16.mxu0 0
      %554 = vmatpush2.bf16.msra.mxu0 0
      %555 = vmatprep.subr.bf16.mxu0 0
      %556 = vmatpush2.bf16.msra.mxu0 0
      %557 = vmatprep.mubr.bf16.mxu0 0
      %558 = vmatmul.mubr.bf16.gmra.mxu0 %v520
      %v559 = vpop.f32.mrf.mxu0
      %v560 = vadd.f32 0.0, %v559
      %v561 = vpop.f32.mrf.mxu0
      %v562 = vpop.f32.mrf.mxu0
      %v563 = vpop.f32.mrf.mxu0
      %564 = vdwg.mxu0
      %v566 = vsel %vm518, %v470, 0
      %v569 = vsel %vm451, %v450, 0
      %571 = vmatprep.subr.bf16.mxu0 0
      %572 = vmatpush1.bf16.msra.mxu0 0
      %573 = vmatprep.subr.bf16.mxu0 0
      %574 = vmatpush1.bf16.msra.mxu0 0
      %575 = vmatprep.subr.bf16.mxu0 0
      %576 = vmatpush1.bf16.msra.mxu0 0
      %577 = vmatprep.subr.bf16.mxu0 0
      %578 = vmatpush1.bf16.msra.mxu0 0
      %579 = vmatprep.subr.bf16.mxu0 0
      %580 = vmatpush1.bf16.msra.mxu0 0
      %581 = vmatprep.subr.bf16.mxu0 0
      %582 = vmatpush1.bf16.msra.mxu0 %v569
      %583 = vmatprep.subr.bf16.mxu0 0
      %584 = vmatpush1.bf16.msra.mxu0 %v468
      %585 = vmatprep.subr.bf16.mxu0 0
      %586 = vmatpush1.bf16.msra.mxu0 %v460
      %587 = vmatprep.subr.bf16.mxu0 0
      %588 = vmatpush2.bf16.msra.mxu0 0
      %589 = vmatprep.subr.bf16.mxu0 0
      %590 = vmatpush2.bf16.msra.mxu0 0
      %591 = vmatprep.subr.bf16.mxu0 0
      %592 = vmatpush2.bf16.msra.mxu0 0
      %593 = vmatprep.subr.bf16.mxu0 0
      %594 = vmatpush2.bf16.msra.mxu0 0
      %595 = vmatprep.subr.bf16.mxu0 0
      %596 = vmatpush2.bf16.msra.mxu0 0
      %597 = vmatprep.subr.bf16.mxu0 0
      %598 = vmatpush2.bf16.msra.mxu0 0
      %599 = vmatprep.subr.bf16.mxu0 0
      %600 = vmatpush2.bf16.msra.mxu0 0
      %601 = vmatprep.subr.bf16.mxu0 0
      %602 = vmatpush2.bf16.msra.mxu0 0
      %603 = vmatprep.mubr.bf16.mxu0 0
      %604 = vmatmul.mubr.bf16.gmra.mxu0 %v566
      %v605 = vpop.f32.mrf.mxu0
      %v606 = vadd.f32 %v560, %v605
      %v607 = vpop.f32.mrf.mxu0
      %v608 = vpop.f32.mrf.mxu0
      %v609 = vpop.f32.mrf.mxu0
      %610 = vdwg.mxu0
      %s611 = scalar_lea.vmem %s346, 4
      %v612 = vld [vmem:[%s611] sm:$0x3]
      %v613 = vunpack.c.l.bf16 %v612
      %v614 = vsub.f32 %v613, %v418
      %v615 = vmul.f32 %v614, %v424
      %vm616 = vcmp.ge.f32.partialorder %v615, 0.0
      %v617 = vmul.f32 %v615, 0.2
      %v618 = vsel %vm616, %v615, %v617
      %v619 = vpack.c.bf16 %v618, %v618
      %v621 = vrot.slane %v619, 6
      %622 = vrot.lane.b32.xlu0 %v621, 127
      %v623 = vpop.permute.xlu0 %622
      %v624 = vrot.slane %v619, 4
      %625 = vrot.lane.b32.xlu0 %v624, 126
      %v626 = vpop.permute.xlu0 %625
      %v627 = vrot.slane %v619, 2
      %628 = vrot.lane.b32.xlu0 %v627, 122
      %v629 = vpop.permute.xlu0 %628
      %630 = vrot.lane.b32.xlu0 %v619, 121
      %v631 = vpop.permute.xlu0 %630
      %632 = vrot.lane.b32.xlu0 %v621, 120
      %v633 = vpop.permute.xlu0 %632
      %634 = vrot.lane.b32.xlu0 %v624, 116
      %v635 = vpop.permute.xlu0 %634
      %636 = vrot.lane.b32.xlu0 %v627, 115
      %v637 = vpop.permute.xlu0 %636
      %638 = vrot.lane.b32.xlu0 %v619, 114
      %v639 = vpop.permute.xlu0 %638
      %v642 = vsel %vm451, %v619, %v623
      %v644 = vsel %vm455, %v642, %v626
      %v646 = vsel %vm458, %v644, %v629
      %v650 = vsel %vm451, %v631, %v633
      %v652 = vsel %vm455, %v650, %v635
      %v654 = vsel %vm458, %v652, %v637
      %v657 = vsel %vm451, %v639, 0
      %659 = vmatprep.subr.bf16.mxu0 0
      %660 = vmatpush1.bf16.msra.mxu0 0
      %661 = vmatprep.subr.bf16.mxu0 0
      %662 = vmatpush1.bf16.msra.mxu0 0
      %663 = vmatprep.subr.bf16.mxu0 0
      %664 = vmatpush1.bf16.msra.mxu0 0
      %665 = vmatprep.subr.bf16.mxu0 0
      %666 = vmatpush1.bf16.msra.mxu0 0
      %667 = vmatprep.subr.bf16.mxu0 0
      %668 = vmatpush1.bf16.msra.mxu0 0
      %669 = vmatprep.subr.bf16.mxu0 0
      %670 = vmatpush1.bf16.msra.mxu0 %v657
      %671 = vmatprep.subr.bf16.mxu0 0
      %672 = vmatpush1.bf16.msra.mxu0 %v654
      %673 = vmatprep.subr.bf16.mxu0 0
      %674 = vmatpush1.bf16.msra.mxu0 %v646
      %675 = vmatprep.subr.bf16.mxu0 0
      %676 = vmatpush2.bf16.msra.mxu0 0
      %677 = vmatprep.subr.bf16.mxu0 0
      %678 = vmatpush2.bf16.msra.mxu0 0
      %679 = vmatprep.subr.bf16.mxu0 0
      %680 = vmatpush2.bf16.msra.mxu0 0
      %681 = vmatprep.subr.bf16.mxu0 0
      %682 = vmatpush2.bf16.msra.mxu0 0
      %683 = vmatprep.subr.bf16.mxu0 0
      %684 = vmatpush2.bf16.msra.mxu0 0
      %685 = vmatprep.subr.bf16.mxu0 0
      %686 = vmatpush2.bf16.msra.mxu0 0
      %687 = vmatprep.subr.bf16.mxu0 0
      %688 = vmatpush2.bf16.msra.mxu0 0
      %689 = vmatprep.subr.bf16.mxu0 0
      %690 = vmatpush2.bf16.msra.mxu0 0
      %691 = vmatprep.mubr.bf16.mxu0 0
      %692 = vmatmul.mubr.bf16.gmra.mxu0 %v520
      %v693 = vpop.f32.mrf.mxu0
      %v694 = vadd.f32 0.0, %v693
      %v695 = vpop.f32.mrf.mxu0
      %v696 = vpop.f32.mrf.mxu0
      %v697 = vpop.f32.mrf.mxu0
      %698 = vdwg.mxu0
      %699 = vmatprep.subr.bf16.mxu0 0
      %700 = vmatpush1.bf16.msra.mxu0 0
      %701 = vmatprep.subr.bf16.mxu0 0
      %702 = vmatpush1.bf16.msra.mxu0 0
      %703 = vmatprep.subr.bf16.mxu0 0
      %704 = vmatpush1.bf16.msra.mxu0 0
      %705 = vmatprep.subr.bf16.mxu0 0
      %706 = vmatpush1.bf16.msra.mxu0 0
      %707 = vmatprep.subr.bf16.mxu0 0
      %708 = vmatpush1.bf16.msra.mxu0 0
      %709 = vmatprep.subr.bf16.mxu0 0
      %710 = vmatpush1.bf16.msra.mxu0 %v523
      %711 = vmatprep.subr.bf16.mxu0 0
      %712 = vmatpush1.bf16.msra.mxu0 %v514
      %713 = vmatprep.subr.bf16.mxu0 0
      %714 = vmatpush1.bf16.msra.mxu0 %v506
      %715 = vmatprep.subr.bf16.mxu0 0
      %716 = vmatpush2.bf16.msra.mxu0 0
      %717 = vmatprep.subr.bf16.mxu0 0
      %718 = vmatpush2.bf16.msra.mxu0 0
      %719 = vmatprep.subr.bf16.mxu0 0
      %720 = vmatpush2.bf16.msra.mxu0 0
      %721 = vmatprep.subr.bf16.mxu0 0
      %722 = vmatpush2.bf16.msra.mxu0 0
      %723 = vmatprep.subr.bf16.mxu0 0
      %724 = vmatpush2.bf16.msra.mxu0 0
      %725 = vmatprep.subr.bf16.mxu0 0
      %726 = vmatpush2.bf16.msra.mxu0 0
      %727 = vmatprep.subr.bf16.mxu0 0
      %728 = vmatpush2.bf16.msra.mxu0 0
      %729 = vmatprep.subr.bf16.mxu0 0
      %730 = vmatpush2.bf16.msra.mxu0 0
      %731 = vmatprep.mubr.bf16.mxu0 0
      %732 = vmatmul.mubr.bf16.gmra.mxu0 %v566
      %v733 = vpop.f32.mrf.mxu0
      %v734 = vadd.f32 %v694, %v733
      %v735 = vpop.f32.mrf.mxu0
      %v736 = vpop.f32.mrf.mxu0
      %v737 = vpop.f32.mrf.mxu0
      %738 = vdwg.mxu0
      %s739 = scalar_lea.vmem %s3, 4
      %v740 = vld [vmem:[%s739] sm:$0x3]
      %v742 = vsel %vm518, %v740, 0
      %744 = vmatprep.subr.bf16.mxu0 0
      %745 = vmatpush1.bf16.msra.mxu0 0
      %746 = vmatprep.subr.bf16.mxu0 0
      %747 = vmatpush1.bf16.msra.mxu0 0
      %748 = vmatprep.subr.bf16.mxu0 0
      %749 = vmatpush1.bf16.msra.mxu0 0
      %750 = vmatprep.subr.bf16.mxu0 0
      %751 = vmatpush1.bf16.msra.mxu0 0
      %752 = vmatprep.subr.bf16.mxu0 0
      %753 = vmatpush1.bf16.msra.mxu0 0
      %754 = vmatprep.subr.bf16.mxu0 0
      %755 = vmatpush1.bf16.msra.mxu0 %v657
      %756 = vmatprep.subr.bf16.mxu0 0
      %757 = vmatpush1.bf16.msra.mxu0 %v654
      %758 = vmatprep.subr.bf16.mxu0 0
      %759 = vmatpush1.bf16.msra.mxu0 %v646
      %760 = vmatprep.subr.bf16.mxu0 0
      %761 = vmatpush2.bf16.msra.mxu0 0
      %762 = vmatprep.subr.bf16.mxu0 0
      %763 = vmatpush2.bf16.msra.mxu0 0
      %764 = vmatprep.subr.bf16.mxu0 0
      %765 = vmatpush2.bf16.msra.mxu0 0
      %766 = vmatprep.subr.bf16.mxu0 0
      %767 = vmatpush2.bf16.msra.mxu0 0
      %768 = vmatprep.subr.bf16.mxu0 0
      %769 = vmatpush2.bf16.msra.mxu0 0
      %770 = vmatprep.subr.bf16.mxu0 0
      %771 = vmatpush2.bf16.msra.mxu0 0
      %772 = vmatprep.subr.bf16.mxu0 0
      %773 = vmatpush2.bf16.msra.mxu0 0
      %774 = vmatprep.subr.bf16.mxu0 0
      %775 = vmatpush2.bf16.msra.mxu0 0
      %776 = vmatprep.mubr.bf16.mxu0 0
      %777 = vmatmul.mubr.bf16.gmra.mxu0 %v742
      %v778 = vpop.f32.mrf.mxu0
      %v779 = vadd.f32 0.0, %v778
      %v780 = vpop.f32.mrf.mxu0
      %v781 = vpop.f32.mrf.mxu0
      %v782 = vpop.f32.mrf.mxu0
      %783 = vdwg.mxu0
      %v784 = vadd.f32 %v606, %v779
      %s785 = scalar_lea.vmem %s346, 6
      %v786 = vld [vmem:[%s785] sm:$0x3]
      %v787 = vunpack.c.l.bf16 %v786
      %v788 = vsub.f32 %v787, %v418
      %v789 = vmul.f32 %v788, %v424
      %vm790 = vcmp.ge.f32.partialorder %v789, 0.0
      %v791 = vmul.f32 %v789, 0.2
      %v792 = vsel %vm790, %v789, %v791
      %v793 = vpack.c.bf16 %v792, %v792
      %v795 = vrot.slane %v793, 6
      %796 = vrot.lane.b32.xlu0 %v795, 127
      %v797 = vpop.permute.xlu0 %796
      %v798 = vrot.slane %v793, 4
      %799 = vrot.lane.b32.xlu0 %v798, 126
      %v800 = vpop.permute.xlu0 %799
      %v801 = vrot.slane %v793, 2
      %802 = vrot.lane.b32.xlu0 %v801, 122
      %v803 = vpop.permute.xlu0 %802
      %804 = vrot.lane.b32.xlu0 %v793, 121
      %v805 = vpop.permute.xlu0 %804
      %806 = vrot.lane.b32.xlu0 %v795, 120
      %v807 = vpop.permute.xlu0 %806
      %808 = vrot.lane.b32.xlu0 %v798, 116
      %v809 = vpop.permute.xlu0 %808
      %810 = vrot.lane.b32.xlu0 %v801, 115
      %v811 = vpop.permute.xlu0 %810
      %812 = vrot.lane.b32.xlu0 %v793, 114
      %v813 = vpop.permute.xlu0 %812
      %v816 = vsel %vm451, %v793, %v797
      %v818 = vsel %vm455, %v816, %v800
      %v820 = vsel %vm458, %v818, %v803
      %v824 = vsel %vm451, %v805, %v807
      %v826 = vsel %vm455, %v824, %v809
      %v828 = vsel %vm458, %v826, %v811
      %v831 = vsel %vm451, %v813, 0
      %833 = vmatprep.subr.bf16.mxu0 0
      %834 = vmatpush1.bf16.msra.mxu0 0
      %835 = vmatprep.subr.bf16.mxu0 0
      %836 = vmatpush1.bf16.msra.mxu0 0
      %837 = vmatprep.subr.bf16.mxu0 0
      %838 = vmatpush1.bf16.msra.mxu0 0
      %839 = vmatprep.subr.bf16.mxu0 0
      %840 = vmatpush1.bf16.msra.mxu0 0
      %841 = vmatprep.subr.bf16.mxu0 0
      %842 = vmatpush1.bf16.msra.mxu0 0
      %843 = vmatprep.subr.bf16.mxu0 0
      %844 = vmatpush1.bf16.msra.mxu0 %v831
      %845 = vmatprep.subr.bf16.mxu0 0
      %846 = vmatpush1.bf16.msra.mxu0 %v828
      %847 = vmatprep.subr.bf16.mxu0 0
      %848 = vmatpush1.bf16.msra.mxu0 %v820
      %849 = vmatprep.subr.bf16.mxu0 0
      %850 = vmatpush2.bf16.msra.mxu0 0
      %851 = vmatprep.subr.bf16.mxu0 0
      %852 = vmatpush2.bf16.msra.mxu0 0
      %853 = vmatprep.subr.bf16.mxu0 0
      %854 = vmatpush2.bf16.msra.mxu0 0
      %855 = vmatprep.subr.bf16.mxu0 0
      %856 = vmatpush2.bf16.msra.mxu0 0
      %857 = vmatprep.subr.bf16.mxu0 0
      %858 = vmatpush2.bf16.msra.mxu0 0
      %859 = vmatprep.subr.bf16.mxu0 0
      %860 = vmatpush2.bf16.msra.mxu0 0
      %861 = vmatprep.subr.bf16.mxu0 0
      %862 = vmatpush2.bf16.msra.mxu0 0
      %863 = vmatprep.subr.bf16.mxu0 0
      %864 = vmatpush2.bf16.msra.mxu0 0
      %865 = vmatprep.mubr.bf16.mxu0 0
      %866 = vmatmul.mubr.bf16.gmra.mxu0 %v520
      %v867 = vpop.f32.mrf.mxu0
      %v868 = vadd.f32 0.0, %v867
      %v869 = vpop.f32.mrf.mxu0
      %v870 = vpop.f32.mrf.mxu0
      %v871 = vpop.f32.mrf.mxu0
      %872 = vdwg.mxu0
      %873 = vmatprep.subr.bf16.mxu0 0
      %874 = vmatpush1.bf16.msra.mxu0 0
      %875 = vmatprep.subr.bf16.mxu0 0
      %876 = vmatpush1.bf16.msra.mxu0 0
      %877 = vmatprep.subr.bf16.mxu0 0
      %878 = vmatpush1.bf16.msra.mxu0 0
      %879 = vmatprep.subr.bf16.mxu0 0
      %880 = vmatpush1.bf16.msra.mxu0 0
      %881 = vmatprep.subr.bf16.mxu0 0
      %882 = vmatpush1.bf16.msra.mxu0 0
      %883 = vmatprep.subr.bf16.mxu0 0
      %884 = vmatpush1.bf16.msra.mxu0 %v657
      %885 = vmatprep.subr.bf16.mxu0 0
      %886 = vmatpush1.bf16.msra.mxu0 %v654
      %887 = vmatprep.subr.bf16.mxu0 0
      %888 = vmatpush1.bf16.msra.mxu0 %v646
      %889 = vmatprep.subr.bf16.mxu0 0
      %890 = vmatpush2.bf16.msra.mxu0 0
      %891 = vmatprep.subr.bf16.mxu0 0
      %892 = vmatpush2.bf16.msra.mxu0 0
      %893 = vmatprep.subr.bf16.mxu0 0
      %894 = vmatpush2.bf16.msra.mxu0 0
      %895 = vmatprep.subr.bf16.mxu0 0
      %896 = vmatpush2.bf16.msra.mxu0 0
      %897 = vmatprep.subr.bf16.mxu0 0
      %898 = vmatpush2.bf16.msra.mxu0 0
      %899 = vmatprep.subr.bf16.mxu0 0
      %900 = vmatpush2.bf16.msra.mxu0 0
      %901 = vmatprep.subr.bf16.mxu0 0
      %902 = vmatpush2.bf16.msra.mxu0 0
      %903 = vmatprep.subr.bf16.mxu0 0
      %904 = vmatpush2.bf16.msra.mxu0 0
      %905 = vmatprep.mubr.bf16.mxu0 0
      %906 = vmatmul.mubr.bf16.gmra.mxu0 %v566
      %v907 = vpop.f32.mrf.mxu0
      %v908 = vadd.f32 %v868, %v907
      %v909 = vpop.f32.mrf.mxu0
      %v910 = vpop.f32.mrf.mxu0
      %v911 = vpop.f32.mrf.mxu0
      %912 = vdwg.mxu0
      %913 = vmatprep.subr.bf16.mxu0 0
      %914 = vmatpush1.bf16.msra.mxu0 0
      %915 = vmatprep.subr.bf16.mxu0 0
      %916 = vmatpush1.bf16.msra.mxu0 0
      %917 = vmatprep.subr.bf16.mxu0 0
      %918 = vmatpush1.bf16.msra.mxu0 0
      %919 = vmatprep.subr.bf16.mxu0 0
      %920 = vmatpush1.bf16.msra.mxu0 0
      %921 = vmatprep.subr.bf16.mxu0 0
      %922 = vmatpush1.bf16.msra.mxu0 0
      %923 = vmatprep.subr.bf16.mxu0 0
      %924 = vmatpush1.bf16.msra.mxu0 %v831
      %925 = vmatprep.subr.bf16.mxu0 0
      %926 = vmatpush1.bf16.msra.mxu0 %v828
      %927 = vmatprep.subr.bf16.mxu0 0
      %928 = vmatpush1.bf16.msra.mxu0 %v820
      %929 = vmatprep.subr.bf16.mxu0 0
      %930 = vmatpush2.bf16.msra.mxu0 0
      %931 = vmatprep.subr.bf16.mxu0 0
      %932 = vmatpush2.bf16.msra.mxu0 0
      %933 = vmatprep.subr.bf16.mxu0 0
      %934 = vmatpush2.bf16.msra.mxu0 0
      %935 = vmatprep.subr.bf16.mxu0 0
      %936 = vmatpush2.bf16.msra.mxu0 0
      %937 = vmatprep.subr.bf16.mxu0 0
      %938 = vmatpush2.bf16.msra.mxu0 0
      %939 = vmatprep.subr.bf16.mxu0 0
      %940 = vmatpush2.bf16.msra.mxu0 0
      %941 = vmatprep.subr.bf16.mxu0 0
      %942 = vmatpush2.bf16.msra.mxu0 0
      %943 = vmatprep.subr.bf16.mxu0 0
      %944 = vmatpush2.bf16.msra.mxu0 0
      %945 = vmatprep.mubr.bf16.mxu0 0
      %946 = vmatmul.mubr.bf16.gmra.mxu0 %v742
      %v947 = vpop.f32.mrf.mxu0
      %v948 = vadd.f32 0.0, %v947
      %v949 = vpop.f32.mrf.mxu0
      %v950 = vpop.f32.mrf.mxu0
      %v951 = vpop.f32.mrf.mxu0
      %952 = vdwg.mxu0
      %v953 = vadd.f32 %v734, %v948
      %s954 = scalar_lea.vmem %s346, 8
      %v955 = vld [vmem:[%s954] sm:$0x3]
      %v956 = vunpack.c.l.bf16 %v955
      %v957 = vsub.f32 %v956, %v418
      %v958 = vmul.f32 %v957, %v424
      %vm959 = vcmp.ge.f32.partialorder %v958, 0.0
      %v960 = vmul.f32 %v958, 0.2
      %v961 = vsel %vm959, %v958, %v960
      %v962 = vpack.c.bf16 %v961, %v961
      %v964 = vrot.slane %v962, 6
      %965 = vrot.lane.b32.xlu0 %v964, 127
      %v966 = vpop.permute.xlu0 %965
      %v967 = vrot.slane %v962, 4
      %968 = vrot.lane.b32.xlu0 %v967, 126
      %v969 = vpop.permute.xlu0 %968
      %v970 = vrot.slane %v962, 2
      %971 = vrot.lane.b32.xlu0 %v970, 122
      %v972 = vpop.permute.xlu0 %971
      %973 = vrot.lane.b32.xlu0 %v962, 121
      %v974 = vpop.permute.xlu0 %973
      %975 = vrot.lane.b32.xlu0 %v964, 120
      %v976 = vpop.permute.xlu0 %975
      %977 = vrot.lane.b32.xlu0 %v967, 116
      %v978 = vpop.permute.xlu0 %977
      %979 = vrot.lane.b32.xlu0 %v970, 115
      %v980 = vpop.permute.xlu0 %979
      %981 = vrot.lane.b32.xlu0 %v962, 114
      %v982 = vpop.permute.xlu0 %981
      %v985 = vsel %vm451, %v962, %v966
      %v987 = vsel %vm455, %v985, %v969
      %v989 = vsel %vm458, %v987, %v972
      %v993 = vsel %vm451, %v974, %v976
      %v995 = vsel %vm455, %v993, %v978
      %v997 = vsel %vm458, %v995, %v980
      %v1000 = vsel %vm451, %v982, 0
      %1002 = vmatprep.subr.bf16.mxu0 0
      %1003 = vmatpush1.bf16.msra.mxu0 0
      %1004 = vmatprep.subr.bf16.mxu0 0
      %1005 = vmatpush1.bf16.msra.mxu0 0
      %1006 = vmatprep.subr.bf16.mxu0 0
      %1007 = vmatpush1.bf16.msra.mxu0 0
      %1008 = vmatprep.subr.bf16.mxu0 0
      %1009 = vmatpush1.bf16.msra.mxu0 0
      %1010 = vmatprep.subr.bf16.mxu0 0
      %1011 = vmatpush1.bf16.msra.mxu0 0
      %1012 = vmatprep.subr.bf16.mxu0 0
      %1013 = vmatpush1.bf16.msra.mxu0 %v1000
      %1014 = vmatprep.subr.bf16.mxu0 0
      %1015 = vmatpush1.bf16.msra.mxu0 %v997
      %1016 = vmatprep.subr.bf16.mxu0 0
      %1017 = vmatpush1.bf16.msra.mxu0 %v989
      %1018 = vmatprep.subr.bf16.mxu0 0
      %1019 = vmatpush2.bf16.msra.mxu0 0
      %1020 = vmatprep.subr.bf16.mxu0 0
      %1021 = vmatpush2.bf16.msra.mxu0 0
      %1022 = vmatprep.subr.bf16.mxu0 0
      %1023 = vmatpush2.bf16.msra.mxu0 0
      %1024 = vmatprep.subr.bf16.mxu0 0
      %1025 = vmatpush2.bf16.msra.mxu0 0
      %1026 = vmatprep.subr.bf16.mxu0 0
      %1027 = vmatpush2.bf16.msra.mxu0 0
      %1028 = vmatprep.subr.bf16.mxu0 0
      %1029 = vmatpush2.bf16.msra.mxu0 0
      %1030 = vmatprep.subr.bf16.mxu0 0
      %1031 = vmatpush2.bf16.msra.mxu0 0
      %1032 = vmatprep.subr.bf16.mxu0 0
      %1033 = vmatpush2.bf16.msra.mxu0 0
      %1034 = vmatprep.mubr.bf16.mxu0 0
      %1035 = vmatmul.mubr.bf16.gmra.mxu0 %v520
      %v1036 = vpop.f32.mrf.mxu0
      %v1037 = vadd.f32 0.0, %v1036
      %v1038 = vpop.f32.mrf.mxu0
      %v1039 = vpop.f32.mrf.mxu0
      %v1040 = vpop.f32.mrf.mxu0
      %1041 = vdwg.mxu0
      %1042 = vmatprep.subr.bf16.mxu0 0
      %1043 = vmatpush1.bf16.msra.mxu0 0
      %1044 = vmatprep.subr.bf16.mxu0 0
      %1045 = vmatpush1.bf16.msra.mxu0 0
      %1046 = vmatprep.subr.bf16.mxu0 0
      %1047 = vmatpush1.bf16.msra.mxu0 0
      %1048 = vmatprep.subr.bf16.mxu0 0
      %1049 = vmatpush1.bf16.msra.mxu0 0
      %1050 = vmatprep.subr.bf16.mxu0 0
      %1051 = vmatpush1.bf16.msra.mxu0 0
      %1052 = vmatprep.subr.bf16.mxu0 0
      %1053 = vmatpush1.bf16.msra.mxu0 %v831
      %1054 = vmatprep.subr.bf16.mxu0 0
      %1055 = vmatpush1.bf16.msra.mxu0 %v828
      %1056 = vmatprep.subr.bf16.mxu0 0
      %1057 = vmatpush1.bf16.msra.mxu0 %v820
      %1058 = vmatprep.subr.bf16.mxu0 0
      %1059 = vmatpush2.bf16.msra.mxu0 0
      %1060 = vmatprep.subr.bf16.mxu0 0
      %1061 = vmatpush2.bf16.msra.mxu0 0
      %1062 = vmatprep.subr.bf16.mxu0 0
      %1063 = vmatpush2.bf16.msra.mxu0 0
      %1064 = vmatprep.subr.bf16.mxu0 0
      %1065 = vmatpush2.bf16.msra.mxu0 0
      %1066 = vmatprep.subr.bf16.mxu0 0
      %1067 = vmatpush2.bf16.msra.mxu0 0
      %1068 = vmatprep.subr.bf16.mxu0 0
      %1069 = vmatpush2.bf16.msra.mxu0 0
      %1070 = vmatprep.subr.bf16.mxu0 0
      %1071 = vmatpush2.bf16.msra.mxu0 0
      %1072 = vmatprep.subr.bf16.mxu0 0
      %1073 = vmatpush2.bf16.msra.mxu0 0
      %1074 = vmatprep.mubr.bf16.mxu0 0
      %1075 = vmatmul.mubr.bf16.gmra.mxu0 %v566
      %v1076 = vpop.f32.mrf.mxu0
      %v1077 = vadd.f32 %v1037, %v1076
      %v1078 = vpop.f32.mrf.mxu0
      %v1079 = vpop.f32.mrf.mxu0
      %v1080 = vpop.f32.mrf.mxu0
      %1081 = vdwg.mxu0
      %1082 = vmatprep.subr.bf16.mxu0 0
      %1083 = vmatpush1.bf16.msra.mxu0 0
      %1084 = vmatprep.subr.bf16.mxu0 0
      %1085 = vmatpush1.bf16.msra.mxu0 0
      %1086 = vmatprep.subr.bf16.mxu0 0
      %1087 = vmatpush1.bf16.msra.mxu0 0
      %1088 = vmatprep.subr.bf16.mxu0 0
      %1089 = vmatpush1.bf16.msra.mxu0 0
      %1090 = vmatprep.subr.bf16.mxu0 0
      %1091 = vmatpush1.bf16.msra.mxu0 0
      %1092 = vmatprep.subr.bf16.mxu0 0
      %1093 = vmatpush1.bf16.msra.mxu0 %v1000
      %1094 = vmatprep.subr.bf16.mxu0 0
      %1095 = vmatpush1.bf16.msra.mxu0 %v997
      %1096 = vmatprep.subr.bf16.mxu0 0
      %1097 = vmatpush1.bf16.msra.mxu0 %v989
      %1098 = vmatprep.subr.bf16.mxu0 0
      %1099 = vmatpush2.bf16.msra.mxu0 0
      %1100 = vmatprep.subr.bf16.mxu0 0
      %1101 = vmatpush2.bf16.msra.mxu0 0
      %1102 = vmatprep.subr.bf16.mxu0 0
      %1103 = vmatpush2.bf16.msra.mxu0 0
      %1104 = vmatprep.subr.bf16.mxu0 0
      %1105 = vmatpush2.bf16.msra.mxu0 0
      %1106 = vmatprep.subr.bf16.mxu0 0
      %1107 = vmatpush2.bf16.msra.mxu0 0
      %1108 = vmatprep.subr.bf16.mxu0 0
      %1109 = vmatpush2.bf16.msra.mxu0 0
      %1110 = vmatprep.subr.bf16.mxu0 0
      %1111 = vmatpush2.bf16.msra.mxu0 0
      %1112 = vmatprep.subr.bf16.mxu0 0
      %1113 = vmatpush2.bf16.msra.mxu0 0
      %1114 = vmatprep.mubr.bf16.mxu0 0
      %1115 = vmatmul.mubr.bf16.gmra.mxu0 %v742
      %v1116 = vpop.f32.mrf.mxu0
      %v1117 = vadd.f32 0.0, %v1116
      %v1118 = vpop.f32.mrf.mxu0
      %v1119 = vpop.f32.mrf.mxu0
      %v1120 = vpop.f32.mrf.mxu0
      %1121 = vdwg.mxu0
      %v1122 = vadd.f32 %v908, %v1117
      %s1123 = scalar_lea.vmem %s346, 10
      %v1124 = vld [vmem:[%s1123] sm:$0x3]
      %v1125 = vunpack.c.l.bf16 %v1124
      %v1126 = vsub.f32 %v1125, %v418
      %v1127 = vmul.f32 %v1126, %v424
      %vm1128 = vcmp.ge.f32.partialorder %v1127, 0.0
      %v1129 = vmul.f32 %v1127, 0.2
      %v1130 = vsel %vm1128, %v1127, %v1129
      %v1131 = vpack.c.bf16 %v1130, %v1130
      %v1133 = vrot.slane %v1131, 6
      %1134 = vrot.lane.b32.xlu0 %v1133, 127
      %v1135 = vpop.permute.xlu0 %1134
      %v1136 = vrot.slane %v1131, 4
      %1137 = vrot.lane.b32.xlu0 %v1136, 126
      %v1138 = vpop.permute.xlu0 %1137
      %v1139 = vrot.slane %v1131, 2
      %1140 = vrot.lane.b32.xlu0 %v1139, 122
      %v1141 = vpop.permute.xlu0 %1140
      %1142 = vrot.lane.b32.xlu0 %v1131, 121
      %v1143 = vpop.permute.xlu0 %1142
      %1144 = vrot.lane.b32.xlu0 %v1133, 120
      %v1145 = vpop.permute.xlu0 %1144
      %1146 = vrot.lane.b32.xlu0 %v1136, 116
      %v1147 = vpop.permute.xlu0 %1146
      %1148 = vrot.lane.b32.xlu0 %v1139, 115
      %v1149 = vpop.permute.xlu0 %1148
      %1150 = vrot.lane.b32.xlu0 %v1131, 114
      %v1151 = vpop.permute.xlu0 %1150
      %v1154 = vsel %vm451, %v1131, %v1135
      %v1156 = vsel %vm455, %v1154, %v1138
      %v1158 = vsel %vm458, %v1156, %v1141
      %v1162 = vsel %vm451, %v1143, %v1145
      %v1164 = vsel %vm455, %v1162, %v1147
      %v1166 = vsel %vm458, %v1164, %v1149
      %v1169 = vsel %vm451, %v1151, 0
      %1171 = vmatprep.subr.bf16.mxu0 0
      %1172 = vmatpush1.bf16.msra.mxu0 0
      %1173 = vmatprep.subr.bf16.mxu0 0
      %1174 = vmatpush1.bf16.msra.mxu0 0
      %1175 = vmatprep.subr.bf16.mxu0 0
      %1176 = vmatpush1.bf16.msra.mxu0 0
      %1177 = vmatprep.subr.bf16.mxu0 0
      %1178 = vmatpush1.bf16.msra.mxu0 0
      %1179 = vmatprep.subr.bf16.mxu0 0
      %1180 = vmatpush1.bf16.msra.mxu0 0
      %1181 = vmatprep.subr.bf16.mxu0 0
      %1182 = vmatpush1.bf16.msra.mxu0 %v1169
      %1183 = vmatprep.subr.bf16.mxu0 0
      %1184 = vmatpush1.bf16.msra.mxu0 %v1166
      %1185 = vmatprep.subr.bf16.mxu0 0
      %1186 = vmatpush1.bf16.msra.mxu0 %v1158
      %1187 = vmatprep.subr.bf16.mxu0 0
      %1188 = vmatpush2.bf16.msra.mxu0 0
      %1189 = vmatprep.subr.bf16.mxu0 0
      %1190 = vmatpush2.bf16.msra.mxu0 0
      %1191 = vmatprep.subr.bf16.mxu0 0
      %1192 = vmatpush2.bf16.msra.mxu0 0
      %1193 = vmatprep.subr.bf16.mxu0 0
      %1194 = vmatpush2.bf16.msra.mxu0 0
      %1195 = vmatprep.subr.bf16.mxu0 0
      %1196 = vmatpush2.bf16.msra.mxu0 0
      %1197 = vmatprep.subr.bf16.mxu0 0
      %1198 = vmatpush2.bf16.msra.mxu0 0
      %1199 = vmatprep.subr.bf16.mxu0 0
      %1200 = vmatpush2.bf16.msra.mxu0 0
      %1201 = vmatprep.subr.bf16.mxu0 0
      %1202 = vmatpush2.bf16.msra.mxu0 0
      %1203 = vmatprep.mubr.bf16.mxu0 0
      %1204 = vmatmul.mubr.bf16.gmra.mxu0 %v742
      %v1205 = vpop.f32.mrf.mxu0
      %v1206 = vadd.f32 0.0, %v1205
      %v1207 = vpop.f32.mrf.mxu0
      %v1208 = vpop.f32.mrf.mxu0
      %v1209 = vpop.f32.mrf.mxu0
      %1210 = vdwg.mxu0
      %v1211 = vadd.f32 %v1077, %v1206
      %v1212 = vld [vmem:[%s4] sm:$0xf]
      %1214 = vset.pattern.permute.xlu0 0
      %1215 = vperm.xlu0 %1214, %v1212
      %v1216 = vpop.permute.xlu0 %1215
      %v1218 = vadd.f32 %v784, %v1216
      %v1219 = vpack.c.bf16 %v1218, %v1218
      %vm1220 = vcmask 189440
      %1221 = vst.msk [vmem:[%s364] sm:$0x3] %vm1220, %v1219
      %v1222 = vunpack.c.l.bf16 %v1219
      %v1223 = vmul.f32 %v1222, %v412
      %vm1224 = vcmask 191488
      %v1225 = vsel %vm1224, %v1223, 0.0
      %1226 = vadd.xlane.f32.xlu0 %v1225
      %v1227 = vpop.xlane.xlu0 %1226
      %v1228 = vadd.f32 %v1227, 0.0
      %v1229 = vmul.f32 %v1223, %v1222
      %v1230 = vsel %vm1224, %v1229, 0.0
      %1231 = vadd.xlane.f32.xlu0 %v1230
      %v1232 = vpop.xlane.xlu0 %1231
      %v1233 = vadd.f32 %v1232, 0.0
      %v1234 = vld [vmem:[%s4] sm:$0xf]
      %1236 = vset.pattern.permute.xlu0 0
      %1237 = vperm.xlu0 %1236, %v1234
      %v1238 = vpop.permute.xlu0 %1237
      %v1240 = vadd.f32 %v953, %v1238
      %v1241 = vpack.c.bf16 %v1240, %v1240
      %s1242 = scalar_lea.vmem %s364, 2
      %1243 = vst.msk [vmem:[%s1242] sm:$0x3] %vm1220, %v1241
      %v1244 = vunpack.c.l.bf16 %v1241
      %v1245 = vmul.f32 %v1244, %v412
      %v1246 = vsel %vm1224, %v1245, 0.0
      %1247 = vadd.xlane.f32.xlu0 %v1246
      %v1248 = vpop.xlane.xlu0 %1247
      %v1249 = vadd.f32 %v1228, %v1248
      %v1250 = vmul.f32 %v1245, %v1244
      %v1251 = vsel %vm1224, %v1250, 0.0
      %1252 = vadd.xlane.f32.xlu0 %v1251
      %v1253 = vpop.xlane.xlu0 %1252
      %v1254 = vadd.f32 %v1233, %v1253
      %v1255 = vld [vmem:[%s4] sm:$0xf]
      %1257 = vset.pattern.permute.xlu0 0
      %1258 = vperm.xlu0 %1257, %v1255
      %v1259 = vpop.permute.xlu0 %1258
      %v1261 = vadd.f32 %v1122, %v1259
      %v1262 = vpack.c.bf16 %v1261, %v1261
      %s1263 = scalar_lea.vmem %s364, 4
      %1264 = vst.msk [vmem:[%s1263] sm:$0x3] %vm1220, %v1262
      %v1265 = vunpack.c.l.bf16 %v1262
      %v1266 = vmul.f32 %v1265, %v412
      %v1267 = vsel %vm1224, %v1266, 0.0
      %1268 = vadd.xlane.f32.xlu0 %v1267
      %v1269 = vpop.xlane.xlu0 %1268
      %v1270 = vadd.f32 %v1249, %v1269
      %v1271 = vmul.f32 %v1266, %v1265
      %v1272 = vsel %vm1224, %v1271, 0.0
      %1273 = vadd.xlane.f32.xlu0 %v1272
      %v1274 = vpop.xlane.xlu0 %1273
      %v1275 = vadd.f32 %v1254, %v1274
      %v1276 = vld [vmem:[%s4] sm:$0xf]
      %1278 = vset.pattern.permute.xlu0 0
      %1279 = vperm.xlu0 %1278, %v1276
      %v1280 = vpop.permute.xlu0 %1279
      %v1282 = vadd.f32 %v1211, %v1280
      %v1283 = vpack.c.bf16 %v1282, %v1282
      %s1284 = scalar_lea.vmem %s364, 6
      %1285 = vst.msk [vmem:[%s1284] sm:$0x3] %vm1220, %v1283
      %v1286 = vunpack.c.l.bf16 %v1283
      %v1287 = vmul.f32 %v1286, %v412
      %v1288 = vsel %vm1224, %v1287, 0.0
      %1289 = vadd.xlane.f32.xlu0 %v1288
      %v1290 = vpop.xlane.xlu0 %1289
      %v1291 = vadd.f32 %v1270, %v1290
      %v1292 = vmul.f32 %v1287, %v1286
      %v1293 = vsel %vm1224, %v1292, 0.0
      %1294 = vadd.xlane.f32.xlu0 %v1293
      %v1295 = vpop.xlane.xlu0 %1294
      %v1296 = vadd.f32 %v1275, %v1295
      %vm1297 = vcmask 3072
      %1298 = vst.msk [vmem:[%s372] sm:$0xf] %vm1297, %v1291
      %1299 = vst.msk [vmem:[%s379] sm:$0xf] %vm1297, %v1296
      %s1300 = smul.u32 4, %s24
      %p1301 = scmp.lt.s32.totalorder %s23, 1
      %s1302 = scalar_select %p1301, %s23, 1
      %p1303 = scmp.lt.s32.totalorder %s1300, 3
      %s1304 = scalar_select %p1303, %s1300, 3
      %s1305 = smul.addr %s1302, 4
      %s1306 = sadd.s32 %s1304, %s1305
      %s1307 = smul.addr %s1306, 2
      %s1308 = scalar_lea.vmem %s5, %s1307
      %p1309 = scmp.lt.s32.totalorder %s23, 1
      %s1310 = scalar_select %p1309, %s23, 1
      %p1311 = scmp.lt.s32.totalorder %s24, 0
      %s1312 = scalar_select %p1311, %s24, 0
      %s1313 = sadd.s32 %s1312, %s1310
      %s1314 = smul.addr %s1313, 4
      %s1315 = scalar_lea.vmem %s6, %s1314
      %p1316 = scmp.lt.s32.totalorder %s23, 1
      %s1317 = scalar_select %p1316, %s23, 1
      %p1318 = scmp.lt.s32.totalorder %s24, 0
      %s1319 = scalar_select %p1318, %s24, 0
      %s1320 = sadd.s32 %s1319, %s1317
      %s1321 = smul.addr %s1320, 4
      %s1322 = scalar_lea.vmem %s7, %s1321
      // Predicated region
      $region41: #{prm_generator_forward.6} parent=39 // pred_check
        %p1323 = pneg %p173
      $region42: #{prm_generator_forward.6} parent=39 // pred_check_branch
        %1325 = sbr.rel (%p1323) target = $region44
      $region43: #{prm_generator_forward.6} parent=39 // pred_region
        %s1326 = smul.u32 4, %s24
      $region44: #{prm_generator_forward.6} parent=39 // pred_fallthru
        _
      // Predicated region
      $region45: #{prm_generator_forward.6} parent=39 // pred_check
        %p1327 = pneg %p201
      $region46: #{prm_generator_forward.6} parent=39 // pred_check_branch
        %1329 = sbr.rel (%p1327) target = $region48
      $region47: #{prm_generator_forward.6} parent=39 // pred_region
        _
      $region48: #{prm_generator_forward.6} parent=39 // pred_fallthru
        _
      // Predicated region
      $region49: #{prm_generator_forward.6} parent=39 // pred_check
        %p1330 = pneg %p229
      $region50: #{prm_generator_forward.6} parent=39 // pred_check_branch
        %1332 = sbr.rel (%p1330) target = $region52
      $region51: #{prm_generator_forward.6} parent=39 // pred_region
        _
      $region52: #{prm_generator_forward.6} parent=39 // pred_fallthru
        _
    $region40: #{prm_generator_forward.6} parent=5 // pred_fallthru
      _
    %p1333 = scmp.le.s32.totalorder 2, %s14
    // Predicated region
    $region53: #{prm_generator_forward.6} parent=5 // pred_check
      %p1334 = pneg %p1333
    $region54: #{prm_generator_forward.6} parent=5 // pred_check_branch
      %1336 = sbr.rel (%p1334) target = $region56
    $region55: #{prm_generator_forward.6} parent=5 // pred_region
      %s1337 = ssub.s32 %s14, 2
      // Predicated region
      $region57: #{prm_generator_forward.6} parent=55 // pred_check
        %p1338 = pneg %p179
      $region58: #{prm_generator_forward.6} parent=55 // pred_check_branch
        %1340 = sbr.rel (%p1338) target = $region60
      $region59: #{prm_generator_forward.6} parent=55 // pred_region
        %s1341 = smul.u32 4, %s26
        %p1342 = scmp.lt.s32.totalorder %s25, 1
        %s1343 = scalar_select %p1342, %s25, 1
        %p1344 = scmp.lt.s32.totalorder %s1341, 3
        %s1345 = scalar_select %p1344, %s1341, 3
        %s1346 = smul.addr %s1343, 4
        %s1347 = sadd.s32 %s1345, %s1346
        %s1348 = smul.addr %s1347, 2
        %s1349 = scalar_lea.vmem %s5, %s1348
      $region60: #{prm_generator_forward.6} parent=55 // pred_fallthru
        _
      // Predicated region
      $region61: #{prm_generator_forward.6} parent=55 // pred_check
        %p1350 = pneg %p207
      $region62: #{prm_generator_forward.6} parent=55 // pred_check_branch
        %1352 = sbr.rel (%p1350) target = $region64
      $region63: #{prm_generator_forward.6} parent=55 // pred_region
        %p1353 = scmp.lt.s32.totalorder %s25, 1
        %s1354 = scalar_select %p1353, %s25, 1
        %p1355 = scmp.lt.s32.totalorder %s26, 0
        %s1356 = scalar_select %p1355, %s26, 0
        %s1357 = sadd.s32 %s1356, %s1354
        %s1358 = smul.addr %s1357, 4
        %s1359 = scalar_lea.vmem %s6, %s1358
      $region64: #{prm_generator_forward.6} parent=55 // pred_fallthru
        _
      // Predicated region
      $region65: #{prm_generator_forward.6} parent=55 // pred_check
        %p1360 = pneg %p235
      $region66: #{prm_generator_forward.6} parent=55 // pred_check_branch
        %1362 = sbr.rel (%p1360) target = $region68
      $region67: #{prm_generator_forward.6} parent=55 // pred_region
        %p1363 = scmp.lt.s32.totalorder %s25, 1
        %s1364 = scalar_select %p1363, %s25, 1
        %p1365 = scmp.lt.s32.totalorder %s26, 0
        %s1366 = scalar_select %p1365, %s26, 0
        %s1367 = sadd.s32 %s1366, %s1364
        %s1368 = smul.addr %s1367, 4
        %s1369 = scalar_lea.vmem %s7, %s1368
      $region68: #{prm_generator_forward.6} parent=55 // pred_fallthru
        _
    $region56: #{prm_generator_forward.6} parent=5 // pred_fallthru
      _
  $region6: #{prm_generator_forward.6} parent=0 // loop_footer
    %s18 = sadd.s32 1, %s14
  $region7: #{prm_generator_forward.6} parent=0 // loop_footer_branch
    %13 = sbr.rel target = $region3
  $region8: #{prm_generator_forward.6} parent=0 // loop_exit
    _

// kernel: prm_generator_forward.7
$region0: #{prm_generator_forward.7}
  #allocation0 [shape = 'u32[]', space=smem, size = 0x4, offset = 0x4, fixed_abs, tag = 'smem constant byte address 0x4 - core index']
  #allocation1 [shape = 'u32[144,128]{1,0:T(1,128)}', space=vmem, size = 0x12000, scoped, tag = 'internal scratch']
  %s0 = inlined_call_operand.vmem [shape: bf16[2,4,64], index: 0, kind: input, shape index: {}]
  %s1 = inlined_call_operand.vmem [shape: f32[2,1,4,1], index: 1, kind: input, shape index: {}]
  %s2 = inlined_call_operand.vmem [shape: f32[2,1,4,1], index: 2, kind: input, shape index: {}]
  %s3 = inlined_call_operand.vmem [shape: bf16[16,4], index: 3, kind: input, shape index: {}]
  %s4 = inlined_call_operand.vmem [shape: f32[16,1], index: 4, kind: input, shape index: {}]
  %s5 = inlined_call_operand.vmem [shape: bf16[2,16,64], index: 5, kind: output, shape index: {0}]
  %s6 = inlined_call_operand.vmem [shape: f32[2,1,16,1], index: 6, kind: output, shape index: {1}]
  %s7 = inlined_call_operand.vmem [shape: f32[2,1,16,1], index: 7, kind: output, shape index: {2}]
  %8 = xla_tuple %s5, %s6, %s7
  %s9 = sld [smem:[#allocation0]]
  $region69: #{prm_generator_forward.7} parent=0
    _
  %s11 = ssub.s32 1, %s9
  %s12 = scalar_select 0, %s11, %s9
  loop: start=0, step=1, limit=4
  $region2: #{prm_generator_forward.7} parent=0 // loop_pre_header
    _
  $region3: #{prm_generator_forward.7} parent=0 // loop_header
    %s14 = sphi 0, %s18
    %p15 = scmp.ge.s32.totalorder %s14, 4
    %s21 = sphi 0, %s33
    %s22 = sphi 0, %s29
    %s23 = sphi 0, %s21
    %s24 = sphi 0, %s22
    %s25 = sphi 0, %s23
    %s26 = sphi 0, %s24
    %s38 = sphi 0, %s40
    %s41 = sphi 0, %s38
    %s42 = sphi 0, %s41
    %s58 = sphi 0, %s42
    %s64 = sphi 0, %s66
    %s67 = sphi 0, %s64
    %s68 = sphi 0, %s67
    %s84 = sphi 0, %s68
    %s90 = sphi 0, %s92
    %s93 = sphi 0, %s90
    %s94 = sphi 0, %s93
    %s110 = sphi 0, %s94
    %s114 = sphi 0, %s114
    %s116 = sphi 0, %s114
    %s117 = sphi 0, %s116
    %s131 = sphi 0, %s117
    %s135 = sphi 0, %s135
    %s137 = sphi 0, %s135
    %s138 = sphi 0, %s137
    %s152 = sphi 0, %s138
    %s160 = sphi 0, %s162
    %s163 = sphi 0, %s160
    %s164 = sphi 0, %s163
    %s180 = sphi 0, %s164
    %s188 = sphi 0, %s190
    %s191 = sphi 0, %s188
    %s192 = sphi 0, %s191
    %s208 = sphi 0, %s192
    %s216 = sphi 0, %s218
    %s219 = sphi 0, %s216
    %s220 = sphi 0, %s219
    %s236 = sphi 0, %s220
  $region4: #{prm_generator_forward.7} parent=0 // loop_header_branch
    %17 = sbr.rel (%p15) target = $region8
  $region5: #{prm_generator_forward.7} parent=0 // loop_body
    %s19 = ssub.s32 %s14, 1
    %s20 = ssub.s32 %s14, 2
    %s27 = sadd.s32 1, %s22
    %p28 = scmp.ge.s32.totalorder %s27, 1
    %s29 = scalar_select %p28, 0, %s27
    %s30 = sadd.s32 1, %s21
    %s31 = scalar_select %p28, %s30, %s21
    %p32 = scmp.ge.s32.totalorder %s31, 2
    %s33 = scalar_select %p32, 0, %s31
    %s34 = ssub.s32 %s21, %s33
    %s35 = ssub.s32 %s22, %s29
    %s36 = sor.u32 %s34, %s35
    %p37 = scmp.eq.s32.totalorder %s36, 0
    %s39 = sadd.s32 %s38, 1
    %s40 = scalar_select %p37, %s38, %s39
    %p43 = pneg %p37
    %p44 = scmp.eq.s32.totalorder %s14, 1
    %p45 = por %p43, %p44
    %p46 = scmp.ne.s32.totalorder %s38, %s41
    %p47 = scmp.eq.s32.totalorder %s14, 0
    %p48 = por %p46, %p47
    %p49 = scmp.ne.s32.totalorder %s38, %s41
    %p50 = scmp.eq.s32.totalorder %s19, 1
    %p51 = por %p49, %p50
    %p52 = scmp.ne.s32.totalorder %s41, %s42
    %p53 = scmp.eq.s32.totalorder %s19, 0
    %p54 = por %p52, %p53
    %p55 = scmp.ne.s32.totalorder %s41, %s42
    %p56 = scmp.eq.s32.totalorder %s20, 1
    %p57 = por %p55, %p56
    %p59 = scmp.ne.s32.totalorder %s42, %s58
    %p60 = scmp.eq.s32.totalorder %s20, 0
    %p61 = por %p59, %p60
    %s62 = ssub.s32 %s21, %s33
    %p63 = scmp.eq.s32.totalorder %s62, 0
    %s65 = sadd.s32 %s64, 1
    %s66 = scalar_select %p63, %s64, %s65
    %p69 = pneg %p63
    %p70 = scmp.eq.s32.totalorder %s14, 1
    %p71 = por %p69, %p70
    %p72 = scmp.ne.s32.totalorder %s64, %s67
    %p73 = scmp.eq.s32.totalorder %s14, 0
    %p74 = por %p72, %p73
    %p75 = scmp.ne.s32.totalorder %s64, %s67
    %p76 = scmp.eq.s32.totalorder %s19, 1
    %p77 = por %p75, %p76
    %p78 = scmp.ne.s32.totalorder %s67, %s68
    %p79 = scmp.eq.s32.totalorder %s19, 0
    %p80 = por %p78, %p79
    %p81 = scmp.ne.s32.totalorder %s67, %s68
    %p82 = scmp.eq.s32.totalorder %s20, 1
    %p83 = por %p81, %p82
    %p85 = scmp.ne.s32.totalorder %s68, %s84
    %p86 = scmp.eq.s32.totalorder %s20, 0
    %p87 = por %p85, %p86
    %s88 = ssub.s32 %s21, %s33
    %p89 = scmp.eq.s32.totalorder %s88, 0
    %s91 = sadd.s32 %s90, 1
    %s92 = scalar_select %p89, %s90, %s91
    %p95 = pneg %p89
    %p96 = scmp.eq.s32.totalorder %s14, 1
    %p97 = por %p95, %p96
    %p98 = scmp.ne.s32.totalorder %s90, %s93
    %p99 = scmp.eq.s32.totalorder %s14, 0
    %p100 = por %p98, %p99
    %p101 = scmp.ne.s32.totalorder %s90, %s93
    %p102 = scmp.eq.s32.totalorder %s19, 1
    %p103 = por %p101, %p102
    %p104 = scmp.ne.s32.totalorder %s93, %s94
    %p105 = scmp.eq.s32.totalorder %s19, 0
    %p106 = por %p104, %p105
    %p107 = scmp.ne.s32.totalorder %s93, %s94
    %p108 = scmp.eq.s32.totalorder %s20, 1
    %p109 = por %p107, %p108
    %p111 = scmp.ne.s32.totalorder %s94, %s110
    %p112 = scmp.eq.s32.totalorder %s20, 0
    %p113 = por %p111, %p112
    %s115 = sadd.s32 %s114, 1
    %p118 = scmp.eq.s32.totalorder %s14, 1
    %p119 = scmp.ne.s32.totalorder %s114, %s116
    %p120 = scmp.eq.s32.totalorder %s14, 0
    %p121 = por %p119, %p120
    %p122 = scmp.ne.s32.totalorder %s114, %s116
    %p123 = scmp.eq.s32.totalorder %s19, 1
    %p124 = por %p122, %p123
    %p125 = scmp.ne.s32.totalorder %s116, %s117
    %p126 = scmp.eq.s32.totalorder %s19, 0
    %p127 = por %p125, %p126
    %p128 = scmp.ne.s32.totalorder %s116, %s117
    %p129 = scmp.eq.s32.totalorder %s20, 1
    %p130 = por %p128, %p129
    %p132 = scmp.ne.s32.totalorder %s117, %s131
    %p133 = scmp.eq.s32.totalorder %s20, 0
    %p134 = por %p132, %p133
    %s136 = sadd.s32 %s135, 1
    %p139 = scmp.eq.s32.totalorder %s14, 1
    %p140 = scmp.ne.s32.totalorder %s135, %s137
    %p141 = scmp.eq.s32.totalorder %s14, 0
    %p142 = por %p140, %p141
    %p143 = scmp.ne.s32.totalorder %s135, %s137
    %p144 = scmp.eq.s32.totalorder %s19, 1
    %p145 = por %p143, %p144
    %p146 = scmp.ne.s32.totalorder %s137, %s138
    %p147 = scmp.eq.s32.totalorder %s19, 0
    %p148 = por %p146, %p147
    %p149 = scmp.ne.s32.totalorder %s137, %s138
    %p150 = scmp.eq.s32.totalorder %s20, 1
    %p151 = por %p149, %p150
    %p153 = scmp.ne.s32.totalorder %s138, %s152
    %p154 = scmp.eq.s32.totalorder %s20, 0
    %p155 = por %p153, %p154
    %s156 = ssub.s32 %s21, %s33
    %s157 = ssub.s32 %s22, %s29
    %s158 = sor.u32 %s156, %s157
    %p159 = scmp.eq.s32.totalorder %s158, 0
    %s161 = sadd.s32 %s160, 1
    %s162 = scalar_select %p159, %s160, %s161
    %p165 = pneg %p159
    %p166 = scmp.eq.s32.totalorder %s14, 1
    %p167 = por %p165, %p166
    %p168 = scmp.ne.s32.totalorder %s160, %s163
    %p169 = scmp.eq.s32.totalorder %s14, 0
    %p170 = por %p168, %p169
    %p171 = scmp.ne.s32.totalorder %s160, %s163
    %p172 = scmp.eq.s32.totalorder %s19, 1
    %p173 = por %p171, %p172
    %p174 = scmp.ne.s32.totalorder %s163, %s164
    %p175 = scmp.eq.s32.totalorder %s19, 0
    %p176 = por %p174, %p175
    %p177 = scmp.ne.s32.totalorder %s163, %s164
    %p178 = scmp.eq.s32.totalorder %s20, 1
    %p179 = por %p177, %p178
    %p181 = scmp.ne.s32.totalorder %s164, %s180
    %p182 = scmp.eq.s32.totalorder %s20, 0
    %p183 = por %p181, %p182
    %s184 = ssub.s32 %s21, %s33
    %s185 = ssub.s32 %s22, %s29
    %s186 = sor.u32 %s184, %s185
    %p187 = scmp.eq.s32.totalorder %s186, 0
    %s189 = sadd.s32 %s188, 1
    %s190 = scalar_select %p187, %s188, %s189
    %p193 = pneg %p187
    %p194 = scmp.eq.s32.totalorder %s14, 1
    %p195 = por %p193, %p194
    %p196 = scmp.ne.s32.totalorder %s188, %s191
    %p197 = scmp.eq.s32.totalorder %s14, 0
    %p198 = por %p196, %p197
    %p199 = scmp.ne.s32.totalorder %s188, %s191
    %p200 = scmp.eq.s32.totalorder %s19, 1
    %p201 = por %p199, %p200
    %p202 = scmp.ne.s32.totalorder %s191, %s192
    %p203 = scmp.eq.s32.totalorder %s19, 0
    %p204 = por %p202, %p203
    %p205 = scmp.ne.s32.totalorder %s191, %s192
    %p206 = scmp.eq.s32.totalorder %s20, 1
    %p207 = por %p205, %p206
    %p209 = scmp.ne.s32.totalorder %s192, %s208
    %p210 = scmp.eq.s32.totalorder %s20, 0
    %p211 = por %p209, %p210
    %s212 = ssub.s32 %s21, %s33
    %s213 = ssub.s32 %s22, %s29
    %s214 = sor.u32 %s212, %s213
    %p215 = scmp.eq.s32.totalorder %s214, 0
    %s217 = sadd.s32 %s216, 1
    %s218 = scalar_select %p215, %s216, %s217
    %p221 = pneg %p215
    %p222 = scmp.eq.s32.totalorder %s14, 1
    %p223 = por %p221, %p222
    %p224 = scmp.ne.s32.totalorder %s216, %s219
    %p225 = scmp.eq.s32.totalorder %s14, 0
    %p226 = por %p224, %p225
    %p227 = scmp.ne.s32.totalorder %s216, %s219
    %p228 = scmp.eq.s32.totalorder %s19, 1
    %p229 = por %p227, %p228
    %p230 = scmp.ne.s32.totalorder %s219, %s220
    %p231 = scmp.eq.s32.totalorder %s19, 0
    %p232 = por %p230, %p231
    %p233 = scmp.ne.s32.totalorder %s219, %s220
    %p234 = scmp.eq.s32.totalorder %s20, 1
    %p235 = por %p233, %p234
    %p237 = scmp.ne.s32.totalorder %s220, %s236
    %p238 = scmp.eq.s32.totalorder %s20, 0
    %p239 = por %p237, %p238
    %p240 = scmp.le.s32.totalorder 1, %s14
    %p241 = scmp.lt.s32.totalorder %s14, 3
    %p242 = pnand %p240, %p241
    %p243 = pneg %p242
    // Predicated region
    $region9: #{prm_generator_forward.7} parent=5 // pred_check
      _
    $region10: #{prm_generator_forward.7} parent=5 // pred_check_branch
      %245 = sbr.rel (%p242) target = $region12
    $region11: #{prm_generator_forward.7} parent=5 // pred_region
      %s246 = ssub.s32 %s14, 1
      // Predicated region
      $region13: #{prm_generator_forward.7} parent=11 // pred_check
        %p247 = pneg %p127
      $region14: #{prm_generator_forward.7} parent=11 // pred_check_branch
        %249 = sbr.rel (%p247) target = $region16
      $region15: #{prm_generator_forward.7} parent=11 // pred_region
        _
      $region16: #{prm_generator_forward.7} parent=11 // pred_fallthru
        _
      // Predicated region
      $region17: #{prm_generator_forward.7} parent=11 // pred_check
        %p250 = pneg %p148
      $region18: #{prm_generator_forward.7} parent=11 // pred_check_branch
        %252 = sbr.rel (%p250) target = $region20
      $region19: #{prm_generator_forward.7} parent=11 // pred_region
        _
      $region20: #{prm_generator_forward.7} parent=11 // pred_fallthru
        _
    $region12: #{prm_generator_forward.7} parent=5 // pred_fallthru
      _
    %p253 = scmp.lt.s32.totalorder %s14, 2
    // Predicated region
    $region21: #{prm_generator_forward.7} parent=5 // pred_check
      %p254 = pneg %p253
    $region22: #{prm_generator_forward.7} parent=5 // pred_check_branch
      %256 = sbr.rel (%p254) target = $region24
    $region23: #{prm_generator_forward.7} parent=5 // pred_region
      // Predicated region
      $region25: #{prm_generator_forward.7} parent=23 // pred_check
        %p257 = pneg %p48
      $region26: #{prm_generator_forward.7} parent=23 // pred_check_branch
        %259 = sbr.rel (%p257) target = $region28
      $region27: #{prm_generator_forward.7} parent=23 // pred_region
        %p260 = scmp.lt.s32.totalorder %s21, 1
        %s261 = scalar_select %p260, %s21, 1
        %p262 = scmp.lt.s32.totalorder %s22, 0
        %s263 = scalar_select %p262, %s22, 0
        %s264 = sadd.s32 %s263, %s261
        %s265 = smul.addr %s264, 2
        %s266 = scalar_lea.vmem %s0, %s265
      $region28: #{prm_generator_forward.7} parent=23 // pred_fallthru
        _
      // Predicated region
      $region29: #{prm_generator_forward.7} parent=23 // pred_check
        %p267 = pneg %p74
      $region30: #{prm_generator_forward.7} parent=23 // pred_check_branch
        %269 = sbr.rel (%p267) target = $region32
      $region31: #{prm_generator_forward.7} parent=23 // pred_region
        %p270 = scmp.lt.s32.totalorder %s21, 1
        %s271 = scalar_select %p270, %s21, 1
        %s272 = smul.addr %s271, 4
        %s273 = scalar_lea.vmem %s1, %s272
      $region32: #{prm_generator_forward.7} parent=23 // pred_fallthru
        _
      // Predicated region
      $region33: #{prm_generator_forward.7} parent=23 // pred_check
        %p274 = pneg %p100
      $region34: #{prm_generator_forward.7} parent=23 // pred_check_branch
        %276 = sbr.rel (%p274) target = $region36
      $region35: #{prm_generator_forward.7} parent=23 // pred_region
        %p277 = scmp.lt.s32.totalorder %s21, 1
        %s278 = scalar_select %p277, %s21, 1
        %s279 = smul.addr %s278, 4
        %s280 = scalar_lea.vmem %s2, %s279
      $region36: #{prm_generator_forward.7} parent=23 // pred_fallthru
        _
    $region24: #{prm_generator_forward.7} parent=5 // pred_fallthru
      _
    %p281 = scmp.le.s32.totalorder 1, %s14
    %p282 = scmp.lt.s32.totalorder %s14, 3
    %p283 = pnand %p281, %p282
    %p284 = pneg %p283
    // Predicated region
    $region37: #{prm_generator_forward.7} parent=5 // pred_check
      _
    $region38: #{prm_generator_forward.7} parent=5 // pred_check_branch
      %286 = sbr.rel (%p283) target = $region40
    $region39: #{prm_generator_forward.7} parent=5 // pred_region
      %s287 = ssub.s32 %s14, 1
      %p288 = scmp.lt.s32.totalorder %s23, 1
      %s289 = scalar_select %p288, %s23, 1
      %p290 = scmp.lt.s32.totalorder %s24, 0
      %s291 = scalar_select %p290, %s24, 0
      %s292 = sadd.s32 %s291, %s289
      %s293 = smul.addr %s292, 2
      %s294 = scalar_lea.vmem %s0, %s293
      %p295 = pneg %p54
      %p296 = pneg %p51
      %p297 = scmp.lt.s32.totalorder %s23, 1
      %s298 = scalar_select %p297, %s23, 1
      %s299 = smul.addr %s298, 4
      %s300 = scalar_lea.vmem %s1, %s299
      %p301 = pneg %p80
      %p302 = pneg %p77
      %p303 = scmp.lt.s32.totalorder %s23, 1
      %s304 = scalar_select %p303, %s23, 1
      %s305 = smul.addr %s304, 4
      %s306 = scalar_lea.vmem %s2, %s305
      %p307 = pneg %p106
      %p308 = pneg %p103
      %p309 = pneg %p127
      %p310 = pneg %p124
      %p311 = pneg %p148
      %p312 = pneg %p145
      %p313 = pneg %p176
      %p314 = pneg %p173
      %p315 = scmp.lt.s32.totalorder %s23, 1
      %s316 = scalar_select %p315, %s23, 1
      %p317 = scmp.lt.s32.totalorder %s24, 0
      %s318 = scalar_select %p317, %s24, 0
      %s319 = smul.addr %s316, 2
      %s320 = sadd.s32 %s318, %s319
      %s321 = smul.addr %s320, 4
      %s322 = scalar_lea.vmem %s5, %s321
      %p323 = pneg %p204
      %p324 = pneg %p201
      %p325 = scmp.lt.s32.totalorder %s23, 1
      %s326 = scalar_select %p325, %s23, 1
      %p327 = scmp.lt.s32.totalorder %s24, 0
      %s328 = scalar_select %p327, %s24, 0
      %s329 = smul.addr %s328, 2
      %s330 = smul.addr %s326, 2
      %s331 = sadd.s32 %s329, %s330
      %s332 = smul.addr %s331, 8
      %s333 = scalar_lea.vmem %s6, %s332
      %p334 = pneg %p232
      %p335 = pneg %p229
      %p336 = scmp.lt.s32.totalorder %s23, 1
      %s337 = scalar_select %p336, %s23, 1
      %p338 = scmp.lt.s32.totalorder %s24, 0
      %s339 = scalar_select %p338, %s24, 0
      %s340 = smul.addr %s339, 2
      %s341 = smul.addr %s337, 2
      %s342 = sadd.s32 %s340, %s341
      %s343 = smul.addr %s342, 8
      %s344 = scalar_lea.vmem %s7, %s343
      %p345 = scmp.lt.s32.totalorder %s23, 1
      %s346 = scalar_select %p345, %s23, 1
      %p347 = scmp.lt.s32.totalorder %s24, 0
      %s348 = scalar_select %p347, %s24, 0
      %s349 = sadd.s32 %s348, %s346
      %s350 = smul.addr %s349, 2
      %s351 = scalar_lea.vmem %s0, %s350
      %p352 = scmp.lt.s32.totalorder %s23, 1
      %s353 = scalar_select %p352, %s23, 1
      %s354 = smul.addr %s353, 4
      %s355 = scalar_lea.vmem %s1, %s354
      %p356 = scmp.lt.s32.totalorder %s23, 1
      %s357 = scalar_select %p356, %s23, 1
      %s358 = smul.addr %s357, 4
      %s359 = scalar_lea.vmem %s2, %s358
      %p360 = scmp.lt.s32.totalorder %s23, 1
      %s361 = scalar_select %p360, %s23, 1
      %p362 = scmp.lt.s32.totalorder %s24, 0
      %s363 = scalar_select %p362, %s24, 0
      %s364 = smul.addr %s361, 2
      %s365 = sadd.s32 %s363, %s364
      %s366 = smul.addr %s365, 4
      %s367 = scalar_lea.vmem %s5, %s366
      %p368 = scmp.lt.s32.totalorder %s23, 1
      %s369 = scalar_select %p368, %s23, 1
      %p370 = scmp.lt.s32.totalorder %s24, 0
      %s371 = scalar_select %p370, %s24, 0
      %s372 = smul.addr %s371, 2
      %s373 = smul.addr %s369, 2
      %s374 = sadd.s32 %s372, %s373
      %s375 = smul.addr %s374, 8
      %s376 = scalar_lea.vmem %s6, %s375
      %p377 = scmp.lt.s32.totalorder %s23, 1
      %s378 = scalar_select %p377, %s23, 1
      %p379 = scmp.lt.s32.totalorder %s24, 0
      %s380 = scalar_select %p379, %s24, 0
      %s381 = smul.addr %s380, 2
      %s382 = smul.addr %s378, 2
      %s383 = sadd.s32 %s381, %s382
      %s384 = smul.addr %s383, 8
      %s385 = scalar_lea.vmem %s7, %s384
      %v387 = vld [vmem:[%s355] sm:$0xf]
      %v388 = vld [vmem:[%s359] sm:$0xf]
      %v389 = vadd.f32 %v387, 0.0
      %v390 = vadd.f32 %v388, 0.0
      %v391 = vmul.f32 %v389, 0.015625
      %v392 = vmul.f32 %v390, 0.015625
      %v393 = vmul.f32 %v391, %v391
      %v394 = vsub.f32 %v392, %v393
      %v395 = vmax.f32 %v394, 0.0
      %v396 = vadd.f32 %v395, 1e-05
      %v397 = vrsqrt.pop %v396
      %v398 = vld [vmem:[%s351] sm:$0x3]
      %v399 = vunpack.c.l.bf16 %v398
      %401 = vset.pattern.permute.xlu0 0
      %402 = vperm.xlu0 %401, %v391
      %v403 = vpop.permute.xlu0 %402
      %v405 = vsub.f32 %v399, %v403
      %407 = vset.pattern.permute.xlu0 0
      %408 = vperm.xlu0 %407, %v397
      %v409 = vpop.permute.xlu0 %408
      %v411 = vmul.f32 %v405, %v409
      %vm412 = vcmp.ge.f32.partialorder %v411, 0.0
      %v413 = vmul.f32 %v411, 0.2
      %v414 = vsel %vm412, %v411, %v413
      %v415 = vpack.c.bf16 %v414, %v414
      %v416 = vld [vmem:[%s3] sm:$0xf]
      %v417 = vld [vmem:[%s3 + $0x4] sm:$0xf]
      %v418 = vld [vmem:[%s4] sm:$0xff]
      %v419 = vld [vmem:[%s4 + $0x8] sm:$0xff]
      %421 = vset.pattern.permute.xlu0 0
      %422 = vperm.xlu0 %421, %v418
      %v423 = vpop.permute.xlu0 %422
      %426 = vset.pattern.permute.xlu0 0
      %427 = vperm.xlu0 %426, %v419
      %v428 = vpop.permute.xlu0 %427
      %v432 = vunpack.c.l.b16 %v416
      %v433 = vunpack.c.l.b16 %v417
      %v434 = vpack.c.b16 %v433, %v432
      %vm435 = vcmask 31744
      %v437 = vsel %vm435, %v434, 0
      %vm439 = vcmask 1041408
      %v441 = vsel %vm439, %v415, 0
      %443 = vmatprep.subr.bf16.mxu0 0
      %444 = vmatpush1.bf16.msra.mxu0 0
      %445 = vmatprep.subr.bf16.mxu0 0
      %446 = vmatpush1.bf16.msra.mxu0 0
      %447 = vmatprep.subr.bf16.mxu0 0
      %448 = vmatpush1.bf16.msra.mxu0 0
      %449 = vmatprep.subr.bf16.mxu0 0
      %450 = vmatpush1.bf16.msra.mxu0 0
      %451 = vmatprep.subr.bf16.mxu0 0
      %452 = vmatpush1.bf16.msra.mxu0 0
      %453 = vmatprep.subr.bf16.mxu0 0
      %454 = vmatpush1.bf16.msra.mxu0 0
      %455 = vmatprep.subr.bf16.mxu0 0
      %456 = vmatpush1.bf16.msra.mxu0 0
      %457 = vmatprep.subr.bf16.mxu0 0
      %458 = vmatpush1.bf16.msra.mxu0 %v441
      %459 = vmatprep.subr.bf16.mxu0 0
      %460 = vmatpush2.bf16.msra.mxu0 0
      %461 = vmatprep.subr.bf16.mxu0 0
      %462 = vmatpush2.bf16.msra.mxu0 0
      %463 = vmatprep.subr.bf16.mxu0 0
      %464 = vmatpush2.bf16.msra.mxu0 0
      %465 = vmatprep.subr.bf16.mxu0 0
      %466 = vmatpush2.bf16.msra.mxu0 0
      %467 = vmatprep.subr.bf16.mxu0 0
      %468 = vmatpush2.bf16.msra.mxu0 0
      %469 = vmatprep.subr.bf16.mxu0 0
      %470 = vmatpush2.bf16.msra.mxu0 0
      %471 = vmatprep.subr.bf16.mxu0 0
      %472 = vmatpush2.bf16.msra.mxu0 0
      %473 = vmatprep.subr.bf16.mxu0 0
      %474 = vmatpush2.bf16.msra.mxu0 0
      %475 = vmatprep.mubr.bf16.mxu0 0
      %476 = vmatmul.mubr.bf16.gmra.mxu0 %v437
      %v477 = vpop.f32.mrf.mxu0
      %v478 = vadd.f32 %v423, %v477
      %v479 = vpop.f32.mrf.mxu0
      %v480 = vpop.f32.mrf.mxu0
      %v481 = vadd.f32 %v428, %v480
      %v482 = vpop.f32.mrf.mxu0
      %483 = vdwg.mxu0
      %v484 = vpack.c.bf16 %v481, %v478
      %v486 = vunpack.c.l.b16 %v484
      %v487 = vunpack.c.h.b16 %v484
      %v488 = vpack.c.b16 %v486, %v486
      %v489 = vpack.c.b16 %v487, %v487
      %vm492 = vcmask 519168
      %493 = vst.msk [vmem:[%s367] sm:$0xf] %vm492, %v488
      %494 = vst.msk [vmem:[%s367 + $0x4] sm:$0xf] %vm492, %v489
      %v495 = vunpack.c.l.bf16 %v484
      %v496 = vunpack.c.h.bf16 %v484
      %vm497 = vcmask 523264
      %v498 = vsel %vm497, %v495, 0.0
      %499 = vadd.xlane.f32.xlu0 %v498
      %v500 = vpop.xlane.xlu0 %499
      %v501 = vsel %vm497, %v496, 0.0
      %502 = vadd.xlane.f32.xlu0 %v501
      %v503 = vpop.xlane.xlu0 %502
      %vm504 = vcmask 7168
      %505 = vst.msk [vmem:[%s376] sm:$0xff] %vm504, %v500
      %506 = vst.msk [vmem:[%s376 + $0x8] sm:$0xff] %vm504, %v503
      %v507 = vmul.f32 %v495, %v495
      %v508 = vmul.f32 %v496, %v496
      %v509 = vsel %vm497, %v507, 0.0
      %510 = vadd.xlane.f32.xlu0 %v509
      %v511 = vpop.xlane.xlu0 %510
      %v512 = vsel %vm497, %v508, 0.0
      %513 = vadd.xlane.f32.xlu0 %v512
      %v514 = vpop.xlane.xlu0 %513
      %515 = vst.msk [vmem:[%s385] sm:$0xff] %vm504, %v511
      %516 = vst.msk [vmem:[%s385 + $0x8] sm:$0xff] %vm504, %v514
      %p517 = scmp.lt.s32.totalorder %s23, 1
      %s518 = scalar_select %p517, %s23, 1
      %p519 = scmp.lt.s32.totalorder %s24, 0
      %s520 = scalar_select %p519, %s24, 0
      %s521 = smul.addr %s518, 2
      %s522 = sadd.s32 %s520, %s521
      %s523 = smul.addr %s522, 4
      %s524 = scalar_lea.vmem %s5, %s523
      %p525 = scmp.lt.s32.totalorder %s23, 1
      %s526 = scalar_select %p525, %s23, 1
      %p527 = scmp.lt.s32.totalorder %s24, 0
      %s528 = scalar_select %p527, %s24, 0
      %s529 = smul.addr %s528, 2
      %s530 = smul.addr %s526, 2
      %s531 = sadd.s32 %s529, %s530
      %s532 = smul.addr %s531, 8
      %s533 = scalar_lea.vmem %s6, %s532
      %p534 = scmp.lt.s32.totalorder %s23, 1
      %s535 = scalar_select %p534, %s23, 1
      %p536 = scmp.lt.s32.totalorder %s24, 0
      %s537 = scalar_select %p536, %s24, 0
      %s538 = smul.addr %s537, 2
      %s539 = smul.addr %s535, 2
      %s540 = sadd.s32 %s538, %s539
      %s541 = smul.addr %s540, 8
      %s542 = scalar_lea.vmem %s7, %s541
      // Predicated region
      $region41: #{prm_generator_forward.7} parent=39 // pred_check
        %p543 = pneg %p173
      $region42: #{prm_generator_forward.7} parent=39 // pred_check_branch
        %545 = sbr.rel (%p543) target = $region44
      $region43: #{prm_generator_forward.7} parent=39 // pred_region
        _
      $region44: #{prm_generator_forward.7} parent=39 // pred_fallthru
        _
      // Predicated region
      $region45: #{prm_generator_forward.7} parent=39 // pred_check
        %p546 = pneg %p201
      $region46: #{prm_generator_forward.7} parent=39 // pred_check_branch
        %548 = sbr.rel (%p546) target = $region48
      $region47: #{prm_generator_forward.7} parent=39 // pred_region
        _
      $region48: #{prm_generator_forward.7} parent=39 // pred_fallthru
        _
      // Predicated region
      $region49: #{prm_generator_forward.7} parent=39 // pred_check
        %p549 = pneg %p229
      $region50: #{prm_generator_forward.7} parent=39 // pred_check_branch
        %551 = sbr.rel (%p549) target = $region52
      $region51: #{prm_generator_forward.7} parent=39 // pred_region
        _
      $region52: #{prm_generator_forward.7} parent=39 // pred_fallthru
        _
    $region40: #{prm_generator_forward.7} parent=5 // pred_fallthru
      _
    %p552 = scmp.le.s32.totalorder 2, %s14
    // Predicated region
    $region53: #{prm_generator_forward.7} parent=5 // pred_check
      %p553 = pneg %p552
    $region54: #{prm_generator_forward.7} parent=5 // pred_check_branch
      %555 = sbr.rel (%p553) target = $region56
    $region55: #{prm_generator_forward.7} parent=5 // pred_region
      %s556 = ssub.s32 %s14, 2
      // Predicated region
      $region57: #{prm_generator_forward.7} parent=55 // pred_check
        %p557 = pneg %p179
      $region58: #{prm_generator_forward.7} parent=55 // pred_check_branch
        %559 = sbr.rel (%p557) target = $region60
      $region59: #{prm_generator_forward.7} parent=55 // pred_region
        %p560 = scmp.lt.s32.totalorder %s25, 1
        %s561 = scalar_select %p560, %s25, 1
        %p562 = scmp.lt.s32.totalorder %s26, 0
        %s563 = scalar_select %p562, %s26, 0
        %s564 = smul.addr %s561, 2
        %s565 = sadd.s32 %s563, %s564
        %s566 = smul.addr %s565, 4
        %s567 = scalar_lea.vmem %s5, %s566
      $region60: #{prm_generator_forward.7} parent=55 // pred_fallthru
        _
      // Predicated region
      $region61: #{prm_generator_forward.7} parent=55 // pred_check
        %p568 = pneg %p207
      $region62: #{prm_generator_forward.7} parent=55 // pred_check_branch
        %570 = sbr.rel (%p568) target = $region64
      $region63: #{prm_generator_forward.7} parent=55 // pred_region
        %p571 = scmp.lt.s32.totalorder %s25, 1
        %s572 = scalar_select %p571, %s25, 1
        %p573 = scmp.lt.s32.totalorder %s26, 0
        %s574 = scalar_select %p573, %s26, 0
        %s575 = smul.addr %s574, 2
        %s576 = smul.addr %s572, 2
        %s577 = sadd.s32 %s575, %s576
        %s578 = smul.addr %s577, 8
        %s579 = scalar_lea.vmem %s6, %s578
      $region64: #{prm_generator_forward.7} parent=55 // pred_fallthru
        _
      // Predicated region
      $region65: #{prm_generator_forward.7} parent=55 // pred_check
        %p580 = pneg %p235
      $region66: #{prm_generator_forward.7} parent=55 // pred_check_branch
        %582 = sbr.rel (%p580) target = $region68
      $region67: #{prm_generator_forward.7} parent=55 // pred_region
        %p583 = scmp.lt.s32.totalorder %s25, 1
        %s584 = scalar_select %p583, %s25, 1
        %p585 = scmp.lt.s32.totalorder %s26, 0
        %s586 = scalar_select %p585, %s26, 0
        %s587 = smul.addr %s586, 2
        %s588 = smul.addr %s584, 2
        %s589 = sadd.s32 %s587, %s588
        %s590 = smul.addr %s589, 8
        %s591 = scalar_lea.vmem %s7, %s590
      $region68: #{prm_generator_forward.7} parent=55 // pred_fallthru
        _
    $region56: #{prm_generator_forward.7} parent=5 // pred_fallthru
      _
  $region6: #{prm_generator_forward.7} parent=0 // loop_footer
    %s18 = sadd.s32 1, %s14
  $region7: #{prm_generator_forward.7} parent=0 // loop_footer_branch
    %13 = sbr.rel target = $region3
  $region8: #{prm_generator_forward.7} parent=0 // loop_exit
    _

// kernel: prm_generator_forward.8
$region0: #{prm_generator_forward.8}
  #allocation0 [shape = 'u32[]', space=smem, size = 0x4, offset = 0x4, fixed_abs, tag = 'smem constant byte address 0x4 - core index']
  #allocation1 [shape = 'u32[144,128]{1,0:T(1,128)}', space=vmem, size = 0x12000, scoped, tag = 'internal scratch']
  %s0 = inlined_call_operand.vmem [shape: f32[2,16,64], index: 0, kind: input, shape index: {}]
  %s1 = inlined_call_operand.vmem [shape: bf16[2,16,64], index: 1, kind: input, shape index: {}]
  %s2 = inlined_call_operand.vmem [shape: f32[2,1,16,1], index: 2, kind: input, shape index: {}]
  %s3 = inlined_call_operand.vmem [shape: f32[2,1,16,1], index: 3, kind: input, shape index: {}]
  %s4 = inlined_call_operand.vmem [shape: bf16[16,16], index: 4, kind: input, shape index: {}]
  %s5 = inlined_call_operand.vmem [shape: bf16[16,16], index: 5, kind: input, shape index: {}]
  %s6 = inlined_call_operand.vmem [shape: f32[16,1], index: 6, kind: input, shape index: {}]
  %s7 = inlined_call_operand.vmem [shape: bf16[2,16,64], index: 7, kind: output, shape index: {0}]
  %s8 = inlined_call_operand.vmem [shape: f32[2,1,16,1], index: 8, kind: output, shape index: {1}]
  %s9 = inlined_call_operand.vmem [shape: f32[2,1,16,1], index: 9, kind: output, shape index: {2}]
  %10 = xla_tuple %s7, %s8, %s9
  %s11 = sld [smem:[#allocation0]]
  $region77: #{prm_generator_forward.8} parent=0
    _
  %s13 = ssub.s32 1, %s11
  %s14 = scalar_select 0, %s13, %s11
  loop: start=0, step=1, limit=4
  $region2: #{prm_generator_forward.8} parent=0 // loop_pre_header
    _
  $region3: #{prm_generator_forward.8} parent=0 // loop_header
    %s16 = sphi 0, %s20
    %p17 = scmp.ge.s32.totalorder %s16, 4
    %s23 = sphi 0, %s35
    %s24 = sphi 0, %s31
    %s25 = sphi 0, %s23
    %s26 = sphi 0, %s24
    %s27 = sphi 0, %s25
    %s28 = sphi 0, %s26
    %s40 = sphi 0, %s42
    %s43 = sphi 0, %s40
    %s44 = sphi 0, %s43
    %s60 = sphi 0, %s44
    %s68 = sphi 0, %s70
    %s71 = sphi 0, %s68
    %s72 = sphi 0, %s71
    %s88 = sphi 0, %s72
    %s94 = sphi 0, %s96
    %s97 = sphi 0, %s94
    %s98 = sphi 0, %s97
    %s114 = sphi 0, %s98
    %s120 = sphi 0, %s122
    %s123 = sphi 0, %s120
    %s124 = sphi 0, %s123
    %s140 = sphi 0, %s124
    %s144 = sphi 0, %s144
    %s146 = sphi 0, %s144
    %s147 = sphi 0, %s146
    %s161 = sphi 0, %s147
    %s165 = sphi 0, %s165
    %s167 = sphi 0, %s165
    %s168 = sphi 0, %s167
    %s182 = sphi 0, %s168
    %s186 = sphi 0, %s186
    %s188 = sphi 0, %s186
    %s189 = sphi 0, %s188
    %s203 = sphi 0, %s189
    %s211 = sphi 0, %s213
    %s214 = sphi 0, %s211
    %s215 = sphi 0, %s214
    %s231 = sphi 0, %s215
    %s239 = sphi 0, %s241
    %s242 = sphi 0, %s239
    %s243 = sphi 0, %s242
    %s259 = sphi 0, %s243
    %s267 = sphi 0, %s269
    %s270 = sphi 0, %s267
    %s271 = sphi 0, %s270
    %s287 = sphi 0, %s271
  $region4: #{prm_generator_forward.8} parent=0 // loop_header_branch
    %19 = sbr.rel (%p17) target = $region8
  $region5: #{prm_generator_forward.8} parent=0 // loop_body
    %s21 = ssub.s32 %s16, 1
    %s22 = ssub.s32 %s16, 2
    %s29 = sadd.s32 1, %s24
    %p30 = scmp.ge.s32.totalorder %s29, 1
    %s31 = scalar_select %p30, 0, %s29
    %s32 = sadd.s32 1, %s23
    %s33 = scalar_select %p30, %s32, %s23
    %p34 = scmp.ge.s32.totalorder %s33, 2
    %s35 = scalar_select %p34, 0, %s33
    %s36 = ssub.s32 %s23, %s35
    %s37 = ssub.s32 %s24, %s31
    %s38 = sor.u32 %s36, %s37
    %p39 = scmp.eq.s32.totalorder %s38, 0
    %s41 = sadd.s32 %s40, 1
    %s42 = scalar_select %p39, %s40, %s41
    %p45 = pneg %p39
    %p46 = scmp.eq.s32.totalorder %s16, 1
    %p47 = por %p45, %p46
    %p48 = scmp.ne.s32.totalorder %s40, %s43
    %p49 = scmp.eq.s32.totalorder %s16, 0
    %p50 = por %p48, %p49
    %p51 = scmp.ne.s32.totalorder %s40, %s43
    %p52 = scmp.eq.s32.totalorder %s21, 1
    %p53 = por %p51, %p52
    %p54 = scmp.ne.s32.totalorder %s43, %s44
    %p55 = scmp.eq.s32.totalorder %s21, 0
    %p56 = por %p54, %p55
    %p57 = scmp.ne.s32.totalorder %s43, %s44
    %p58 = scmp.eq.s32.totalorder %s22, 1
    %p59 = por %p57, %p58
    %p61 = scmp.ne.s32.totalorder %s44, %s60
    %p62 = scmp.eq.s32.totalorder %s22, 0
    %p63 = por %p61, %p62
    %s64 = ssub.s32 %s23, %s35
    %s65 = ssub.s32 %s24, %s31
    %s66 = sor.u32 %s64, %s65
    %p67 = scmp.eq.s32.totalorder %s66, 0
    %s69 = sadd.s32 %s68, 1
    %s70 = scalar_select %p67, %s68, %s69
    %p73 = pneg %p67
    %p74 = scmp.eq.s32.totalorder %s16, 1
    %p75 = por %p73, %p74
    %p76 = scmp.ne.s32.totalorder %s68, %s71
    %p77 = scmp.eq.s32.totalorder %s16, 0
    %p78 = por %p76, %p77
    %p79 = scmp.ne.s32.totalorder %s68, %s71
    %p80 = scmp.eq.s32.totalorder %s21, 1
    %p81 = por %p79, %p80
    %p82 = scmp.ne.s32.totalorder %s71, %s72
    %p83 = scmp.eq.s32.totalorder %s21, 0
    %p84 = por %p82, %p83
    %p85 = scmp.ne.s32.totalorder %s71, %s72
    %p86 = scmp.eq.s32.totalorder %s22, 1
    %p87 = por %p85, %p86
    %p89 = scmp.ne.s32.totalorder %s72, %s88
    %p90 = scmp.eq.s32.totalorder %s22, 0
    %p91 = por %p89, %p90
    %s92 = ssub.s32 %s23, %s35
    %p93 = scmp.eq.s32.totalorder %s92, 0
    %s95 = sadd.s32 %s94, 1
    %s96 = scalar_select %p93, %s94, %s95
    %p99 = pneg %p93
    %p100 = scmp.eq.s32.totalorder %s16, 1
    %p101 = por %p99, %p100
    %p102 = scmp.ne.s32.totalorder %s94, %s97
    %p103 = scmp.eq.s32.totalorder %s16, 0
    %p104 = por %p102, %p103
    %p105 = scmp.ne.s32.totalorder %s94, %s97
    %p106 = scmp.eq.s32.totalorder %s21, 1
    %p107 = por %p105, %p106
    %p108 = scmp.ne.s32.totalorder %s97, %s98
    %p109 = scmp.eq.s32.totalorder %s21, 0
    %p110 = por %p108, %p109
    %p111 = scmp.ne.s32.totalorder %s97, %s98
    %p112 = scmp.eq.s32.totalorder %s22, 1
    %p113 = por %p111, %p112
    %p115 = scmp.ne.s32.totalorder %s98, %s114
    %p116 = scmp.eq.s32.totalorder %s22, 0
    %p117 = por %p115, %p116
    %s118 = ssub.s32 %s23, %s35
    %p119 = scmp.eq.s32.totalorder %s118, 0
    %s121 = sadd.s32 %s120, 1
    %s122 = scalar_select %p119, %s120, %s121
    %p125 = pneg %p119
    %p126 = scmp.eq.s32.totalorder %s16, 1
    %p127 = por %p125, %p126
    %p128 = scmp.ne.s32.totalorder %s120, %s123
    %p129 = scmp.eq.s32.totalorder %s16, 0
    %p130 = por %p128, %p129
    %p131 = scmp.ne.s32.totalorder %s120, %s123
    %p132 = scmp.eq.s32.totalorder %s21, 1
    %p133 = por %p131, %p132
    %p134 = scmp.ne.s32.totalorder %s123, %s124
    %p135 = scmp.eq.s32.totalorder %s21, 0
    %p136 = por %p134, %p135
    %p137 = scmp.ne.s32.totalorder %s123, %s124
    %p138 = scmp.eq.s32.totalorder %s22, 1
    %p139 = por %p137, %p138
    %p141 = scmp.ne.s32.totalorder %s124, %s140
    %p142 = scmp.eq.s32.totalorder %s22, 0
    %p143 = por %p141, %p142
    %s145 = sadd.s32 %s144, 1
    %p148 = scmp.eq.s32.totalorder %s16, 1
    %p149 = scmp.ne.s32.totalorder %s144, %s146
    %p150 = scmp.eq.s32.totalorder %s16, 0
    %p151 = por %p149, %p150
    %p152 = scmp.ne.s32.totalorder %s144, %s146
    %p153 = scmp.eq.s32.totalorder %s21, 1
    %p154 = por %p152, %p153
    %p155 = scmp.ne.s32.totalorder %s146, %s147
    %p156 = scmp.eq.s32.totalorder %s21, 0
    %p157 = por %p155, %p156
    %p158 = scmp.ne.s32.totalorder %s146, %s147
    %p159 = scmp.eq.s32.totalorder %s22, 1
    %p160 = por %p158, %p159
    %p162 = scmp.ne.s32.totalorder %s147, %s161
    %p163 = scmp.eq.s32.totalorder %s22, 0
    %p164 = por %p162, %p163
    %s166 = sadd.s32 %s165, 1
    %p169 = scmp.eq.s32.totalorder %s16, 1
    %p170 = scmp.ne.s32.totalorder %s165, %s167
    %p171 = scmp.eq.s32.totalorder %s16, 0
    %p172 = por %p170, %p171
    %p173 = scmp.ne.s32.totalorder %s165, %s167
    %p174 = scmp.eq.s32.totalorder %s21, 1
    %p175 = por %p173, %p174
    %p176 = scmp.ne.s32.totalorder %s167, %s168
    %p177 = scmp.eq.s32.totalorder %s21, 0
    %p178 = por %p176, %p177
    %p179 = scmp.ne.s32.totalorder %s167, %s168
    %p180 = scmp.eq.s32.totalorder %s22, 1
    %p181 = por %p179, %p180
    %p183 = scmp.ne.s32.totalorder %s168, %s182
    %p184 = scmp.eq.s32.totalorder %s22, 0
    %p185 = por %p183, %p184
    %s187 = sadd.s32 %s186, 1
    %p190 = scmp.eq.s32.totalorder %s16, 1
    %p191 = scmp.ne.s32.totalorder %s186, %s188
    %p192 = scmp.eq.s32.totalorder %s16, 0
    %p193 = por %p191, %p192
    %p194 = scmp.ne.s32.totalorder %s186, %s188
    %p195 = scmp.eq.s32.totalorder %s21, 1
    %p196 = por %p194, %p195
    %p197 = scmp.ne.s32.totalorder %s188, %s189
    %p198 = scmp.eq.s32.totalorder %s21, 0
    %p199 = por %p197, %p198
    %p200 = scmp.ne.s32.totalorder %s188, %s189
    %p201 = scmp.eq.s32.totalorder %s22, 1
    %p202 = por %p200, %p201
    %p204 = scmp.ne.s32.totalorder %s189, %s203
    %p205 = scmp.eq.s32.totalorder %s22, 0
    %p206 = por %p204, %p205
    %s207 = ssub.s32 %s23, %s35
    %s208 = ssub.s32 %s24, %s31
    %s209 = sor.u32 %s207, %s208
    %p210 = scmp.eq.s32.totalorder %s209, 0
    %s212 = sadd.s32 %s211, 1
    %s213 = scalar_select %p210, %s211, %s212
    %p216 = pneg %p210
    %p217 = scmp.eq.s32.totalorder %s16, 1
    %p218 = por %p216, %p217
    %p219 = scmp.ne.s32.totalorder %s211, %s214
    %p220 = scmp.eq.s32.totalorder %s16, 0
    %p221 = por %p219, %p220
    %p222 = scmp.ne.s32.totalorder %s211, %s214
    %p223 = scmp.eq.s32.totalorder %s21, 1
    %p224 = por %p222, %p223
    %p225 = scmp.ne.s32.totalorder %s214, %s215
    %p226 = scmp.eq.s32.totalorder %s21, 0
    %p227 = por %p225, %p226
    %p228 = scmp.ne.s32.totalorder %s214, %s215
    %p229 = scmp.eq.s32.totalorder %s22, 1
    %p230 = por %p228, %p229
    %p232 = scmp.ne.s32.totalorder %s215, %s231
    %p233 = scmp.eq.s32.totalorder %s22, 0
    %p234 = por %p232, %p233
    %s235 = ssub.s32 %s23, %s35
    %s236 = ssub.s32 %s24, %s31
    %s237 = sor.u32 %s235, %s236
    %p238 = scmp.eq.s32.totalorder %s237, 0
    %s240 = sadd.s32 %s239, 1
    %s241 = scalar_select %p238, %s239, %s240
    %p244 = pneg %p238
    %p245 = scmp.eq.s32.totalorder %s16, 1
    %p246 = por %p244, %p245
    %p247 = scmp.ne.s32.totalorder %s239, %s242
    %p248 = scmp.eq.s32.totalorder %s16, 0
    %p249 = por %p247, %p248
    %p250 = scmp.ne.s32.totalorder %s239, %s242
    %p251 = scmp.eq.s32.totalorder %s21, 1
    %p252 = por %p250, %p251
    %p253 = scmp.ne.s32.totalorder %s242, %s243
    %p254 = scmp.eq.s32.totalorder %s21, 0
    %p255 = por %p253, %p254
    %p256 = scmp.ne.s32.totalorder %s242, %s243
    %p257 = scmp.eq.s32.totalorder %s22, 1
    %p258 = por %p256, %p257
    %p260 = scmp.ne.s32.totalorder %s243, %s259
    %p261 = scmp.eq.s32.totalorder %s22, 0
    %p262 = por %p260, %p261
    %s263 = ssub.s32 %s23, %s35
    %s264 = ssub.s32 %s24, %s31
    %s265 = sor.u32 %s263, %s264
    %p266 = scmp.eq.s32.totalorder %s265, 0
    %s268 = sadd.s32 %s267, 1
    %s269 = scalar_select %p266, %s267, %s268
    %p272 = pneg %p266
    %p273 = scmp.eq.s32.totalorder %s16, 1
    %p274 = por %p272, %p273
    %p275 = scmp.ne.s32.totalorder %s267, %s270
    %p276 = scmp.eq.s32.totalorder %s16, 0
    %p277 = por %p275, %p276
    %p278 = scmp.ne.s32.totalorder %s267, %s270
    %p279 = scmp.eq.s32.totalorder %s21, 1
    %p280 = por %p278, %p279
    %p281 = scmp.ne.s32.totalorder %s270, %s271
    %p282 = scmp.eq.s32.totalorder %s21, 0
    %p283 = por %p281, %p282
    %p284 = scmp.ne.s32.totalorder %s270, %s271
    %p285 = scmp.eq.s32.totalorder %s22, 1
    %p286 = por %p284, %p285
    %p288 = scmp.ne.s32.totalorder %s271, %s287
    %p289 = scmp.eq.s32.totalorder %s22, 0
    %p290 = por %p288, %p289
    %p291 = scmp.le.s32.totalorder 1, %s16
    %p292 = scmp.lt.s32.totalorder %s16, 3
    %p293 = pnand %p291, %p292
    %p294 = pneg %p293
    // Predicated region
    $region9: #{prm_generator_forward.8} parent=5 // pred_check
      _
    $region10: #{prm_generator_forward.8} parent=5 // pred_check_branch
      %296 = sbr.rel (%p293) target = $region12
    $region11: #{prm_generator_forward.8} parent=5 // pred_region
      %s297 = ssub.s32 %s16, 1
      // Predicated region
      $region13: #{prm_generator_forward.8} parent=11 // pred_check
        %p298 = pneg %p157
      $region14: #{prm_generator_forward.8} parent=11 // pred_check_branch
        %300 = sbr.rel (%p298) target = $region16
      $region15: #{prm_generator_forward.8} parent=11 // pred_region
        _
      $region16: #{prm_generator_forward.8} parent=11 // pred_fallthru
        _
      // Predicated region
      $region17: #{prm_generator_forward.8} parent=11 // pred_check
        %p301 = pneg %p178
      $region18: #{prm_generator_forward.8} parent=11 // pred_check_branch
        %303 = sbr.rel (%p301) target = $region20
      $region19: #{prm_generator_forward.8} parent=11 // pred_region
        _
      $region20: #{prm_generator_forward.8} parent=11 // pred_fallthru
        _
      // Predicated region
      $region21: #{prm_generator_forward.8} parent=11 // pred_check
        %p304 = pneg %p199
      $region22: #{prm_generator_forward.8} parent=11 // pred_check_branch
        %306 = sbr.rel (%p304) target = $region24
      $region23: #{prm_generator_forward.8} parent=11 // pred_region
        _
      $region24: #{prm_generator_forward.8} parent=11 // pred_fallthru
        _
    $region12: #{prm_generator_forward.8} parent=5 // pred_fallthru
      _
    %p307 = scmp.lt.s32.totalorder %s16, 2
    // Predicated region
    $region25: #{prm_generator_forward.8} parent=5 // pred_check
      %p308 = pneg %p307
    $region26: #{prm_generator_forward.8} parent=5 // pred_check_branch
      %310 = sbr.rel (%p308) target = $region28
    $region27: #{prm_generator_forward.8} parent=5 // pred_region
      // Predicated region
      $region29: #{prm_generator_forward.8} parent=27 // pred_check
        %p311 = pneg %p50
      $region30: #{prm_generator_forward.8} parent=27 // pred_check_branch
        %313 = sbr.rel (%p311) target = $region32
      $region31: #{prm_generator_forward.8} parent=27 // pred_region
        %p314 = scmp.lt.s32.totalorder %s23, 1
        %s315 = scalar_select %p314, %s23, 1
        %p316 = scmp.lt.s32.totalorder %s24, 0
        %s317 = scalar_select %p316, %s24, 0
        %s318 = smul.addr %s315, 2
        %s319 = sadd.s32 %s317, %s318
        %s320 = smul.addr %s319, 8
        %s321 = scalar_lea.vmem %s0, %s320
      $region32: #{prm_generator_forward.8} parent=27 // pred_fallthru
        _
      // Predicated region
      $region33: #{prm_generator_forward.8} parent=27 // pred_check
        %p322 = pneg %p78
      $region34: #{prm_generator_forward.8} parent=27 // pred_check_branch
        %324 = sbr.rel (%p322) target = $region36
      $region35: #{prm_generator_forward.8} parent=27 // pred_region
        %p325 = scmp.lt.s32.totalorder %s23, 1
        %s326 = scalar_select %p325, %s23, 1
        %p327 = scmp.lt.s32.totalorder %s24, 0
        %s328 = scalar_select %p327, %s24, 0
        %s329 = smul.addr %s326, 2
        %s330 = sadd.s32 %s328, %s329
        %s331 = smul.addr %s330, 4
        %s332 = scalar_lea.vmem %s1, %s331
      $region36: #{prm_generator_forward.8} parent=27 // pred_fallthru
        _
      // Predicated region
      $region37: #{prm_generator_forward.8} parent=27 // pred_check
        %p333 = pneg %p104
      $region38: #{prm_generator_forward.8} parent=27 // pred_check_branch
        %335 = sbr.rel (%p333) target = $region40
      $region39: #{prm_generator_forward.8} parent=27 // pred_region
        %p336 = scmp.lt.s32.totalorder %s23, 1
        %s337 = scalar_select %p336, %s23, 1
        %s338 = smul.addr %s337, 2
        %s339 = smul.addr %s338, 8
        %s340 = scalar_lea.vmem %s2, %s339
      $region40: #{prm_generator_forward.8} parent=27 // pred_fallthru
        _
      // Predicated region
      $region41: #{prm_generator_forward.8} parent=27 // pred_check
        %p341 = pneg %p130
      $region42: #{prm_generator_forward.8} parent=27 // pred_check_branch
        %343 = sbr.rel (%p341) target = $region44
      $region43: #{prm_generator_forward.8} parent=27 // pred_region
        %p344 = scmp.lt.s32.totalorder %s23, 1
        %s345 = scalar_select %p344, %s23, 1
        %s346 = smul.addr %s345, 2
        %s347 = smul.addr %s346, 8
        %s348 = scalar_lea.vmem %s3, %s347
      $region44: #{prm_generator_forward.8} parent=27 // pred_fallthru
        _
    $region28: #{prm_generator_forward.8} parent=5 // pred_fallthru
      _
    %p349 = scmp.le.s32.totalorder 1, %s16
    %p350 = scmp.lt.s32.totalorder %s16, 3
    %p351 = pnand %p349, %p350
    %p352 = pneg %p351
    // Predicated region
    $region45: #{prm_generator_forward.8} parent=5 // pred_check
      _
    $region46: #{prm_generator_forward.8} parent=5 // pred_check_branch
      %354 = sbr.rel (%p351) target = $region48
    $region47: #{prm_generator_forward.8} parent=5 // pred_region
      %s355 = ssub.s32 %s16, 1
      %p356 = scmp.lt.s32.totalorder %s25, 1
      %s357 = scalar_select %p356, %s25, 1
      %p358 = scmp.lt.s32.totalorder %s26, 0
      %s359 = scalar_select %p358, %s26, 0
      %s360 = smul.addr %s357, 2
      %s361 = sadd.s32 %s359, %s360
      %s362 = smul.addr %s361, 8
      %s363 = scalar_lea.vmem %s0, %s362
      %p364 = pneg %p56
      %p365 = pneg %p53
      %p366 = scmp.lt.s32.totalorder %s25, 1
      %s367 = scalar_select %p366, %s25, 1
      %p368 = scmp.lt.s32.totalorder %s26, 0
      %s369 = scalar_select %p368, %s26, 0
      %s370 = smul.addr %s367, 2
      %s371 = sadd.s32 %s369, %s370
      %s372 = smul.addr %s371, 4
      %s373 = scalar_lea.vmem %s1, %s372
      %p374 = pneg %p84
      %p375 = pneg %p81
      %p376 = scmp.lt.s32.totalorder %s25, 1
      %s377 = scalar_select %p376, %s25, 1
      %s378 = smul.addr %s377, 2
      %s379 = smul.addr %s378, 8
      %s380 = scalar_lea.vmem %s2, %s379
      %p381 = pneg %p110
      %p382 = pneg %p107
      %p383 = scmp.lt.s32.totalorder %s25, 1
      %s384 = scalar_select %p383, %s25, 1
      %s385 = smul.addr %s384, 2
      %s386 = smul.addr %s385, 8
      %s387 = scalar_lea.vmem %s3, %s386
      %p388 = pneg %p136
      %p389 = pneg %p133
      %p390 = pneg %p157
      %p391 = pneg %p154
      %p392 = pneg %p178
      %p393 = pneg %p175
      %p394 = pneg %p199
      %p395 = pneg %p196
      %p396 = pneg %p227
      %p397 = pneg %p224
      %p398 = scmp.lt.s32.totalorder %s25, 1
      %s399 = scalar_select %p398, %s25, 1
      %p400 = scmp.lt.s32.totalorder %s26, 0
      %s401 = scalar_select %p400, %s26, 0
      %s402 = smul.addr %s399, 2
      %s403 = sadd.s32 %s401, %s402
      %s404 = smul.addr %s403, 4
      %s405 = scalar_lea.vmem %s7, %s404
      %p406 = pneg %p255
      %p407 = pneg %p252
      %p408 = scmp.lt.s32.totalorder %s25, 1
      %s409 = scalar_select %p408, %s25, 1
      %p410 = scmp.lt.s32.totalorder %s26, 0
      %s411 = scalar_select %p410, %s26, 0
      %s412 = smul.addr %s411, 2
      %s413 = smul.addr %s409, 2
      %s414 = sadd.s32 %s412, %s413
      %s415 = smul.addr %s414, 8
      %s416 = scalar_lea.vmem %s8, %s415
      %p417 = pneg %p283
      %p418 = pneg %p280
      %p419 = scmp.lt.s32.totalorder %s25, 1
      %s420 = scalar_select %p419, %s25, 1
      %p421 = scmp.lt.s32.totalorder %s26, 0
      %s422 = scalar_select %p421, %s26, 0
      %s423 = smul.addr %s422, 2
      %s424 = smul.addr %s420, 2
      %s425 = sadd.s32 %s423, %s424
      %s426 = smul.addr %s425, 8
      %s427 = scalar_lea.vmem %s9, %s426
      %p428 = scmp.lt.s32.totalorder %s25, 1
      %s429 = scalar_select %p428, %s25, 1
      %p430 = scmp.lt.s32.totalorder %s26, 0
      %s431 = scalar_select %p430, %s26, 0
      %s432 = smul.addr %s429, 2
      %s433 = sadd.s32 %s431, %s432
      %s434 = smul.addr %s433, 8
      %s435 = scalar_lea.vmem %s0, %s434
      %p436 = scmp.lt.s32.totalorder %s25, 1
      %s437 = scalar_select %p436, %s25, 1
      %p438 = scmp.lt.s32.totalorder %s26, 0
      %s439 = scalar_select %p438, %s26, 0
      %s440 = smul.addr %s437, 2
      %s441 = sadd.s32 %s439, %s440
      %s442 = smul.addr %s441, 4
      %s443 = scalar_lea.vmem %s1, %s442
      %p444 = scmp.lt.s32.totalorder %s25, 1
      %s445 = scalar_select %p444, %s25, 1
      %s446 = smul.addr %s445, 2
      %s447 = smul.addr %s446, 8
      %s448 = scalar_lea.vmem %s2, %s447
      %p449 = scmp.lt.s32.totalorder %s25, 1
      %s450 = scalar_select %p449, %s25, 1
      %s451 = smul.addr %s450, 2
      %s452 = smul.addr %s451, 8
      %s453 = scalar_lea.vmem %s3, %s452
      %p454 = scmp.lt.s32.totalorder %s25, 1
      %s455 = scalar_select %p454, %s25, 1
      %p456 = scmp.lt.s32.totalorder %s26, 0
      %s457 = scalar_select %p456, %s26, 0
      %s458 = smul.addr %s455, 2
      %s459 = sadd.s32 %s457, %s458
      %s460 = smul.addr %s459, 4
      %s461 = scalar_lea.vmem %s7, %s460
      %p462 = scmp.lt.s32.totalorder %s25, 1
      %s463 = scalar_select %p462, %s25, 1
      %p464 = scmp.lt.s32.totalorder %s26, 0
      %s465 = scalar_select %p464, %s26, 0
      %s466 = smul.addr %s465, 2
      %s467 = smul.addr %s463, 2
      %s468 = sadd.s32 %s466, %s467
      %s469 = smul.addr %s468, 8
      %s470 = scalar_lea.vmem %s8, %s469
      %p471 = scmp.lt.s32.totalorder %s25, 1
      %s472 = scalar_select %p471, %s25, 1
      %p473 = scmp.lt.s32.totalorder %s26, 0
      %s474 = scalar_select %p473, %s26, 0
      %s475 = smul.addr %s474, 2
      %s476 = smul.addr %s472, 2
      %s477 = sadd.s32 %s475, %s476
      %s478 = smul.addr %s477, 8
      %s479 = scalar_lea.vmem %s9, %s478
      %v481 = vld [vmem:[%s448] sm:$0xff]
      %v482 = vld [vmem:[%s448 + $0x8] sm:$0xff]
      %v483 = vld [vmem:[%s453] sm:$0xff]
      %v484 = vld [vmem:[%s453 + $0x8] sm:$0xff]
      %v485 = vadd.f32 %v481, 0.0
      %v486 = vadd.f32 %v482, 0.0
      %v487 = vadd.f32 %v483, 0.0
      %v488 = vadd.f32 %v484, 0.0
      %v489 = vmul.f32 %v485, 0.015625
      %v490 = vmul.f32 %v486, 0.015625
      %v491 = vmul.f32 %v487, 0.015625
      %v492 = vmul.f32 %v488, 0.015625
      %v493 = vmul.f32 %v489, %v489
      %v494 = vmul.f32 %v490, %v490
      %v495 = vsub.f32 %v491, %v493
      %v496 = vsub.f32 %v492, %v494
      %v497 = vmax.f32 %v495, 0.0
      %v498 = vmax.f32 %v496, 0.0
      %v499 = vadd.f32 %v497, 1e-05
      %v500 = vadd.f32 %v498, 1e-05
      %v501 = vrsqrt.pop %v499
      %v502 = vrsqrt.pop %v500
      %v503 = vld [vmem:[%s443] sm:$0xf]
      %v504 = vld [vmem:[%s443 + $0x4] sm:$0xf]
      %v505 = vunpack.c.l.bf16 %v503
      %v506 = vunpack.c.l.bf16 %v504
      %508 = vset.pattern.permute.xlu0 0
      %509 = vperm.xlu0 %508, %v489
      %v510 = vpop.permute.xlu0 %509
      %513 = vset.pattern.permute.xlu0 0
      %514 = vperm.xlu0 %513, %v490
      %v515 = vpop.permute.xlu0 %514
      %v517 = vsub.f32 %v505, %v510
      %v518 = vsub.f32 %v506, %v515
      %520 = vset.pattern.permute.xlu0 0
      %521 = vperm.xlu0 %520, %v501
      %v522 = vpop.permute.xlu0 %521
      %525 = vset.pattern.permute.xlu0 0
      %526 = vperm.xlu0 %525, %v502
      %v527 = vpop.permute.xlu0 %526
      %v529 = vmul.f32 %v517, %v522
      %v530 = vmul.f32 %v518, %v527
      %vm531 = vcmp.ge.f32.partialorder %v529, 0.0
      %vm532 = vcmp.ge.f32.partialorder %v530, 0.0
      %v533 = vmul.f32 %v529, 0.2
      %v534 = vmul.f32 %v530, 0.2
      %v535 = vsel %vm531, %v529, %v533
      %v536 = vsel %vm532, %v530, %v534
      %v537 = vpack.c.bf16 %v536, %v535
      %v538 = vld [vmem:[%s4] sm:$0xf]
      %v539 = vld [vmem:[%s4 + $0x4] sm:$0xf]
      %v540 = vld [vmem:[%s435] sm:$0xff]
      %v541 = vld [vmem:[%s435 + $0x8] sm:$0xff]
      %v542 = vpack.c.bf16 %v541, %v540
      %v543 = vld [vmem:[%s5] sm:$0xf]
      %v544 = vld [vmem:[%s5 + $0x4] sm:$0xf]
      %v547 = vunpack.c.l.b16 %v543
      %v548 = vunpack.c.l.b16 %v544
      %v549 = vpack.c.b16 %v548, %v547
      %vm550 = vcmask 130048
      %v552 = vsel %vm550, %v549, 0
      %554 = vmatprep.subr.bf16.mxu0 0
      %555 = vmatpush1.bf16.msra.mxu0 0
      %556 = vmatprep.subr.bf16.mxu0 0
      %557 = vmatpush1.bf16.msra.mxu0 0
      %558 = vmatprep.subr.bf16.mxu0 0
      %559 = vmatpush1.bf16.msra.mxu0 0
      %560 = vmatprep.subr.bf16.mxu0 0
      %561 = vmatpush1.bf16.msra.mxu0 0
      %562 = vmatprep.subr.bf16.mxu0 0
      %563 = vmatpush1.bf16.msra.mxu0 0
      %564 = vmatprep.subr.bf16.mxu0 0
      %565 = vmatpush1.bf16.msra.mxu0 0
      %566 = vmatprep.subr.bf16.mxu0 0
      %567 = vmatpush1.bf16.msra.mxu0 0
      %568 = vmatprep.subr.bf16.mxu0 0
      %569 = vmatpush1.bf16.msra.mxu0 %v537
      %570 = vmatprep.subr.bf16.mxu0 0
      %571 = vmatpush2.bf16.msra.mxu0 0
      %572 = vmatprep.subr.bf16.mxu0 0
      %573 = vmatpush2.bf16.msra.mxu0 0
      %574 = vmatprep.subr.bf16.mxu0 0
      %575 = vmatpush2.bf16.msra.mxu0 0
      %576 = vmatprep.subr.bf16.mxu0 0
      %577 = vmatpush2.bf16.msra.mxu0 0
      %578 = vmatprep.subr.bf16.mxu0 0
      %579 = vmatpush2.bf16.msra.mxu0 0
      %580 = vmatprep.subr.bf16.mxu0 0
      %581 = vmatpush2.bf16.msra.mxu0 0
      %582 = vmatprep.subr.bf16.mxu0 0
      %583 = vmatpush2.bf16.msra.mxu0 0
      %584 = vmatprep.subr.bf16.mxu0 0
      %585 = vmatpush2.bf16.msra.mxu0 0
      %586 = vmatprep.mubr.bf16.mxu0 0
      %587 = vmatmul.mubr.bf16.gmra.mxu0 %v552
      %v588 = vpop.f32.mrf.mxu0
      %v589 = vadd.f32 0.0, %v588
      %v590 = vpop.f32.mrf.mxu0
      %v591 = vpop.f32.mrf.mxu0
      %v592 = vadd.f32 0.0, %v591
      %v593 = vpop.f32.mrf.mxu0
      %594 = vdwg.mxu0
      %v597 = vunpack.c.l.b16 %v538
      %v598 = vunpack.c.l.b16 %v539
      %v599 = vpack.c.b16 %v598, %v597
      %v601 = vsel %vm550, %v599, 0
      %603 = vmatprep.subr.bf16.mxu0 0
      %604 = vmatpush1.bf16.msra.mxu0 0
      %605 = vmatprep.subr.bf16.mxu0 0
      %606 = vmatpush1.bf16.msra.mxu0 0
      %607 = vmatprep.subr.bf16.mxu0 0
      %608 = vmatpush1.bf16.msra.mxu0 0
      %609 = vmatprep.subr.bf16.mxu0 0
      %610 = vmatpush1.bf16.msra.mxu0 0
      %611 = vmatprep.subr.bf16.mxu0 0
      %612 = vmatpush1.bf16.msra.mxu0 0
      %613 = vmatprep.subr.bf16.mxu0 0
      %614 = vmatpush1.bf16.msra.mxu0 0
      %615 = vmatprep.subr.bf16.mxu0 0
      %616 = vmatpush1.bf16.msra.mxu0 0
      %617 = vmatprep.subr.bf16.mxu0 0
      %618 = vmatpush1.bf16.msra.mxu0 %v542
      %619 = vmatprep.subr.bf16.mxu0 0
      %620 = vmatpush2.bf16.msra.mxu0 0
      %621 = vmatprep.subr.bf16.mxu0 0
      %622 = vmatpush2.bf16.msra.mxu0 0
      %623 = vmatprep.subr.bf16.mxu0 0
      %624 = vmatpush2.bf16.msra.mxu0 0
      %625 = vmatprep.subr.bf16.mxu0 0
      %626 = vmatpush2.bf16.msra.mxu0 0
      %627 = vmatprep.subr.bf16.mxu0 0
      %628 = vmatpush2.bf16.msra.mxu0 0
      %629 = vmatprep.subr.bf16.mxu0 0
      %630 = vmatpush2.bf16.msra.mxu0 0
      %631 = vmatprep.subr.bf16.mxu0 0
      %632 = vmatpush2.bf16.msra.mxu0 0
      %633 = vmatprep.subr.bf16.mxu0 0
      %634 = vmatpush2.bf16.msra.mxu0 0
      %635 = vmatprep.mubr.bf16.mxu0 0
      %636 = vmatmul.mubr.bf16.gmra.mxu0 %v601
      %v637 = vpop.f32.mrf.mxu0
      %v638 = vadd.f32 %v589, %v637
      %v639 = vpop.f32.mrf.mxu0
      %v640 = vpop.f32.mrf.mxu0
      %v641 = vadd.f32 %v592, %v640
      %v642 = vpop.f32.mrf.mxu0
      %643 = vdwg.mxu0
      %v644 = vld [vmem:[%s6] sm:$0xff]
      %v645 = vld [vmem:[%s6 + $0x8] sm:$0xff]
      %647 = vset.pattern.permute.xlu0 0
      %648 = vperm.xlu0 %647, %v644
      %v649 = vpop.permute.xlu0 %648
      %652 = vset.pattern.permute.xlu0 0
      %653 = vperm.xlu0 %652, %v645
      %v654 = vpop.permute.xlu0 %653
      %v656 = vadd.f32 %v638, %v649
      %v657 = vadd.f32 %v641, %v654
      %v658 = vpack.c.bf16 %v657, %v656
      %v660 = vunpack.c.l.b16 %v658
      %v661 = vunpack.c.h.b16 %v658
      %v662 = vpack.c.b16 %v660, %v660
      %v663 = vpack.c.b16 %v661, %v661
      %vm666 = vcmask 519168
      %667 = vst.msk [vmem:[%s461] sm:$0xf] %vm666, %v662
      %668 = vst.msk [vmem:[%s461 + $0x4] sm:$0xf] %vm666, %v663
      %v669 = vunpack.c.l.bf16 %v658
      %v670 = vunpack.c.h.bf16 %v658
      %vm671 = vcmask 523264
      %v672 = vsel %vm671, %v669, 0.0
      %673 = vadd.xlane.f32.xlu0 %v672
      %v674 = vpop.xlane.xlu0 %673
      %v675 = vsel %vm671, %v670, 0.0
      %676 = vadd.xlane.f32.xlu0 %v675
      %v677 = vpop.xlane.xlu0 %676
      %vm678 = vcmask 7168
      %679 = vst.msk [vmem:[%s470] sm:$0xff] %vm678, %v674
      %680 = vst.msk [vmem:[%s470 + $0x8] sm:$0xff] %vm678, %v677
      %v681 = vmul.f32 %v669, %v669
      %v682 = vmul.f32 %v670, %v670
      %v683 = vsel %vm671, %v681, 0.0
      %684 = vadd.xlane.f32.xlu0 %v683
      %v685 = vpop.xlane.xlu0 %684
      %v686 = vsel %vm671, %v682, 0.0
      %687 = vadd.xlane.f32.xlu0 %v686
      %v688 = vpop.xlane.xlu0 %687
      %689 = vst.msk [vmem:[%s479] sm:$0xff] %vm678, %v685
      %690 = vst.msk [vmem:[%s479 + $0x8] sm:$0xff] %vm678, %v688
      %p691 = scmp.lt.s32.totalorder %s25, 1
      %s692 = scalar_select %p691, %s25, 1
      %p693 = scmp.lt.s32.totalorder %s26, 0
      %s694 = scalar_select %p693, %s26, 0
      %s695 = smul.addr %s692, 2
      %s696 = sadd.s32 %s694, %s695
      %s697 = smul.addr %s696, 4
      %s698 = scalar_lea.vmem %s7, %s697
      %p699 = scmp.lt.s32.totalorder %s25, 1
      %s700 = scalar_select %p699, %s25, 1
      %p701 = scmp.lt.s32.totalorder %s26, 0
      %s702 = scalar_select %p701, %s26, 0
      %s703 = smul.addr %s702, 2
      %s704 = smul.addr %s700, 2
      %s705 = sadd.s32 %s703, %s704
      %s706 = smul.addr %s705, 8
      %s707 = scalar_lea.vmem %s8, %s706
      %p708 = scmp.lt.s32.totalorder %s25, 1
      %s709 = scalar_select %p708, %s25, 1
      %p710 = scmp.lt.s32.totalorder %s26, 0
      %s711 = scalar_select %p710, %s26, 0
      %s712 = smul.addr %s711, 2
      %s713 = smul.addr %s709, 2
      %s714 = sadd.s32 %s712, %s713
      %s715 = smul.addr %s714, 8
      %s716 = scalar_lea.vmem %s9, %s715
      // Predicated region
      $region49: #{prm_generator_forward.8} parent=47 // pred_check
        %p717 = pneg %p224
      $region50: #{prm_generator_forward.8} parent=47 // pred_check_branch
        %719 = sbr.rel (%p717) target = $region52
      $region51: #{prm_generator_forward.8} parent=47 // pred_region
        _
      $region52: #{prm_generator_forward.8} parent=47 // pred_fallthru
        _
      // Predicated region
      $region53: #{prm_generator_forward.8} parent=47 // pred_check
        %p720 = pneg %p252
      $region54: #{prm_generator_forward.8} parent=47 // pred_check_branch
        %722 = sbr.rel (%p720) target = $region56
      $region55: #{prm_generator_forward.8} parent=47 // pred_region
        _
      $region56: #{prm_generator_forward.8} parent=47 // pred_fallthru
        _
      // Predicated region
      $region57: #{prm_generator_forward.8} parent=47 // pred_check
        %p723 = pneg %p280
      $region58: #{prm_generator_forward.8} parent=47 // pred_check_branch
        %725 = sbr.rel (%p723) target = $region60
      $region59: #{prm_generator_forward.8} parent=47 // pred_region
        _
      $region60: #{prm_generator_forward.8} parent=47 // pred_fallthru
        _
    $region48: #{prm_generator_forward.8} parent=5 // pred_fallthru
      _
    %p726 = scmp.le.s32.totalorder 2, %s16
    // Predicated region
    $region61: #{prm_generator_forward.8} parent=5 // pred_check
      %p727 = pneg %p726
    $region62: #{prm_generator_forward.8} parent=5 // pred_check_branch
      %729 = sbr.rel (%p727) target = $region64
    $region63: #{prm_generator_forward.8} parent=5 // pred_region
      %s730 = ssub.s32 %s16, 2
      // Predicated region
      $region65: #{prm_generator_forward.8} parent=63 // pred_check
        %p731 = pneg %p230
      $region66: #{prm_generator_forward.8} parent=63 // pred_check_branch
        %733 = sbr.rel (%p731) target = $region68
      $region67: #{prm_generator_forward.8} parent=63 // pred_region
        %p734 = scmp.lt.s32.totalorder %s27, 1
        %s735 = scalar_select %p734, %s27, 1
        %p736 = scmp.lt.s32.totalorder %s28, 0
        %s737 = scalar_select %p736, %s28, 0
        %s738 = smul.addr %s735, 2
        %s739 = sadd.s32 %s737, %s738
        %s740 = smul.addr %s739, 4
        %s741 = scalar_lea.vmem %s7, %s740
      $region68: #{prm_generator_forward.8} parent=63 // pred_fallthru
        _
      // Predicated region
      $region69: #{prm_generator_forward.8} parent=63 // pred_check
        %p742 = pneg %p258
      $region70: #{prm_generator_forward.8} parent=63 // pred_check_branch
        %744 = sbr.rel (%p742) target = $region72
      $region71: #{prm_generator_forward.8} parent=63 // pred_region
        %p745 = scmp.lt.s32.totalorder %s27, 1
        %s746 = scalar_select %p745, %s27, 1
        %p747 = scmp.lt.s32.totalorder %s28, 0
        %s748 = scalar_select %p747, %s28, 0
        %s749 = smul.addr %s748, 2
        %s750 = smul.addr %s746, 2
        %s751 = sadd.s32 %s749, %s750
        %s752 = smul.addr %s751, 8
        %s753 = scalar_lea.vmem %s8, %s752
      $region72: #{prm_generator_forward.8} parent=63 // pred_fallthru
        _
      // Predicated region
      $region73: #{prm_generator_forward.8} parent=63 // pred_check
        %p754 = pneg %p286
      $region74: #{prm_generator_forward.8} parent=63 // pred_check_branch
        %756 = sbr.rel (%p754) target = $region76
      $region75: #{prm_generator_forward.8} parent=63 // pred_region
        %p757 = scmp.lt.s32.totalorder %s27, 1
        %s758 = scalar_select %p757, %s27, 1
        %p759 = scmp.lt.s32.totalorder %s28, 0
        %s760 = scalar_select %p759, %s28, 0
        %s761 = smul.addr %s760, 2
        %s762 = smul.addr %s758, 2
        %s763 = sadd.s32 %s761, %s762
        %s764 = smul.addr %s763, 8
        %s765 = scalar_lea.vmem %s9, %s764
      $region76: #{prm_generator_forward.8} parent=63 // pred_fallthru
        _
    $region64: #{prm_generator_forward.8} parent=5 // pred_fallthru
      _
  $region6: #{prm_generator_forward.8} parent=0 // loop_footer
    %s20 = sadd.s32 1, %s16
  $region7: #{prm_generator_forward.8} parent=0 // loop_footer_branch
    %15 = sbr.rel target = $region3
  $region8: #{prm_generator_forward.8} parent=0 // loop_exit
    _

// kernel: prm_generator_forward.9
$region0: #{prm_generator_forward.9}
  #allocation0 [shape = 'u32[]', space=smem, size = 0x4, offset = 0x4, fixed_abs, tag = 'smem constant byte address 0x4 - core index']
  #allocation1 [shape = 'u32[144,128]{1,0:T(1,128)}', space=vmem, size = 0x12000, scoped, tag = 'internal scratch']
  %s0 = inlined_call_operand.vmem [shape: bf16[2,16,64], index: 0, kind: input, shape index: {}]
  %s1 = inlined_call_operand.vmem [shape: f32[2,1,16,1], index: 1, kind: input, shape index: {}]
  %s2 = inlined_call_operand.vmem [shape: f32[2,1,16,1], index: 2, kind: input, shape index: {}]
  %s3 = inlined_call_operand.vmem [shape: bf16[5,16], index: 3, kind: input, shape index: {}]
  %s4 = inlined_call_operand.vmem [shape: f32[5,1], index: 4, kind: input, shape index: {}]
  %s5 = inlined_call_operand.vmem [shape: f32[2,5,64], index: 5, kind: output, shape index: {}]
  %s6 = sld [smem:[#allocation0]]
  $region53: #{prm_generator_forward.9} parent=0
    _
  %s8 = ssub.s32 1, %s6
  %s9 = scalar_select 0, %s8, %s6
  loop: start=0, step=1, limit=4
  $region2: #{prm_generator_forward.9} parent=0 // loop_pre_header
    _
  $region3: #{prm_generator_forward.9} parent=0 // loop_header
    %s11 = sphi 0, %s15
    %p12 = scmp.ge.s32.totalorder %s11, 4
    %s18 = sphi 0, %s30
    %s19 = sphi 0, %s26
    %s20 = sphi 0, %s18
    %s21 = sphi 0, %s19
    %s22 = sphi 0, %s20
    %s23 = sphi 0, %s21
    %s35 = sphi 0, %s37
    %s38 = sphi 0, %s35
    %s39 = sphi 0, %s38
    %s55 = sphi 0, %s39
    %s61 = sphi 0, %s63
    %s64 = sphi 0, %s61
    %s65 = sphi 0, %s64
    %s81 = sphi 0, %s65
    %s87 = sphi 0, %s89
    %s90 = sphi 0, %s87
    %s91 = sphi 0, %s90
    %s107 = sphi 0, %s91
    %s111 = sphi 0, %s111
    %s113 = sphi 0, %s111
    %s114 = sphi 0, %s113
    %s128 = sphi 0, %s114
    %s132 = sphi 0, %s132
    %s134 = sphi 0, %s132
    %s135 = sphi 0, %s134
    %s149 = sphi 0, %s135
    %s157 = sphi 0, %s159
    %s160 = sphi 0, %s157
    %s161 = sphi 0, %s160
    %s177 = sphi 0, %s161
  $region4: #{prm_generator_forward.9} parent=0 // loop_header_branch
    %14 = sbr.rel (%p12) target = $region8
  $region5: #{prm_generator_forward.9} parent=0 // loop_body
    %s16 = ssub.s32 %s11, 1
    %s17 = ssub.s32 %s11, 2
    %s24 = sadd.s32 1, %s19
    %p25 = scmp.ge.s32.totalorder %s24, 1
    %s26 = scalar_select %p25, 0, %s24
    %s27 = sadd.s32 1, %s18
    %s28 = scalar_select %p25, %s27, %s18
    %p29 = scmp.ge.s32.totalorder %s28, 2
    %s30 = scalar_select %p29, 0, %s28
    %s31 = ssub.s32 %s18, %s30
    %s32 = ssub.s32 %s19, %s26
    %s33 = sor.u32 %s31, %s32
    %p34 = scmp.eq.s32.totalorder %s33, 0
    %s36 = sadd.s32 %s35, 1
    %s37 = scalar_select %p34, %s35, %s36
    %p40 = pneg %p34
    %p41 = scmp.eq.s32.totalorder %s11, 1
    %p42 = por %p40, %p41
    %p43 = scmp.ne.s32.totalorder %s35, %s38
    %p44 = scmp.eq.s32.totalorder %s11, 0
    %p45 = por %p43, %p44
    %p46 = scmp.ne.s32.totalorder %s35, %s38
    %p47 = scmp.eq.s32.totalorder %s16, 1
    %p48 = por %p46, %p47
    %p49 = scmp.ne.s32.totalorder %s38, %s39
    %p50 = scmp.eq.s32.totalorder %s16, 0
    %p51 = por %p49, %p50
    %p52 = scmp.ne.s32.totalorder %s38, %s39
    %p53 = scmp.eq.s32.totalorder %s17, 1
    %p54 = por %p52, %p53
    %p56 = scmp.ne.s32.totalorder %s39, %s55
    %p57 = scmp.eq.s32.totalorder %s17, 0
    %p58 = por %p56, %p57
    %s59 = ssub.s32 %s18, %s30
    %p60 = scmp.eq.s32.totalorder %s59, 0
    %s62 = sadd.s32 %s61, 1
    %s63 = scalar_select %p60, %s61, %s62
    %p66 = pneg %p60
    %p67 = scmp.eq.s32.totalorder %s11, 1
    %p68 = por %p66, %p67
    %p69 = scmp.ne.s32.totalorder %s61, %s64
    %p70 = scmp.eq.s32.totalorder %s11, 0
    %p71 = por %p69, %p70
    %p72 = scmp.ne.s32.totalorder %s61, %s64
    %p73 = scmp.eq.s32.totalorder %s16, 1
    %p74 = por %p72, %p73
    %p75 = scmp.ne.s32.totalorder %s64, %s65
    %p76 = scmp.eq.s32.totalorder %s16, 0
    %p77 = por %p75, %p76
    %p78 = scmp.ne.s32.totalorder %s64, %s65
    %p79 = scmp.eq.s32.totalorder %s17, 1
    %p80 = por %p78, %p79
    %p82 = scmp.ne.s32.totalorder %s65, %s81
    %p83 = scmp.eq.s32.totalorder %s17, 0
    %p84 = por %p82, %p83
    %s85 = ssub.s32 %s18, %s30
    %p86 = scmp.eq.s32.totalorder %s85, 0
    %s88 = sadd.s32 %s87, 1
    %s89 = scalar_select %p86, %s87, %s88
    %p92 = pneg %p86
    %p93 = scmp.eq.s32.totalorder %s11, 1
    %p94 = por %p92, %p93
    %p95 = scmp.ne.s32.totalorder %s87, %s90
    %p96 = scmp.eq.s32.totalorder %s11, 0
    %p97 = por %p95, %p96
    %p98 = scmp.ne.s32.totalorder %s87, %s90
    %p99 = scmp.eq.s32.totalorder %s16, 1
    %p100 = por %p98, %p99
    %p101 = scmp.ne.s32.totalorder %s90, %s91
    %p102 = scmp.eq.s32.totalorder %s16, 0
    %p103 = por %p101, %p102
    %p104 = scmp.ne.s32.totalorder %s90, %s91
    %p105 = scmp.eq.s32.totalorder %s17, 1
    %p106 = por %p104, %p105
    %p108 = scmp.ne.s32.totalorder %s91, %s107
    %p109 = scmp.eq.s32.totalorder %s17, 0
    %p110 = por %p108, %p109
    %s112 = sadd.s32 %s111, 1
    %p115 = scmp.eq.s32.totalorder %s11, 1
    %p116 = scmp.ne.s32.totalorder %s111, %s113
    %p117 = scmp.eq.s32.totalorder %s11, 0
    %p118 = por %p116, %p117
    %p119 = scmp.ne.s32.totalorder %s111, %s113
    %p120 = scmp.eq.s32.totalorder %s16, 1
    %p121 = por %p119, %p120
    %p122 = scmp.ne.s32.totalorder %s113, %s114
    %p123 = scmp.eq.s32.totalorder %s16, 0
    %p124 = por %p122, %p123
    %p125 = scmp.ne.s32.totalorder %s113, %s114
    %p126 = scmp.eq.s32.totalorder %s17, 1
    %p127 = por %p125, %p126
    %p129 = scmp.ne.s32.totalorder %s114, %s128
    %p130 = scmp.eq.s32.totalorder %s17, 0
    %p131 = por %p129, %p130
    %s133 = sadd.s32 %s132, 1
    %p136 = scmp.eq.s32.totalorder %s11, 1
    %p137 = scmp.ne.s32.totalorder %s132, %s134
    %p138 = scmp.eq.s32.totalorder %s11, 0
    %p139 = por %p137, %p138
    %p140 = scmp.ne.s32.totalorder %s132, %s134
    %p141 = scmp.eq.s32.totalorder %s16, 1
    %p142 = por %p140, %p141
    %p143 = scmp.ne.s32.totalorder %s134, %s135
    %p144 = scmp.eq.s32.totalorder %s16, 0
    %p145 = por %p143, %p144
    %p146 = scmp.ne.s32.totalorder %s134, %s135
    %p147 = scmp.eq.s32.totalorder %s17, 1
    %p148 = por %p146, %p147
    %p150 = scmp.ne.s32.totalorder %s135, %s149
    %p151 = scmp.eq.s32.totalorder %s17, 0
    %p152 = por %p150, %p151
    %s153 = ssub.s32 %s18, %s30
    %s154 = ssub.s32 %s19, %s26
    %s155 = sor.u32 %s153, %s154
    %p156 = scmp.eq.s32.totalorder %s155, 0
    %s158 = sadd.s32 %s157, 1
    %s159 = scalar_select %p156, %s157, %s158
    %p162 = pneg %p156
    %p163 = scmp.eq.s32.totalorder %s11, 1
    %p164 = por %p162, %p163
    %p165 = scmp.ne.s32.totalorder %s157, %s160
    %p166 = scmp.eq.s32.totalorder %s11, 0
    %p167 = por %p165, %p166
    %p168 = scmp.ne.s32.totalorder %s157, %s160
    %p169 = scmp.eq.s32.totalorder %s16, 1
    %p170 = por %p168, %p169
    %p171 = scmp.ne.s32.totalorder %s160, %s161
    %p172 = scmp.eq.s32.totalorder %s16, 0
    %p173 = por %p171, %p172
    %p174 = scmp.ne.s32.totalorder %s160, %s161
    %p175 = scmp.eq.s32.totalorder %s17, 1
    %p176 = por %p174, %p175
    %p178 = scmp.ne.s32.totalorder %s161, %s177
    %p179 = scmp.eq.s32.totalorder %s17, 0
    %p180 = por %p178, %p179
    %p181 = scmp.le.s32.totalorder 1, %s11
    %p182 = scmp.lt.s32.totalorder %s11, 3
    %p183 = pnand %p181, %p182
    %p184 = pneg %p183
    // Predicated region
    $region9: #{prm_generator_forward.9} parent=5 // pred_check
      _
    $region10: #{prm_generator_forward.9} parent=5 // pred_check_branch
      %186 = sbr.rel (%p183) target = $region12
    $region11: #{prm_generator_forward.9} parent=5 // pred_region
      %s187 = ssub.s32 %s11, 1
      // Predicated region
      $region13: #{prm_generator_forward.9} parent=11 // pred_check
        %p188 = pneg %p124
      $region14: #{prm_generator_forward.9} parent=11 // pred_check_branch
        %190 = sbr.rel (%p188) target = $region16
      $region15: #{prm_generator_forward.9} parent=11 // pred_region
        _
      $region16: #{prm_generator_forward.9} parent=11 // pred_fallthru
        _
      // Predicated region
      $region17: #{prm_generator_forward.9} parent=11 // pred_check
        %p191 = pneg %p145
      $region18: #{prm_generator_forward.9} parent=11 // pred_check_branch
        %193 = sbr.rel (%p191) target = $region20
      $region19: #{prm_generator_forward.9} parent=11 // pred_region
        _
      $region20: #{prm_generator_forward.9} parent=11 // pred_fallthru
        _
    $region12: #{prm_generator_forward.9} parent=5 // pred_fallthru
      _
    %p194 = scmp.lt.s32.totalorder %s11, 2
    // Predicated region
    $region21: #{prm_generator_forward.9} parent=5 // pred_check
      %p195 = pneg %p194
    $region22: #{prm_generator_forward.9} parent=5 // pred_check_branch
      %197 = sbr.rel (%p195) target = $region24
    $region23: #{prm_generator_forward.9} parent=5 // pred_region
      // Predicated region
      $region25: #{prm_generator_forward.9} parent=23 // pred_check
        %p198 = pneg %p45
      $region26: #{prm_generator_forward.9} parent=23 // pred_check_branch
        %200 = sbr.rel (%p198) target = $region28
      $region27: #{prm_generator_forward.9} parent=23 // pred_region
        %p201 = scmp.lt.s32.totalorder %s18, 1
        %s202 = scalar_select %p201, %s18, 1
        %p203 = scmp.lt.s32.totalorder %s19, 0
        %s204 = scalar_select %p203, %s19, 0
        %s205 = smul.addr %s202, 2
        %s206 = sadd.s32 %s204, %s205
        %s207 = smul.addr %s206, 4
        %s208 = scalar_lea.vmem %s0, %s207
      $region28: #{prm_generator_forward.9} parent=23 // pred_fallthru
        _
      // Predicated region
      $region29: #{prm_generator_forward.9} parent=23 // pred_check
        %p209 = pneg %p71
      $region30: #{prm_generator_forward.9} parent=23 // pred_check_branch
        %211 = sbr.rel (%p209) target = $region32
      $region31: #{prm_generator_forward.9} parent=23 // pred_region
        %p212 = scmp.lt.s32.totalorder %s18, 1
        %s213 = scalar_select %p212, %s18, 1
        %s214 = smul.addr %s213, 2
        %s215 = smul.addr %s214, 8
        %s216 = scalar_lea.vmem %s1, %s215
      $region32: #{prm_generator_forward.9} parent=23 // pred_fallthru
        _
      // Predicated region
      $region33: #{prm_generator_forward.9} parent=23 // pred_check
        %p217 = pneg %p97
      $region34: #{prm_generator_forward.9} parent=23 // pred_check_branch
        %219 = sbr.rel (%p217) target = $region36
      $region35: #{prm_generator_forward.9} parent=23 // pred_region
        %p220 = scmp.lt.s32.totalorder %s18, 1
        %s221 = scalar_select %p220, %s18, 1
        %s222 = smul.addr %s221, 2
        %s223 = smul.addr %s222, 8
        %s224 = scalar_lea.vmem %s2, %s223
      $region36: #{prm_generator_forward.9} parent=23 // pred_fallthru
        _
    $region24: #{prm_generator_forward.9} parent=5 // pred_fallthru
      _
    %p225 = scmp.le.s32.totalorder 1, %s11
    %p226 = scmp.lt.s32.totalorder %s11, 3
    %p227 = pnand %p225, %p226
    %p228 = pneg %p227
    // Predicated region
    $region37: #{prm_generator_forward.9} parent=5 // pred_check
      _
    $region38: #{prm_generator_forward.9} parent=5 // pred_check_branch
      %230 = sbr.rel (%p227) target = $region40
    $region39: #{prm_generator_forward.9} parent=5 // pred_region
      %s231 = ssub.s32 %s11, 1
      %p232 = scmp.lt.s32.totalorder %s20, 1
      %s233 = scalar_select %p232, %s20, 1
      %p234 = scmp.lt.s32.totalorder %s21, 0
      %s235 = scalar_select %p234, %s21, 0
      %s236 = smul.addr %s233, 2
      %s237 = sadd.s32 %s235, %s236
      %s238 = smul.addr %s237, 4
      %s239 = scalar_lea.vmem %s0, %s238
      %p240 = pneg %p51
      %p241 = pneg %p48
      %p242 = scmp.lt.s32.totalorder %s20, 1
      %s243 = scalar_select %p242, %s20, 1
      %s244 = smul.addr %s243, 2
      %s245 = smul.addr %s244, 8
      %s246 = scalar_lea.vmem %s1, %s245
      %p247 = pneg %p77
      %p248 = pneg %p74
      %p249 = scmp.lt.s32.totalorder %s20, 1
      %s250 = scalar_select %p249, %s20, 1
      %s251 = smul.addr %s250, 2
      %s252 = smul.addr %s251, 8
      %s253 = scalar_lea.vmem %s2, %s252
      %p254 = pneg %p103
      %p255 = pneg %p100
      %p256 = pneg %p124
      %p257 = pneg %p121
      %p258 = pneg %p145
      %p259 = pneg %p142
      %p260 = pneg %p173
      %p261 = pneg %p170
      %p262 = scmp.lt.s32.totalorder %s20, 1
      %s263 = scalar_select %p262, %s20, 1
      %p264 = scmp.lt.s32.totalorder %s21, 0
      %s265 = scalar_select %p264, %s21, 0
      %s266 = sadd.s32 %s265, %s263
      %s267 = smul.addr %s266, 8
      %s268 = scalar_lea.vmem %s5, %s267
      %p269 = scmp.lt.s32.totalorder %s20, 1
      %s270 = scalar_select %p269, %s20, 1
      %p271 = scmp.lt.s32.totalorder %s21, 0
      %s272 = scalar_select %p271, %s21, 0
      %s273 = smul.addr %s270, 2
      %s274 = sadd.s32 %s272, %s273
      %s275 = smul.addr %s274, 4
      %s276 = scalar_lea.vmem %s0, %s275
      %p277 = scmp.lt.s32.totalorder %s20, 1
      %s278 = scalar_select %p277, %s20, 1
      %s279 = smul.addr %s278, 2
      %s280 = smul.addr %s279, 8
      %s281 = scalar_lea.vmem %s1, %s280
      %p282 = scmp.lt.s32.totalorder %s20, 1
      %s283 = scalar_select %p282, %s20, 1
      %s284 = smul.addr %s283, 2
      %s285 = smul.addr %s284, 8
      %s286 = scalar_lea.vmem %s2, %s285
      %p287 = scmp.lt.s32.totalorder %s20, 1
      %s288 = scalar_select %p287, %s20, 1
      %p289 = scmp.lt.s32.totalorder %s21, 0
      %s290 = scalar_select %p289, %s21, 0
      %s291 = sadd.s32 %s290, %s288
      %s292 = smul.addr %s291, 8
      %s293 = scalar_lea.vmem %s5, %s292
      %v295 = vld [vmem:[%s281] sm:$0xff]
      %v296 = vld [vmem:[%s281 + $0x8] sm:$0xff]
      %v297 = vld [vmem:[%s286] sm:$0xff]
      %v298 = vld [vmem:[%s286 + $0x8] sm:$0xff]
      %v299 = vadd.f32 %v295, 0.0
      %v300 = vadd.f32 %v296, 0.0
      %v301 = vadd.f32 %v297, 0.0
      %v302 = vadd.f32 %v298, 0.0
      %v303 = vmul.f32 %v299, 0.015625
      %v304 = vmul.f32 %v300, 0.015625
      %v305 = vmul.f32 %v301, 0.015625
      %v306 = vmul.f32 %v302, 0.015625
      %v307 = vmul.f32 %v303, %v303
      %v308 = vmul.f32 %v304, %v304
      %v309 = vsub.f32 %v305, %v307
      %v310 = vsub.f32 %v306, %v308
      %v311 = vmax.f32 %v309, 0.0
      %v312 = vmax.f32 %v310, 0.0
      %v313 = vadd.f32 %v311, 1e-05
      %v314 = vadd.f32 %v312, 1e-05
      %v315 = vrsqrt.pop %v313
      %v316 = vrsqrt.pop %v314
      %v317 = vld [vmem:[%s276] sm:$0xf]
      %v318 = vld [vmem:[%s276 + $0x4] sm:$0xf]
      %v319 = vunpack.c.l.bf16 %v317
      %v320 = vunpack.c.l.bf16 %v318
      %322 = vset.pattern.permute.xlu0 0
      %323 = vperm.xlu0 %322, %v303
      %v324 = vpop.permute.xlu0 %323
      %327 = vset.pattern.permute.xlu0 0
      %328 = vperm.xlu0 %327, %v304
      %v329 = vpop.permute.xlu0 %328
      %v331 = vsub.f32 %v319, %v324
      %v332 = vsub.f32 %v320, %v329
      %334 = vset.pattern.permute.xlu0 0
      %335 = vperm.xlu0 %334, %v315
      %v336 = vpop.permute.xlu0 %335
      %339 = vset.pattern.permute.xlu0 0
      %340 = vperm.xlu0 %339, %v316
      %v341 = vpop.permute.xlu0 %340
      %v343 = vmul.f32 %v331, %v336
      %v344 = vmul.f32 %v332, %v341
      %vm345 = vcmp.ge.f32.partialorder %v343, 0.0
      %vm346 = vcmp.ge.f32.partialorder %v344, 0.0
      %v347 = vmul.f32 %v343, 0.2
      %v348 = vmul.f32 %v344, 0.2
      %v349 = vsel %vm345, %v343, %v347
      %v350 = vsel %vm346, %v344, %v348
      %v351 = vpack.c.bf16 %v350, %v349
      %v352 = vld [vmem:[%s3] sm:$0x7]
      %v353 = vld [vmem:[%s4] sm:$0x1f]
      %355 = vset.pattern.permute.xlu0 0
      %356 = vperm.xlu0 %355, %v353
      %v357 = vpop.permute.xlu0 %356
      %vm359 = vcmask 130048
      %v361 = vsel %vm359, %v352, 0
      %363 = vmatprep.subr.bf16.mxu0 0
      %364 = vmatpush1.bf16.msra.mxu0 0
      %365 = vmatprep.subr.bf16.mxu0 0
      %366 = vmatpush1.bf16.msra.mxu0 0
      %367 = vmatprep.subr.bf16.mxu0 0
      %368 = vmatpush1.bf16.msra.mxu0 0
      %369 = vmatprep.subr.bf16.mxu0 0
      %370 = vmatpush1.bf16.msra.mxu0 0
      %371 = vmatprep.subr.bf16.mxu0 0
      %372 = vmatpush1.bf16.msra.mxu0 0
      %373 = vmatprep.subr.bf16.mxu0 0
      %374 = vmatpush1.bf16.msra.mxu0 0
      %375 = vmatprep.subr.bf16.mxu0 0
      %376 = vmatpush1.bf16.msra.mxu0 0
      %377 = vmatprep.subr.bf16.mxu0 0
      %378 = vmatpush1.bf16.msra.mxu0 %v351
      %379 = vmatprep.subr.bf16.mxu0 0
      %380 = vmatpush2.bf16.msra.mxu0 0
      %381 = vmatprep.subr.bf16.mxu0 0
      %382 = vmatpush2.bf16.msra.mxu0 0
      %383 = vmatprep.subr.bf16.mxu0 0
      %384 = vmatpush2.bf16.msra.mxu0 0
      %385 = vmatprep.subr.bf16.mxu0 0
      %386 = vmatpush2.bf16.msra.mxu0 0
      %387 = vmatprep.subr.bf16.mxu0 0
      %388 = vmatpush2.bf16.msra.mxu0 0
      %389 = vmatprep.subr.bf16.mxu0 0
      %390 = vmatpush2.bf16.msra.mxu0 0
      %391 = vmatprep.subr.bf16.mxu0 0
      %392 = vmatpush2.bf16.msra.mxu0 0
      %393 = vmatprep.subr.bf16.mxu0 0
      %394 = vmatpush2.bf16.msra.mxu0 0
      %395 = vmatprep.mubr.bf16.mxu0 0
      %396 = vmatmul.mubr.bf16.gmra.mxu0 %v361
      %v397 = vpop.f32.mrf.mxu0
      %v398 = vadd.f32 %v357, %v397
      %v399 = vpop.f32.mrf.mxu0
      %v400 = vpop.f32.mrf.mxu0
      %v401 = vpop.f32.mrf.mxu0
      %402 = vdwg.mxu0
      %vm403 = vcmask 520192
      %v404 = vsel %vm403, %v398, -inf
      %v405 = vrot.slane %v404, 4
      %v406 = vmax.f32 %v404, %v405
      %v407 = vrot.slane %v406, 2
      %v408 = vmax.f32 %v406, %v407
      %v409 = vrot.slane %v408, 1
      %v410 = vmax.f32 %v408, %v409
      %v411 = vsub.f32 %v398, %v410
      %v412 = vmul.f32 %v411, 1.442695
      %v413 = vpow.pop %v412
      %v414 = vsel %vm403, %v413, 0.0
      %v415 = vrot.slane %v414, 4
      %v416 = vadd.f32 %v414, %v415
      %v417 = vrot.slane %v416, 2
      %v418 = vadd.f32 %v416, %v417
      %v419 = vrot.slane %v418, 1
      %v420 = vadd.f32 %v418, %v419
      %v421 = vrcp.pop %v420
      %v422 = vmul.f32 1.0, %v421
      %v423 = vmul.f32 %v413, %v422
      %424 = vst.msk [vmem:[%s293] sm:$0x1f] %vm403, %v423
      %p425 = scmp.lt.s32.totalorder %s20, 1
      %s426 = scalar_select %p425, %s20, 1
      %p427 = scmp.lt.s32.totalorder %s21, 0
      %s428 = scalar_select %p427, %s21, 0
      %s429 = sadd.s32 %s428, %s426
      %s430 = smul.addr %s429, 8
      %s431 = scalar_lea.vmem %s5, %s430
      // Predicated region
      $region41: #{prm_generator_forward.9} parent=39 // pred_check
        %p432 = pneg %p170
      $region42: #{prm_generator_forward.9} parent=39 // pred_check_branch
        %434 = sbr.rel (%p432) target = $region44
      $region43: #{prm_generator_forward.9} parent=39 // pred_region
        _
      $region44: #{prm_generator_forward.9} parent=39 // pred_fallthru
        _
    $region40: #{prm_generator_forward.9} parent=5 // pred_fallthru
      _
    %p435 = scmp.le.s32.totalorder 2, %s11
    // Predicated region
    $region45: #{prm_generator_forward.9} parent=5 // pred_check
      %p436 = pneg %p435
    $region46: #{prm_generator_forward.9} parent=5 // pred_check_branch
      %438 = sbr.rel (%p436) target = $region48
    $region47: #{prm_generator_forward.9} parent=5 // pred_region
      %s439 = ssub.s32 %s11, 2
      // Predicated region
      $region49: #{prm_generator_forward.9} parent=47 // pred_check
        %p440 = pneg %p176
      $region50: #{prm_generator_forward.9} parent=47 // pred_check_branch
        %442 = sbr.rel (%p440) target = $region52
      $region51: #{prm_generator_forward.9} parent=47 // pred_region
        %p443 = scmp.lt.s32.totalorder %s22, 1
        %s444 = scalar_select %p443, %s22, 1
        %p445 = scmp.lt.s32.totalorder %s23, 0
        %s446 = scalar_select %p445, %s23, 0
        %s447 = sadd.s32 %s446, %s444
        %s448 = smul.addr %s447, 8
        %s449 = scalar_lea.vmem %s5, %s448
      $region52: #{prm_generator_forward.9} parent=47 // pred_fallthru
        _
    $region48: #{prm_generator_forward.9} parent=5 // pred_fallthru
      _
  $region6: #{prm_generator_forward.9} parent=0 // loop_footer
    %s15 = sadd.s32 1, %s11
  $region7: #{prm_generator_forward.9} parent=0 // loop_footer_branch
    %10 = sbr.rel target = $region3
  $region8: #{prm_generator_forward.9} parent=0 // loop_exit
    _

</llo_original>
